<compile_context>
chip_gen: v7x
topology: tpu7x:2x2x1
jax: 0.10.0
libtpu: 0.0.40
codegen_flags: <defaults>
</compile_context>

<pallas_src>
import functools

import jax
import jax.numpy as jnp
import numpy as np
from jax.experimental import pallas as pl
from jax.experimental.pallas import tpu as pltpu


def _round_up(x, m):
    return ((x + m - 1) // m) * m


def _num_tensorcores():
    """Best-effort TC-per-chip count (2 on v7x, else 1)."""
    try:
        kind = jax.devices()[0].device_kind.lower().replace(" ", "")
    except Exception:
        return 1
    return 2 if ("v7" in kind or "7x" in kind) else 1


def _choose_batch_tile(batch, n_cores, target=512):
    """Per-grid-step batch tile: big (amortize step overhead), multiple of 256
    when batch allows (fills 256-wide MXU rows), and an even split across
    TensorCores on dual-TC chips."""
    b8 = _round_up(max(batch, 1), 8)
    per_core = _round_up(-(-b8 // n_cores), 8)
    tb = min(target, per_core, b8)
    if tb >= 256:
        tb = (tb // 256) * 256
    elif tb >= 128:
        tb = (tb // 128) * 128
    return max(tb, 8)


# ----------------------------------------------------------------------------
# Kernel: the whole VaDE forward fused per batch tile.  Weights are
# grid-resident (constant block index); only the batch dimension is tiled.
# ----------------------------------------------------------------------------
def vade_forward_kernel(*refs, latent_dim, n_enc, n_dec, training):
    idx = 0
    x_ref = refs[idx]
    idx += 1
    eps_ref = None
    if training:
        eps_ref = refs[idx]
        idx += 1
    w_refs = refs[idx:-2]
    recon_ref, lat_ref = refs[-2], refs[-1]

    def lin(h, w_ref, b_ref):
        # bf16 MXU inputs, f32 accumulation, f32 bias / epilogue.
        return (jnp.dot(h.astype(w_ref.dtype), w_ref[...],
                        preferred_element_type=jnp.float32)
                + b_ref[...])

    wi = 0
    h = x_ref[...]                               # bf16 tile from HBM
    for _ in range(n_enc):                       # encoder ReLU-MLP
        h = jnp.maximum(lin(h, w_refs[wi], w_refs[wi + 1]), 0.0)
        wi += 2

    # Fused, 128-padded head: (tb, HEAD) = [mu | logvar | zero-pad].
    mulv = lin(h, w_refs[wi], w_refs[wi + 1])
    wi += 2
    L = latent_dim
    mu = mulv[:, :L]
    lv = mulv[:, L:2 * L]
    if training:
        z = mu + eps_ref[...] * jnp.exp(0.5 * lv)
    else:
        z = mu                                   # eval: z == mu (PyTorch semantics)

    tb = h.shape[0]
    zp_w = lat_ref.shape[-1] - mulv.shape[-1]    # padded z width (>= L)
    if zp_w > L:
        z_pad = jnp.concatenate(
            [z, jnp.zeros((tb, zp_w - L), jnp.float32)], axis=-1)
    else:
        z_pad = z

    d = z_pad                                    # decoder consumes padded z
    for _ in range(n_dec):                       # decoder ReLU-MLP
        d = jnp.maximum(lin(d, w_refs[wi], w_refs[wi + 1]), 0.0)
        wi += 2
    # decoder_mean + sigmoid (binary=True), stored as bf16 (lane-dense).
    recon_ref[...] = jax.nn.sigmoid(
        lin(d, w_refs[wi], w_refs[wi + 1])).astype(recon_ref.dtype)

    # Lane-dense latent slab: both halves are 128-aligned -> free concat,
    # single full-width store.
    lat_ref[...] = jnp.concatenate([mulv, z_pad], axis=-1)


# ----------------------------------------------------------------------------
# Parameter construction (mimics torch.nn.Linear default init) and packing.
# ----------------------------------------------------------------------------
def init_linear(key, fan_in, fan_out):
    kw, kb = jax.random.split(key)
    bound = 1.0 / float(np.sqrt(fan_in))
    w = jax.random.uniform(kw, (fan_in, fan_out), jnp.float32, -bound, bound)
    b = jax.random.uniform(kb, (1, fan_out), jnp.float32, -bound, bound)
    return w, b


def build_params(key, input_dim, latent_dim, hidden_dims, n_classes):
    keys = jax.random.split(key, 9)
    ki = iter(keys)
    enc_dims = [input_dim] + hidden_dims
    enc = [init_linear(next(ki), enc_dims[i - 1], enc_dims[i])
           for i in range(1, len(enc_dims))]
    w_mu, b_mu = init_linear(next(ki), hidden_dims[-1], latent_dim)
    w_lv, b_lv = init_linear(next(ki), hidden_dims[-1], latent_dim)
    dec_dims = [latent_dim] + hidden_dims[::-1]
    dec = [init_linear(next(ki), dec_dims[i - 1], dec_dims[i])
           for i in range(1, len(dec_dims))]
    w_out, b_out = init_linear(next(ki), hidden_dims[0], input_dim)

    params = dict(enc=enc, w_mu=w_mu, b_mu=b_mu, w_lv=w_lv, b_lv=b_lv,
                  dec=dec, w_out=w_out, b_out=b_out)
    # GMM prior params from __init__ (theta_p, u_p, lambda_p).  NOT used by
    # forward(), only by get_gamma/predict -- kept for parity, not kernelized.
    prior = dict(
        theta_p=jnp.ones((n_classes,), jnp.float32) / n_classes,
        u_p=jnp.zeros((latent_dim, n_classes), jnp.float32),
        lambda_p=jnp.ones((latent_dim, n_classes), jnp.float32),
    )
    return params, prior


def prep_kernel_params(params, compute_dtype=jnp.bfloat16):
    """Fuse + 128-pad the mu/logvar head, 128-pad the decoder's first fan_in,
    and cast weight matrices to the MXU dtype."""
    L = params["w_mu"].shape[1]
    head_w = _round_up(2 * L, 128)      # fused [mu|logvar|0] head width
    zp_w = _round_up(L, 128)            # padded z width fed to the decoder

    def cast(w):
        return w.astype(compute_dtype)

    flat = []
    for w, b in params["enc"]:
        flat += [cast(w), b]

    w_head = jnp.concatenate([params["w_mu"], params["w_lv"]], axis=1)
    b_head = jnp.concatenate([params["b_mu"], params["b_lv"]], axis=1)
    if head_w > 2 * L:
        w_head = jnp.pad(w_head, ((0, 0), (0, head_w - 2 * L)))
        b_head = jnp.pad(b_head, ((0, 0), (0, head_w - 2 * L)))
    flat += [cast(w_head), b_head]

    dec = params["dec"]
    dw0, db0 = dec[0]
    if zp_w > L:
        dw0 = jnp.pad(dw0, ((0, zp_w - L), (0, 0)))   # zero rows: no-op math
    flat += [cast(dw0), db0]
    for w, b in dec[1:]:
        flat += [cast(w), b]

    flat += [cast(params["w_out"]), params["b_out"]]
    return flat, head_w, zp_w


# ----------------------------------------------------------------------------
# Wrapper
# ----------------------------------------------------------------------------
def vade_forward(x, params, *, eps=None, training=False, tb=None,
                 compute_dtype=jnp.bfloat16, recon_dtype=jnp.bfloat16,
                 vmem_limit_bytes=None):
    B, D_in = x.shape
    L = params["w_mu"].shape[1]
    n_enc = len(params["enc"])
    n_dec = len(params["dec"])

    if tb is None:
        tb = _choose_batch_tile(B, _num_tensorcores())
    tb = max(8, (min(tb, _round_up(B, 8)) // 8) * 8)
    B_pad = _round_up(B, tb)

    # bf16 input stream (kernel feeds the MXU bf16 anyway); pad batch tail.
    # Padded rows run through the full net and are sliced off (wasted but safe).
    x = x.astype(compute_dtype)
    if B_pad != B:
        x = jnp.pad(x, ((0, B_pad - B), (0, 0)))

    flat, head_w, zp_w = prep_kernel_params(params, compute_dtype)
    slab_w = head_w + zp_w              # lane-dense latent output slab

    def resident(a):
        # Whole-array block, same block every grid step (weights stay in VMEM).
        return pl.BlockSpec(a.shape, lambda i: (0,) * a.ndim)

    in_specs = [pl.BlockSpec((tb, D_in), lambda i: (i, 0))]     # x
    operands = [x]
    if training:
        assert eps is not None and eps.shape == (B, L)
        # TODO(synk): optionally generate eps in-kernel with pltpu.prng_seed +
        # pltpu.stateful_normal to drop this narrow input stream (changes RNG
        # provenance vs. caller-supplied eps, so kept external here).
        eps = eps.astype(jnp.float32)
        if B_pad != B:
            eps = jnp.pad(eps, ((0, B_pad - B), (0, 0)))
        in_specs.append(pl.BlockSpec((tb, L), lambda i: (i, 0)))
        operands.append(eps)
    in_specs += [resident(a) for a in flat]
    operands += flat

    out_specs = (
        pl.BlockSpec((tb, D_in), lambda i: (i, 0)),      # recon_x (bf16)
        pl.BlockSpec((tb, slab_w), lambda i: (i, 0)),    # [mu|lv|pad || z|pad]
    )
    out_shape = (
        jax.ShapeDtypeStruct((B_pad, D_in), recon_dtype),
        jax.ShapeDtypeStruct((B_pad, slab_w), jnp.float32),
    )

    # Big tiles on v5e can brush against the 16 MiB scoped-VMEM default.
    if vmem_limit_bytes is None and tb >= 512:
        vmem_limit_bytes = 48 * 1024 * 1024
    if vmem_limit_bytes is not None:
        cparams = pltpu.CompilerParams(dimension_semantics=("parallel",),
                                       vmem_limit_bytes=vmem_limit_bytes)
    else:
        cparams = pltpu.CompilerParams(dimension_semantics=("parallel",))

    kernel = functools.partial(vade_forward_kernel, latent_dim=L,
                               n_enc=n_enc, n_dec=n_dec, training=training)
    recon, lat = pl.pallas_call(
        kernel,
        out_shape=out_shape,
        grid_spec=pltpu.PrefetchScalarGridSpec(
            num_scalar_prefetch=0,
            grid=(B_pad // tb,),
            in_specs=in_specs,
            out_specs=out_specs,
        ),
        compiler_params=cparams,
    )(*operands)

    recon = recon[:B]
    mu = lat[:B, :L]
    lv = lat[:B, L:2 * L]
    z = lat[:B, head_w:head_w + L]
    return recon, z, mu, lv


# ----------------------------------------------------------------------------
# Pure-JAX reference (correctness checks)
# ----------------------------------------------------------------------------
def ref_forward(x, eps, params, *, training, compute_dtype=jnp.float32):
    def lin(h, w, b):
        return jnp.dot(h.astype(compute_dtype), w.astype(compute_dtype),
                       preferred_element_type=jnp.float32) + b

    h = x
    for w, b in params["enc"]:
        h = jnp.maximum(lin(h, w, b), 0.0)
    mu = lin(h, params["w_mu"], params["b_mu"])
    lv = lin(h, params["w_lv"], params["b_lv"])
    z = mu + eps * jnp.exp(0.5 * lv) if training else mu
    d = z
    for w, b in params["dec"]:
        d = jnp.maximum(lin(d, w, b), 0.0)
    recon = jax.nn.sigmoid(lin(d, params["w_out"], params["b_out"]))
    return recon, z, mu, lv


def _check(got, want, *, recon_tol, lat_tol):
    recon_g, z_g, mu_g, lv_g = got
    recon_w, z_w, mu_w, lv_w = want
    np.testing.assert_allclose(np.asarray(recon_g, dtype=np.float32),
                               np.asarray(recon_w, dtype=np.float32),
                               rtol=recon_tol, atol=recon_tol)
    for g, w in ((z_g, z_w), (mu_g, mu_w), (lv_g, lv_w)):
        np.testing.assert_allclose(np.asarray(g), np.asarray(w),
                                   rtol=lat_tol, atol=lat_tol)


if __name__ == "__main__":
    # Small shapes consistent with the module (flat feature vectors).
    n_classes = 10
    input_dim = 256                 # multiple of 128 -> lane-dense x/recon I/O
    latent_dim = 32
    hidden_dims = [128, 128, 256]   # scaled-down [500, 500, 2000]
    batch = 256                     # tb auto-chosen: 256/grid=1 (v5e/v6e),
                                    # 128/grid=2 (v7x, both TCs)

    key = jax.random.PRNGKey(0)
    k_params, k_x, k_eps = jax.random.split(key, 3)
    params, prior = build_params(k_params, input_dim, latent_dim,
                                 hidden_dims, n_classes)

    # Binary VaDE: inputs in [0, 1].
    x = jax.random.uniform(k_x, (batch, input_dim), jnp.float32)
    eps = jax.random.normal(k_eps, (batch, latent_dim), jnp.float32)

    # ---- eval mode (z == mu, no eps / exp) ---------------------------------
    out_eval = vade_forward(x, params, training=False)
    jax.block_until_ready(out_eval)

    ref_eval_matched = ref_forward(x, None, params, training=False,
                                   compute_dtype=jnp.bfloat16)
    _check(out_eval, ref_eval_matched, recon_tol=5e-3, lat_tol=2e-3)
    with jax.default_matmul_precision("highest"):
        ref_eval_f32 = ref_forward(x, None, params, training=False,
                                   compute_dtype=jnp.float32)
    _check(out_eval, ref_eval_f32, recon_tol=5e-2, lat_tol=5e-2)

    # ---- training mode (reparameterize with eps) ---------------------------
    out_train = vade_forward(x, params, eps=eps, training=True)
    jax.block_until_ready(out_train)

    ref_train_matched = ref_forward(x, eps, params, training=True,
                                    compute_dtype=jnp.bfloat16)
    _check(out_train, ref_train_matched, recon_tol=5e-3, lat_tol=2e-3)

    # TODO(synk): get_gamma / predict / init_gmm (GMM posterior over theta_p,
    # u_p, lambda_p) are not part of forward() and are left in pure JAX/NumPy.
    print("KERNEL_OK")
</pallas_src>

<mosaic_0001>
module attributes {stable_mosaic.version = 11 : i64} {
  func.func @vade_forward_kernel(%arg0: i32, %arg1: memref<256x256xbf16, #tpu.memory_space<vmem>>, %arg2: memref<256x128xbf16, #tpu.memory_space<vmem>>, %arg3: memref<1x128xf32, #tpu.memory_space<vmem>>, %arg4: memref<128x128xbf16, #tpu.memory_space<vmem>>, %arg5: memref<1x128xf32, #tpu.memory_space<vmem>>, %arg6: memref<128x256xbf16, #tpu.memory_space<vmem>>, %arg7: memref<1x256xf32, #tpu.memory_space<vmem>>, %arg8: memref<256x128xbf16, #tpu.memory_space<vmem>>, %arg9: memref<1x128xf32, #tpu.memory_space<vmem>>, %arg10: memref<128x256xbf16, #tpu.memory_space<vmem>>, %arg11: memref<1x256xf32, #tpu.memory_space<vmem>>, %arg12: memref<256x128xbf16, #tpu.memory_space<vmem>>, %arg13: memref<1x128xf32, #tpu.memory_space<vmem>>, %arg14: memref<128x128xbf16, #tpu.memory_space<vmem>>, %arg15: memref<1x128xf32, #tpu.memory_space<vmem>>, %arg16: memref<128x256xbf16, #tpu.memory_space<vmem>>, %arg17: memref<1x256xf32, #tpu.memory_space<vmem>>, %arg18: memref<256x256xbf16, #tpu.memory_space<vmem>>, %arg19: memref<256x256xf32, #tpu.memory_space<vmem>>) attributes {dimension_semantics = [#tpu.dimension_semantics<parallel>], iteration_bounds = array<i64: 1>, scalar_prefetch = 0 : i64, scratch_operands = 0 : i64, tpu.core_type = #tpu.core_type<tc>, window_params = [{transform_indices = @transform_0, window_bounds = array<i64: 256, 256>}, {pipeline_mode = #tpu.pipeline_mode<synchronous>, transform_indices = @transform_1, window_bounds = array<i64: 256, 128>}, {pipeline_mode = #tpu.pipeline_mode<synchronous>, transform_indices = @transform_2, window_bounds = array<i64: 1, 128>}, {pipeline_mode = #tpu.pipeline_mode<synchronous>, transform_indices = @transform_3, window_bounds = array<i64: 128, 128>}, {pipeline_mode = #tpu.pipeline_mode<synchronous>, transform_indices = @transform_4, window_bounds = array<i64: 1, 128>}, {pipeline_mode = #tpu.pipeline_mode<synchronous>, transform_indices = @transform_5, window_bounds = array<i64: 128, 256>}, {pipeline_mode = #tpu.pipeline_mode<synchronous>, transform_indices = @transform_6, window_bounds = array<i64: 1, 256>}, {pipeline_mode = #tpu.pipeline_mode<synchronous>, transform_indices = @transform_7, window_bounds = array<i64: 256, 128>}, {pipeline_mode = #tpu.pipeline_mode<synchronous>, transform_indices = @transform_8, window_bounds = array<i64: 1, 128>}, {pipeline_mode = #tpu.pipeline_mode<synchronous>, transform_indices = @transform_9, window_bounds = array<i64: 128, 256>}, {pipeline_mode = #tpu.pipeline_mode<synchronous>, transform_indices = @transform_10, window_bounds = array<i64: 1, 256>}, {pipeline_mode = #tpu.pipeline_mode<synchronous>, transform_indices = @transform_11, window_bounds = array<i64: 256, 128>}, {pipeline_mode = #tpu.pipeline_mode<synchronous>, transform_indices = @transform_12, window_bounds = array<i64: 1, 128>}, {pipeline_mode = #tpu.pipeline_mode<synchronous>, transform_indices = @transform_13, window_bounds = array<i64: 128, 128>}, {pipeline_mode = #tpu.pipeline_mode<synchronous>, transform_indices = @transform_14, window_bounds = array<i64: 1, 128>}, {pipeline_mode = #tpu.pipeline_mode<synchronous>, transform_indices = @transform_15, window_bounds = array<i64: 128, 256>}, {pipeline_mode = #tpu.pipeline_mode<synchronous>, transform_indices = @transform_16, window_bounds = array<i64: 1, 256>}, {transform_indices = @transform_17, window_bounds = array<i64: 256, 256>}, {transform_indices = @transform_18, window_bounds = array<i64: 256, 256>}]} {
    %c0 = arith.constant 0 : index
    %c0_0 = arith.constant 0 : index
    %0 = vector.load %arg1[%c0, %c0_0] : memref<256x256xbf16, #tpu.memory_space<vmem>>, vector<256x256xbf16>
    %c0_1 = arith.constant 0 : index
    %c0_2 = arith.constant 0 : index
    %1 = vector.load %arg2[%c0_1, %c0_2] : memref<256x128xbf16, #tpu.memory_space<vmem>>, vector<256x128xbf16>
    %cst = arith.constant dense<0.000000e+00> : vector<256x128xf32>
    %2 = tpu.matmul %0, %1, %cst {dimension_numbers = #tpu.dot_dimension_numbers<[1], [0], [0], [1], [0, 0, 1, 1], [], []>} : vector<256x256xbf16>, vector<256x128xbf16>, vector<256x128xf32> -> vector<256x128xf32>
    %c0_3 = arith.constant 0 : index
    %c0_4 = arith.constant 0 : index
    %3 = vector.load %arg3[%c0_3, %c0_4] : memref<1x128xf32, #tpu.memory_space<vmem>>, vector<1x128xf32>
    %4 = vector.broadcast %3 : vector<1x128xf32> to vector<256x128xf32>
    %5 = arith.addf %2, %4 : vector<256x128xf32>
    %cst_5 = arith.constant 0.000000e+00 : f32
    %6 = vector.broadcast %cst_5 : f32 to vector<256x128xf32>
    %7 = arith.maximumf %5, %6 : vector<256x128xf32>
    %8 = arith.truncf %7 : vector<256x128xf32> to vector<256x128xbf16>
    %c0_6 = arith.constant 0 : index
    %c0_7 = arith.constant 0 : index
    %9 = vector.load %arg4[%c0_6, %c0_7] : memref<128x128xbf16, #tpu.memory_space<vmem>>, vector<128x128xbf16>
    %cst_8 = arith.constant dense<0.000000e+00> : vector<256x128xf32>
    %10 = tpu.matmul %8, %9, %cst_8 {dimension_numbers = #tpu.dot_dimension_numbers<[1], [0], [0], [1], [0, 0, 1, 1], [], []>} : vector<256x128xbf16>, vector<128x128xbf16>, vector<256x128xf32> -> vector<256x128xf32>
    %c0_9 = arith.constant 0 : index
    %c0_10 = arith.constant 0 : index
    %11 = vector.load %arg5[%c0_9, %c0_10] : memref<1x128xf32, #tpu.memory_space<vmem>>, vector<1x128xf32>
    %12 = vector.broadcast %11 : vector<1x128xf32> to vector<256x128xf32>
    %13 = arith.addf %10, %12 : vector<256x128xf32>
    %cst_11 = arith.constant 0.000000e+00 : f32
    %14 = vector.broadcast %cst_11 : f32 to vector<256x128xf32>
    %15 = arith.maximumf %13, %14 : vector<256x128xf32>
    %16 = arith.truncf %15 : vector<256x128xf32> to vector<256x128xbf16>
    %c0_12 = arith.constant 0 : index
    %c0_13 = arith.constant 0 : index
    %17 = vector.load %arg6[%c0_12, %c0_13] : memref<128x256xbf16, #tpu.memory_space<vmem>>, vector<128x256xbf16>
    %cst_14 = arith.constant dense<0.000000e+00> : vector<256x256xf32>
    %18 = tpu.matmul %16, %17, %cst_14 {dimension_numbers = #tpu.dot_dimension_numbers<[1], [0], [0], [1], [0, 0, 1, 1], [], []>} : vector<256x128xbf16>, vector<128x256xbf16>, vector<256x256xf32> -> vector<256x256xf32>
    %c0_15 = arith.constant 0 : index
    %c0_16 = arith.constant 0 : index
    %19 = vector.load %arg7[%c0_15, %c0_16] : memref<1x256xf32, #tpu.memory_space<vmem>>, vector<1x256xf32>
    %20 = vector.broadcast %19 : vector<1x256xf32> to vector<256x256xf32>
    %21 = arith.addf %18, %20 : vector<256x256xf32>
    %cst_17 = arith.constant 0.000000e+00 : f32
    %22 = vector.broadcast %cst_17 : f32 to vector<256x256xf32>
    %23 = arith.maximumf %21, %22 : vector<256x256xf32>
    %24 = arith.truncf %23 : vector<256x256xf32> to vector<256x256xbf16>
    %c0_18 = arith.constant 0 : index
    %c0_19 = arith.constant 0 : index
    %25 = vector.load %arg8[%c0_18, %c0_19] : memref<256x128xbf16, #tpu.memory_space<vmem>>, vector<256x128xbf16>
    %cst_20 = arith.constant dense<0.000000e+00> : vector<256x128xf32>
    %26 = tpu.matmul %24, %25, %cst_20 {dimension_numbers = #tpu.dot_dimension_numbers<[1], [0], [0], [1], [0, 0, 1, 1], [], []>} : vector<256x256xbf16>, vector<256x128xbf16>, vector<256x128xf32> -> vector<256x128xf32>
    %c0_21 = arith.constant 0 : index
    %c0_22 = arith.constant 0 : index
    %27 = vector.load %arg9[%c0_21, %c0_22] : memref<1x128xf32, #tpu.memory_space<vmem>>, vector<1x128xf32>
    %28 = vector.broadcast %27 : vector<1x128xf32> to vector<256x128xf32>
    %29 = arith.addf %26, %28 : vector<256x128xf32>
    %30 = vector.extract_strided_slice %29 {offsets = [0, 0], sizes = [256, 32], strides = [1, 1]} : vector<256x128xf32> to vector<256x32xf32>
    %cst_23 = arith.constant 0.000000e+00 : f32
    %31 = vector.broadcast %cst_23 : f32 to vector<256x96xf32>
    %32 = tpu.concatenate %30, %31 in 1 : vector<256x32xf32>, vector<256x96xf32> -> vector<256x128xf32>
    %33 = arith.truncf %32 : vector<256x128xf32> to vector<256x128xbf16>
    %c0_24 = arith.constant 0 : index
    %c0_25 = arith.constant 0 : index
    %34 = vector.load %arg10[%c0_24, %c0_25] : memref<128x256xbf16, #tpu.memory_space<vmem>>, vector<128x256xbf16>
    %cst_26 = arith.constant dense<0.000000e+00> : vector<256x256xf32>
    %35 = tpu.matmul %33, %34, %cst_26 {dimension_numbers = #tpu.dot_dimension_numbers<[1], [0], [0], [1], [0, 0, 1, 1], [], []>} : vector<256x128xbf16>, vector<128x256xbf16>, vector<256x256xf32> -> vector<256x256xf32>
    %c0_27 = arith.constant 0 : index
    %c0_28 = arith.constant 0 : index
    %36 = vector.load %arg11[%c0_27, %c0_28] : memref<1x256xf32, #tpu.memory_space<vmem>>, vector<1x256xf32>
    %37 = vector.broadcast %36 : vector<1x256xf32> to vector<256x256xf32>
    %38 = arith.addf %35, %37 : vector<256x256xf32>
    %cst_29 = arith.constant 0.000000e+00 : f32
    %39 = vector.broadcast %cst_29 : f32 to vector<256x256xf32>
    %40 = arith.maximumf %38, %39 : vector<256x256xf32>
    %41 = arith.truncf %40 : vector<256x256xf32> to vector<256x256xbf16>
    %c0_30 = arith.constant 0 : index
    %c0_31 = arith.constant 0 : index
    %42 = vector.load %arg12[%c0_30, %c0_31] : memref<256x128xbf16, #tpu.memory_space<vmem>>, vector<256x128xbf16>
    %cst_32 = arith.constant dense<0.000000e+00> : vector<256x128xf32>
    %43 = tpu.matmul %41, %42, %cst_32 {dimension_numbers = #tpu.dot_dimension_numbers<[1], [0], [0], [1], [0, 0, 1, 1], [], []>} : vector<256x256xbf16>, vector<256x128xbf16>, vector<256x128xf32> -> vector<256x128xf32>
    %c0_33 = arith.constant 0 : index
    %c0_34 = arith.constant 0 : index
    %44 = vector.load %arg13[%c0_33, %c0_34] : memref<1x128xf32, #tpu.memory_space<vmem>>, vector<1x128xf32>
    %45 = vector.broadcast %44 : vector<1x128xf32> to vector<256x128xf32>
    %46 = arith.addf %43, %45 : vector<256x128xf32>
    %cst_35 = arith.constant 0.000000e+00 : f32
    %47 = vector.broadcast %cst_35 : f32 to vector<256x128xf32>
    %48 = arith.maximumf %46, %47 : vector<256x128xf32>
    %49 = arith.truncf %48 : vector<256x128xf32> to vector<256x128xbf16>
    %c0_36 = arith.constant 0 : index
    %c0_37 = arith.constant 0 : index
    %50 = vector.load %arg14[%c0_36, %c0_37] : memref<128x128xbf16, #tpu.memory_space<vmem>>, vector<128x128xbf16>
    %cst_38 = arith.constant dense<0.000000e+00> : vector<256x128xf32>
    %51 = tpu.matmul %49, %50, %cst_38 {dimension_numbers = #tpu.dot_dimension_numbers<[1], [0], [0], [1], [0, 0, 1, 1], [], []>} : vector<256x128xbf16>, vector<128x128xbf16>, vector<256x128xf32> -> vector<256x128xf32>
    %c0_39 = arith.constant 0 : index
    %c0_40 = arith.constant 0 : index
    %52 = vector.load %arg15[%c0_39, %c0_40] : memref<1x128xf32, #tpu.memory_space<vmem>>, vector<1x128xf32>
    %53 = vector.broadcast %52 : vector<1x128xf32> to vector<256x128xf32>
    %54 = arith.addf %51, %53 : vector<256x128xf32>
    %cst_41 = arith.constant 0.000000e+00 : f32
    %55 = vector.broadcast %cst_41 : f32 to vector<256x128xf32>
    %56 = arith.maximumf %54, %55 : vector<256x128xf32>
    %57 = arith.truncf %56 : vector<256x128xf32> to vector<256x128xbf16>
    %c0_42 = arith.constant 0 : index
    %c0_43 = arith.constant 0 : index
    %58 = vector.load %arg16[%c0_42, %c0_43] : memref<128x256xbf16, #tpu.memory_space<vmem>>, vector<128x256xbf16>
    %cst_44 = arith.constant dense<0.000000e+00> : vector<256x256xf32>
    %59 = tpu.matmul %57, %58, %cst_44 {dimension_numbers = #tpu.dot_dimension_numbers<[1], [0], [0], [1], [0, 0, 1, 1], [], []>} : vector<256x128xbf16>, vector<128x256xbf16>, vector<256x256xf32> -> vector<256x256xf32>
    %c0_45 = arith.constant 0 : index
    %c0_46 = arith.constant 0 : index
    %60 = vector.load %arg17[%c0_45, %c0_46] : memref<1x256xf32, #tpu.memory_space<vmem>>, vector<1x256xf32>
    %61 = vector.broadcast %60 : vector<1x256xf32> to vector<256x256xf32>
    %62 = arith.addf %59, %61 : vector<256x256xf32>
    %63 = arith.negf %62 : vector<256x256xf32>
    %64 = math.exp %63 : vector<256x256xf32>
    %cst_47 = arith.constant 1.000000e+00 : f32
    %65 = vector.broadcast %cst_47 : f32 to vector<256x256xf32>
    %66 = arith.addf %65, %64 : vector<256x256xf32>
    %67 = arith.divf %65, %66 : vector<256x256xf32>
    %68 = arith.truncf %67 : vector<256x256xf32> to vector<256x256xbf16>
    %c0_48 = arith.constant 0 : index
    %c0_49 = arith.constant 0 : index
    %69 = vector.load %arg18[%c0_48, %c0_49] : memref<256x256xbf16, #tpu.memory_space<vmem>>, vector<256x256xbf16>
    tpu.vector_store %arg18[%c0_48, %c0_49], %68 {strides = array<i32>} : memref<256x256xbf16, #tpu.memory_space<vmem>>, vector<256x256xbf16>,
    %70 = tpu.concatenate %29, %32 in 1 : vector<256x128xf32>, vector<256x128xf32> -> vector<256x256xf32>
    %c0_50 = arith.constant 0 : index
    %c0_51 = arith.constant 0 : index
    %71 = vector.load %arg19[%c0_50, %c0_51] : memref<256x256xf32, #tpu.memory_space<vmem>>, vector<256x256xf32>
    tpu.vector_store %arg19[%c0_50, %c0_51], %70 {strides = array<i32>} : memref<256x256xf32, #tpu.memory_space<vmem>>, vector<256x256xf32>,
    return
  }
  func.func @transform_0(%arg0: i32) -> (i32, i32) {
    %c0_i32 = arith.constant 0 : i32
    %c0_i32_0 = arith.constant 0 : i32
    return %arg0, %c0_i32 : i32, i32
  }
  func.func @transform_1(%arg0: i32) -> (i32, i32) {
    %c0_i32 = arith.constant 0 : i32
    %c0_i32_0 = arith.constant 0 : i32
    %c0_i32_1 = arith.constant 0 : i32
    return %c0_i32, %c0_i32_0 : i32, i32
  }
  func.func @transform_2(%arg0: i32) -> (i32, i32) {
    %c0_i32 = arith.constant 0 : i32
    %c0_i32_0 = arith.constant 0 : i32
    %c0_i32_1 = arith.constant 0 : i32
    return %c0_i32, %c0_i32_0 : i32, i32
  }
  func.func @transform_3(%arg0: i32) -> (i32, i32) {
    %c0_i32 = arith.constant 0 : i32
    %c0_i32_0 = arith.constant 0 : i32
    %c0_i32_1 = arith.constant 0 : i32
    return %c0_i32, %c0_i32_0 : i32, i32
  }
  func.func @transform_4(%arg0: i32) -> (i32, i32) {
    %c0_i32 = arith.constant 0 : i32
    %c0_i32_0 = arith.constant 0 : i32
    %c0_i32_1 = arith.constant 0 : i32
    return %c0_i32, %c0_i32_0 : i32, i32
  }
  func.func @transform_5(%arg0: i32) -> (i32, i32) {
    %c0_i32 = arith.constant 0 : i32
    %c0_i32_0 = arith.constant 0 : i32
    %c0_i32_1 = arith.constant 0 : i32
    return %c0_i32, %c0_i32_0 : i32, i32
  }
  func.func @transform_6(%arg0: i32) -> (i32, i32) {
    %c0_i32 = arith.constant 0 : i32
    %c0_i32_0 = arith.constant 0 : i32
    %c0_i32_1 = arith.constant 0 : i32
    return %c0_i32, %c0_i32_0 : i32, i32
  }
  func.func @transform_7(%arg0: i32) -> (i32, i32) {
    %c0_i32 = arith.constant 0 : i32
    %c0_i32_0 = arith.constant 0 : i32
    %c0_i32_1 = arith.constant 0 : i32
    return %c0_i32, %c0_i32_0 : i32, i32
  }
  func.func @transform_8(%arg0: i32) -> (i32, i32) {
    %c0_i32 = arith.constant 0 : i32
    %c0_i32_0 = arith.constant 0 : i32
    %c0_i32_1 = arith.constant 0 : i32
    return %c0_i32, %c0_i32_0 : i32, i32
  }
  func.func @transform_9(%arg0: i32) -> (i32, i32) {
    %c0_i32 = arith.constant 0 : i32
    %c0_i32_0 = arith.constant 0 : i32
    %c0_i32_1 = arith.constant 0 : i32
    return %c0_i32, %c0_i32_0 : i32, i32
  }
  func.func @transform_10(%arg0: i32) -> (i32, i32) {
    %c0_i32 = arith.constant 0 : i32
    %c0_i32_0 = arith.constant 0 : i32
    %c0_i32_1 = arith.constant 0 : i32
    return %c0_i32, %c0_i32_0 : i32, i32
  }
  func.func @transform_11(%arg0: i32) -> (i32, i32) {
    %c0_i32 = arith.constant 0 : i32
    %c0_i32_0 = arith.constant 0 : i32
    %c0_i32_1 = arith.constant 0 : i32
    return %c0_i32, %c0_i32_0 : i32, i32
  }
  func.func @transform_12(%arg0: i32) -> (i32, i32) {
    %c0_i32 = arith.constant 0 : i32
    %c0_i32_0 = arith.constant 0 : i32
    %c0_i32_1 = arith.constant 0 : i32
    return %c0_i32, %c0_i32_0 : i32, i32
  }
  func.func @transform_13(%arg0: i32) -> (i32, i32) {
    %c0_i32 = arith.constant 0 : i32
    %c0_i32_0 = arith.constant 0 : i32
    %c0_i32_1 = arith.constant 0 : i32
    return %c0_i32, %c0_i32_0 : i32, i32
  }
  func.func @transform_14(%arg0: i32) -> (i32, i32) {
    %c0_i32 = arith.constant 0 : i32
    %c0_i32_0 = arith.constant 0 : i32
    %c0_i32_1 = arith.constant 0 : i32
    return %c0_i32, %c0_i32_0 : i32, i32
  }
  func.func @transform_15(%arg0: i32) -> (i32, i32) {
    %c0_i32 = arith.constant 0 : i32
    %c0_i32_0 = arith.constant 0 : i32
    %c0_i32_1 = arith.constant 0 : i32
    return %c0_i32, %c0_i32_0 : i32, i32
  }
  func.func @transform_16(%arg0: i32) -> (i32, i32) {
    %c0_i32 = arith.constant 0 : i32
    %c0_i32_0 = arith.constant 0 : i32
    %c0_i32_1 = arith.constant 0 : i32
    return %c0_i32, %c0_i32_0 : i32, i32
  }
  func.func @transform_17(%arg0: i32) -> (i32, i32) {
    %c0_i32 = arith.constant 0 : i32
    %c0_i32_0 = arith.constant 0 : i32
    return %arg0, %c0_i32 : i32, i32
  }
  func.func @transform_18(%arg0: i32) -> (i32, i32) {
    %c0_i32 = arith.constant 0 : i32
    %c0_i32_0 = arith.constant 0 : i32
    return %arg0, %c0_i32 : i32, i32
  }
}

</mosaic_0001>

<llo_original>
// kernel: tpu_custom_call.1
$region0: #{tpu_custom_call.1}
  #allocation0 [shape = 'u32[]', space=smem, size = 0x4, offset = 0x4, fixed_abs, tag = 'smem constant byte address 0x4 - core index']
  #allocation1 [shape = 'u32[144,128]{1,0:T(1,128)}', space=vmem, size = 0x12000, scoped, tag = 'internal scratch']
  %s0 = inlined_call_operand.hbm [shape: bf16[256,256], index: 0, kind: input, shape index: {}]
  %s1 = inlined_call_operand.hbm [shape: bf16[256,128], index: 1, kind: input, shape index: {}]
  %s2 = inlined_call_operand.vmem [shape: f32[1,128], index: 2, kind: input, shape index: {}]
  %s3 = inlined_call_operand.hbm [shape: bf16[128,128], index: 3, kind: input, shape index: {}]
  %s4 = inlined_call_operand.vmem [shape: f32[1,128], index: 4, kind: input, shape index: {}]
  %s5 = inlined_call_operand.hbm [shape: bf16[128,256], index: 5, kind: input, shape index: {}]
  %s6 = inlined_call_operand.vmem [shape: f32[1,256], index: 6, kind: input, shape index: {}]
  %s7 = inlined_call_operand.hbm [shape: bf16[256,128], index: 7, kind: input, shape index: {}]
  %s8 = inlined_call_operand.vmem [shape: f32[1,128], index: 8, kind: input, shape index: {}]
  %s9 = inlined_call_operand.hbm [shape: bf16[128,256], index: 9, kind: input, shape index: {}]
  %s10 = inlined_call_operand.vmem [shape: f32[1,256], index: 10, kind: input, shape index: {}]
  %s11 = inlined_call_operand.hbm [shape: bf16[256,128], index: 11, kind: input, shape index: {}]
  %s12 = inlined_call_operand.vmem [shape: f32[1,128], index: 12, kind: input, shape index: {}]
  %s13 = inlined_call_operand.hbm [shape: bf16[128,128], index: 13, kind: input, shape index: {}]
  %s14 = inlined_call_operand.vmem [shape: f32[1,128], index: 14, kind: input, shape index: {}]
  %s15 = inlined_call_operand.hbm [shape: bf16[128,256], index: 15, kind: input, shape index: {}]
  %s16 = inlined_call_operand.vmem [shape: f32[1,256], index: 16, kind: input, shape index: {}]
  %s17 = inlined_call_operand.hbm [shape: bf16[256,256], index: 17, kind: output, shape index: {0}]
  %s18 = inlined_call_operand.hbm [shape: f32[256,256], index: 18, kind: output, shape index: {1}]
  %19 = xla_tuple %s17, %s18
  %s20 = sld [smem:[#allocation0]]
  $region122: #{tpu_custom_call.1} parent=0
    _
  %s22 = ssub.s32 1, %s20
  %s23 = scalar_select 0, %s22, %s20
  $region1: #{tpu_custom_call.1} parent=0
    #allocation2 [shape = 'u8[131072]{0}', space=vmem, size = 0x20000, scoped, tag = 'input window, operand 0, single buffered']
    #allocation3 [shape = 's32[1]{0}', space=sflag, size = 0x4, scoped, tag = 'scoped memory for tpu_custom_call.1']
    #allocation4 [shape = 's32[1]{0}', space=sflag, size = 0x4, scoped, tag = 'scoped memory for tpu_custom_call.1']
    #allocation5 [shape = 'u8[65536]{0}', space=vmem, size = 0x10000, scoped, tag = 'input window, operand 1, single buffered']
    #allocation6 [shape = 's32[1]{0}', space=sflag, size = 0x4, scoped, tag = 'scoped memory for tpu_custom_call.1']
    #allocation7 [shape = 'u8[32768]{0}', space=vmem, size = 0x8000, scoped, tag = 'input window, operand 3, single buffered']
    #allocation8 [shape = 'u8[65536]{0}', space=vmem, size = 0x10000, scoped, tag = 'input window, operand 5, single buffered']
    #allocation9 [shape = 's32[1]{0}', space=sflag, size = 0x4, scoped, tag = 'scoped memory for tpu_custom_call.1']
    #allocation10 [shape = 'u8[65536]{0}', space=vmem, size = 0x10000, scoped, tag = 'input window, operand 7, single buffered']
    #allocation11 [shape = 'u8[65536]{0}', space=vmem, size = 0x10000, scoped, tag = 'input window, operand 9, single buffered']
    #allocation12 [shape = 's32[1]{0}', space=sflag, size = 0x4, scoped, tag = 'scoped memory for tpu_custom_call.1']
    #allocation13 [shape = 'u8[65536]{0}', space=vmem, size = 0x10000, scoped, tag = 'input window, operand 11, single buffered']
    #allocation14 [shape = 'u8[32768]{0}', space=vmem, size = 0x8000, scoped, tag = 'input window, operand 13, single buffered']
    #allocation15 [shape = 's32[1]{0}', space=sflag, size = 0x4, scoped, tag = 'scoped memory for tpu_custom_call.1']
    #allocation16 [shape = 'u8[65536]{0}', space=vmem, size = 0x10000, scoped, tag = 'input window, operand 15, single buffered']
    #allocation17 [shape = 'u8[131072]{0}', space=vmem, size = 0x20000, scoped, tag = 'output window, operand 0, single buffered']
    #allocation18 [shape = 'u8[262144]{0}', space=vmem, size = 0x40000, scoped, tag = 'output window, operand 1, single buffered']
    #allocation19 [shape = 's32[1]{0}', space=sflag, size = 0x4, scoped, tag = 'scoped memory for tpu_custom_call.1']
    %24 = vsyncpa [#allocation3], 0
    %25 = vsyncpa [#allocation6], 0
    %26 = vsyncpa [#allocation9], 0
    %27 = vsyncpa [#allocation12], 0
    %28 = vsyncpa [#allocation15], 0
    %29 = vsyncpa [#allocation4], 0
    %30 = vsyncpa [#allocation19], 0
    // Predicated region
    $region2: #{tpu_custom_call.1} parent=1 // pred_check
      _
    $region3: #{tpu_custom_call.1} parent=1 // pred_check_branch
      %32 = sbr.rel (0) target = $region5
    $region4: #{tpu_custom_call.1} parent=1 // pred_region
      %s34 = ssub.s32 4096, 4096
      %35 = vsyncadd [#allocation3], %s34
      %s36 = sshll.u32 [#allocation2], 4
      %s37 = int_to_ptr.vmem [resolvable:$true] %s36
      %42 = dma.hbm_to_vmem [thread:$0]  %s0, 4096, %s37, [#allocation3], 128, 128, 8
    $region5: #{tpu_custom_call.1} parent=1 // pred_fallthru
      _
    // Predicated region
    $region6: #{tpu_custom_call.1} parent=1 // pred_check
      _
    $region7: #{tpu_custom_call.1} parent=1 // pred_check_branch
      %44 = sbr.rel (0) target = $region9
    $region8: #{tpu_custom_call.1} parent=1 // pred_region
      %s46 = ssub.s32 2048, 2048
      %47 = vsyncadd [#allocation6], %s46
      %s48 = sshll.u32 [#allocation5], 4
      %s49 = int_to_ptr.vmem [resolvable:$true] %s48
      %54 = dma.hbm_to_vmem [thread:$0]  %s1, 2048, %s49, [#allocation6], 64, 64, 4
    $region9: #{tpu_custom_call.1} parent=1 // pred_fallthru
      _
    // Predicated region
    $region10: #{tpu_custom_call.1} parent=1 // pred_check
      _
    $region11: #{tpu_custom_call.1} parent=1 // pred_check_branch
      %56 = sbr.rel (0) target = $region13
    $region12: #{tpu_custom_call.1} parent=1 // pred_region
      _
    $region13: #{tpu_custom_call.1} parent=1 // pred_fallthru
      _
    // Predicated region
    $region14: #{tpu_custom_call.1} parent=1 // pred_check
      _
    $region15: #{tpu_custom_call.1} parent=1 // pred_check_branch
      %58 = sbr.rel (0) target = $region17
    $region16: #{tpu_custom_call.1} parent=1 // pred_region
      %s60 = ssub.s32 1024, 1024
      %61 = vsyncadd [#allocation6], %s60
      %s62 = sshll.u32 [#allocation7], 4
      %s63 = int_to_ptr.vmem [resolvable:$true] %s62
      %68 = dma.hbm_to_vmem [thread:$0]  %s3, 1024, %s63, [#allocation6], 64, 64, 4
    $region17: #{tpu_custom_call.1} parent=1 // pred_fallthru
      _
    // Predicated region
    $region18: #{tpu_custom_call.1} parent=1 // pred_check
      _
    $region19: #{tpu_custom_call.1} parent=1 // pred_check_branch
      %70 = sbr.rel (0) target = $region21
    $region20: #{tpu_custom_call.1} parent=1 // pred_region
      _
    $region21: #{tpu_custom_call.1} parent=1 // pred_fallthru
      _
    // Predicated region
    $region22: #{tpu_custom_call.1} parent=1 // pred_check
      _
    $region23: #{tpu_custom_call.1} parent=1 // pred_check_branch
      %72 = sbr.rel (0) target = $region25
    $region24: #{tpu_custom_call.1} parent=1 // pred_region
      %s74 = ssub.s32 2048, 2048
      %75 = vsyncadd [#allocation9], %s74
      %s76 = sshll.u32 [#allocation8], 4
      %s77 = int_to_ptr.vmem [resolvable:$true] %s76
      %82 = dma.hbm_to_vmem [thread:$0]  %s5, 2048, %s77, [#allocation9], 128, 128, 8
    $region25: #{tpu_custom_call.1} parent=1 // pred_fallthru
      _
    // Predicated region
    $region26: #{tpu_custom_call.1} parent=1 // pred_check
      _
    $region27: #{tpu_custom_call.1} parent=1 // pred_check_branch
      %84 = sbr.rel (0) target = $region29
    $region28: #{tpu_custom_call.1} parent=1 // pred_region
      _
    $region29: #{tpu_custom_call.1} parent=1 // pred_fallthru
      _
    // Predicated region
    $region30: #{tpu_custom_call.1} parent=1 // pred_check
      _
    $region31: #{tpu_custom_call.1} parent=1 // pred_check_branch
      %86 = sbr.rel (0) target = $region33
    $region32: #{tpu_custom_call.1} parent=1 // pred_region
      %s88 = ssub.s32 2048, 2048
      %89 = vsyncadd [#allocation9], %s88
      %s90 = sshll.u32 [#allocation10], 4
      %s91 = int_to_ptr.vmem [resolvable:$true] %s90
      %96 = dma.hbm_to_vmem [thread:$0]  %s7, 2048, %s91, [#allocation9], 64, 64, 4
    $region33: #{tpu_custom_call.1} parent=1 // pred_fallthru
      _
    // Predicated region
    $region34: #{tpu_custom_call.1} parent=1 // pred_check
      _
    $region35: #{tpu_custom_call.1} parent=1 // pred_check_branch
      %98 = sbr.rel (0) target = $region37
    $region36: #{tpu_custom_call.1} parent=1 // pred_region
      _
    $region37: #{tpu_custom_call.1} parent=1 // pred_fallthru
      _
    // Predicated region
    $region38: #{tpu_custom_call.1} parent=1 // pred_check
      _
    $region39: #{tpu_custom_call.1} parent=1 // pred_check_branch
      %100 = sbr.rel (0) target = $region41
    $region40: #{tpu_custom_call.1} parent=1 // pred_region
      %s102 = ssub.s32 2048, 2048
      %103 = vsyncadd [#allocation12], %s102
      %s104 = sshll.u32 [#allocation11], 4
      %s105 = int_to_ptr.vmem [resolvable:$true] %s104
      %110 = dma.hbm_to_vmem [thread:$0]  %s9, 2048, %s105, [#allocation12], 128, 128, 8
    $region41: #{tpu_custom_call.1} parent=1 // pred_fallthru
      _
    // Predicated region
    $region42: #{tpu_custom_call.1} parent=1 // pred_check
      _
    $region43: #{tpu_custom_call.1} parent=1 // pred_check_branch
      %112 = sbr.rel (0) target = $region45
    $region44: #{tpu_custom_call.1} parent=1 // pred_region
      _
    $region45: #{tpu_custom_call.1} parent=1 // pred_fallthru
      _
    // Predicated region
    $region46: #{tpu_custom_call.1} parent=1 // pred_check
      _
    $region47: #{tpu_custom_call.1} parent=1 // pred_check_branch
      %114 = sbr.rel (0) target = $region49
    $region48: #{tpu_custom_call.1} parent=1 // pred_region
      %s116 = ssub.s32 2048, 2048
      %117 = vsyncadd [#allocation12], %s116
      %s118 = sshll.u32 [#allocation13], 4
      %s119 = int_to_ptr.vmem [resolvable:$true] %s118
      %124 = dma.hbm_to_vmem [thread:$0]  %s11, 2048, %s119, [#allocation12], 64, 64, 4
    $region49: #{tpu_custom_call.1} parent=1 // pred_fallthru
      _
    // Predicated region
    $region50: #{tpu_custom_call.1} parent=1 // pred_check
      _
    $region51: #{tpu_custom_call.1} parent=1 // pred_check_branch
      %126 = sbr.rel (0) target = $region53
    $region52: #{tpu_custom_call.1} parent=1 // pred_region
      _
    $region53: #{tpu_custom_call.1} parent=1 // pred_fallthru
      _
    // Predicated region
    $region54: #{tpu_custom_call.1} parent=1 // pred_check
      _
    $region55: #{tpu_custom_call.1} parent=1 // pred_check_branch
      %128 = sbr.rel (0) target = $region57
    $region56: #{tpu_custom_call.1} parent=1 // pred_region
      %s130 = ssub.s32 1024, 1024
      %131 = vsyncadd [#allocation15], %s130
      %s132 = sshll.u32 [#allocation14], 4
      %s133 = int_to_ptr.vmem [resolvable:$true] %s132
      %138 = dma.hbm_to_vmem [thread:$0]  %s13, 1024, %s133, [#allocation15], 64, 64, 4
    $region57: #{tpu_custom_call.1} parent=1 // pred_fallthru
      _
    // Predicated region
    $region58: #{tpu_custom_call.1} parent=1 // pred_check
      _
    $region59: #{tpu_custom_call.1} parent=1 // pred_check_branch
      %140 = sbr.rel (0) target = $region61
    $region60: #{tpu_custom_call.1} parent=1 // pred_region
      _
    $region61: #{tpu_custom_call.1} parent=1 // pred_fallthru
      _
    // Predicated region
    $region62: #{tpu_custom_call.1} parent=1 // pred_check
      _
    $region63: #{tpu_custom_call.1} parent=1 // pred_check_branch
      %142 = sbr.rel (0) target = $region65
    $region64: #{tpu_custom_call.1} parent=1 // pred_region
      %s144 = ssub.s32 2048, 2048
      %145 = vsyncadd [#allocation15], %s144
      %s146 = sshll.u32 [#allocation16], 4
      %s147 = int_to_ptr.vmem [resolvable:$true] %s146
      %152 = dma.hbm_to_vmem [thread:$0]  %s15, 2048, %s147, [#allocation15], 128, 128, 8
    $region65: #{tpu_custom_call.1} parent=1 // pred_fallthru
      _
    // Predicated region
    $region66: #{tpu_custom_call.1} parent=1 // pred_check
      _
    $region67: #{tpu_custom_call.1} parent=1 // pred_check_branch
      %154 = sbr.rel (0) target = $region69
    $region68: #{tpu_custom_call.1} parent=1 // pred_region
      _
    $region69: #{tpu_custom_call.1} parent=1 // pred_fallthru
      _
    // Predicated region
    $region70: #{tpu_custom_call.1} parent=1 // pred_check
      _
    $region71: #{tpu_custom_call.1} parent=1 // pred_check_branch
      %156 = sbr.rel (0) target = $region73
    $region72: #{tpu_custom_call.1} parent=1 // pred_region
      %157 = dma.done [#allocation3], 4096
    $region73: #{tpu_custom_call.1} parent=1 // pred_fallthru
      _
    // Predicated region
    $region74: #{tpu_custom_call.1} parent=1 // pred_check
      _
    $region75: #{tpu_custom_call.1} parent=1 // pred_check_branch
      %159 = sbr.rel (0) target = $region77
    $region76: #{tpu_custom_call.1} parent=1 // pred_region
      %160 = dma.done [#allocation6], 2048
    $region77: #{tpu_custom_call.1} parent=1 // pred_fallthru
      _
    // Predicated region
    $region78: #{tpu_custom_call.1} parent=1 // pred_check
      _
    $region79: #{tpu_custom_call.1} parent=1 // pred_check_branch
      %162 = sbr.rel (0) target = $region81
    $region80: #{tpu_custom_call.1} parent=1 // pred_region
      %163 = dma.done [#allocation6], 1024
    $region81: #{tpu_custom_call.1} parent=1 // pred_fallthru
      _
    // Predicated region
    $region82: #{tpu_custom_call.1} parent=1 // pred_check
      _
    $region83: #{tpu_custom_call.1} parent=1 // pred_check_branch
      %165 = sbr.rel (0) target = $region85
    $region84: #{tpu_custom_call.1} parent=1 // pred_region
      %166 = dma.done [#allocation9], 2048
    $region85: #{tpu_custom_call.1} parent=1 // pred_fallthru
      _
    // Predicated region
    $region86: #{tpu_custom_call.1} parent=1 // pred_check
      _
    $region87: #{tpu_custom_call.1} parent=1 // pred_check_branch
      %168 = sbr.rel (0) target = $region89
    $region88: #{tpu_custom_call.1} parent=1 // pred_region
      %169 = dma.done [#allocation9], 2048
    $region89: #{tpu_custom_call.1} parent=1 // pred_fallthru
      _
    // Predicated region
    $region90: #{tpu_custom_call.1} parent=1 // pred_check
      _
    $region91: #{tpu_custom_call.1} parent=1 // pred_check_branch
      %171 = sbr.rel (0) target = $region93
    $region92: #{tpu_custom_call.1} parent=1 // pred_region
      %172 = dma.done [#allocation12], 2048
    $region93: #{tpu_custom_call.1} parent=1 // pred_fallthru
      _
    // Predicated region
    $region94: #{tpu_custom_call.1} parent=1 // pred_check
      _
    $region95: #{tpu_custom_call.1} parent=1 // pred_check_branch
      %174 = sbr.rel (0) target = $region97
    $region96: #{tpu_custom_call.1} parent=1 // pred_region
      %175 = dma.done [#allocation12], 2048
    $region97: #{tpu_custom_call.1} parent=1 // pred_fallthru
      _
    // Predicated region
    $region98: #{tpu_custom_call.1} parent=1 // pred_check
      _
    $region99: #{tpu_custom_call.1} parent=1 // pred_check_branch
      %177 = sbr.rel (0) target = $region101
    $region100: #{tpu_custom_call.1} parent=1 // pred_region
      %178 = dma.done [#allocation15], 1024
    $region101: #{tpu_custom_call.1} parent=1 // pred_fallthru
      _
    // Predicated region
    $region102: #{tpu_custom_call.1} parent=1 // pred_check
      _
    $region103: #{tpu_custom_call.1} parent=1 // pred_check_branch
      %180 = sbr.rel (0) target = $region105
    $region104: #{tpu_custom_call.1} parent=1 // pred_region
      %181 = dma.done [#allocation15], 2048
    $region105: #{tpu_custom_call.1} parent=1 // pred_fallthru
      _
    %v183 = vld [vmem:[#allocation2] sm:$0xff]
    %v184 = vld [vmem:[#allocation2 + $0x8] sm:$0xff]
    %v185 = vld [vmem:[#allocation2 + $0x10] sm:$0xff]
    %v186 = vld [vmem:[#allocation2 + $0x18] sm:$0xff]
    %v187 = vld [vmem:[#allocation2 + $0x20] sm:$0xff]
    %v188 = vld [vmem:[#allocation2 + $0x28] sm:$0xff]
    %v189 = vld [vmem:[#allocation2 + $0x30] sm:$0xff]
    %v190 = vld [vmem:[#allocation2 + $0x38] sm:$0xff]
    %v191 = vld [vmem:[#allocation2 + $0x40] sm:$0xff]
    %v192 = vld [vmem:[#allocation2 + $0x48] sm:$0xff]
    %v193 = vld [vmem:[#allocation2 + $0x50] sm:$0xff]
    %v194 = vld [vmem:[#allocation2 + $0x58] sm:$0xff]
    %v195 = vld [vmem:[#allocation2 + $0x60] sm:$0xff]
    %v196 = vld [vmem:[#allocation2 + $0x68] sm:$0xff]
    %v197 = vld [vmem:[#allocation2 + $0x70] sm:$0xff]
    %v198 = vld [vmem:[#allocation2 + $0x78] sm:$0xff]
    %v199 = vld [vmem:[#allocation2 + $0x80] sm:$0xff]
    %v200 = vld [vmem:[#allocation2 + $0x88] sm:$0xff]
    %v201 = vld [vmem:[#allocation2 + $0x90] sm:$0xff]
    %v202 = vld [vmem:[#allocation2 + $0x98] sm:$0xff]
    %v203 = vld [vmem:[#allocation2 + $0xa0] sm:$0xff]
    %v204 = vld [vmem:[#allocation2 + $0xa8] sm:$0xff]
    %v205 = vld [vmem:[#allocation2 + $0xb0] sm:$0xff]
    %v206 = vld [vmem:[#allocation2 + $0xb8] sm:$0xff]
    %v207 = vld [vmem:[#allocation2 + $0xc0] sm:$0xff]
    %v208 = vld [vmem:[#allocation2 + $0xc8] sm:$0xff]
    %v209 = vld [vmem:[#allocation2 + $0xd0] sm:$0xff]
    %v210 = vld [vmem:[#allocation2 + $0xd8] sm:$0xff]
    %v211 = vld [vmem:[#allocation2 + $0xe0] sm:$0xff]
    %v212 = vld [vmem:[#allocation2 + $0xe8] sm:$0xff]
    %v213 = vld [vmem:[#allocation2 + $0xf0] sm:$0xff]
    %v214 = vld [vmem:[#allocation2 + $0xf8] sm:$0xff]
    %v215 = vld [vmem:[#allocation5] sm:$0xf]
    %v216 = vld [vmem:[#allocation5 + $0x4] sm:$0xf]
    %v217 = vld [vmem:[#allocation5 + $0x8] sm:$0xf]
    %v218 = vld [vmem:[#allocation5 + $0xc] sm:$0xf]
    %v219 = vld [vmem:[#allocation5 + $0x10] sm:$0xf]
    %v220 = vld [vmem:[#allocation5 + $0x14] sm:$0xf]
    %v221 = vld [vmem:[#allocation5 + $0x18] sm:$0xf]
    %v222 = vld [vmem:[#allocation5 + $0x1c] sm:$0xf]
    %v223 = vld [vmem:[#allocation5 + $0x20] sm:$0xf]
    %v224 = vld [vmem:[#allocation5 + $0x24] sm:$0xf]
    %v225 = vld [vmem:[#allocation5 + $0x28] sm:$0xf]
    %v226 = vld [vmem:[#allocation5 + $0x2c] sm:$0xf]
    %v227 = vld [vmem:[#allocation5 + $0x30] sm:$0xf]
    %v228 = vld [vmem:[#allocation5 + $0x34] sm:$0xf]
    %v229 = vld [vmem:[#allocation5 + $0x38] sm:$0xf]
    %v230 = vld [vmem:[#allocation5 + $0x3c] sm:$0xf]
    %v231 = vld [vmem:[#allocation5 + $0x40] sm:$0xf]
    %v232 = vld [vmem:[#allocation5 + $0x44] sm:$0xf]
    %v233 = vld [vmem:[#allocation5 + $0x48] sm:$0xf]
    %v234 = vld [vmem:[#allocation5 + $0x4c] sm:$0xf]
    %v235 = vld [vmem:[#allocation5 + $0x50] sm:$0xf]
    %v236 = vld [vmem:[#allocation5 + $0x54] sm:$0xf]
    %v237 = vld [vmem:[#allocation5 + $0x58] sm:$0xf]
    %v238 = vld [vmem:[#allocation5 + $0x5c] sm:$0xf]
    %v239 = vld [vmem:[#allocation5 + $0x60] sm:$0xf]
    %v240 = vld [vmem:[#allocation5 + $0x64] sm:$0xf]
    %v241 = vld [vmem:[#allocation5 + $0x68] sm:$0xf]
    %v242 = vld [vmem:[#allocation5 + $0x6c] sm:$0xf]
    %v243 = vld [vmem:[#allocation5 + $0x70] sm:$0xf]
    %v244 = vld [vmem:[#allocation5 + $0x74] sm:$0xf]
    %v245 = vld [vmem:[#allocation5 + $0x78] sm:$0xf]
    %v246 = vld [vmem:[#allocation5 + $0x7c] sm:$0xf]
    %v247 = vld [vmem:[%s2] sm:$0x1]
    %v249 = vlaneseq
    %v250 = vshrl.u32 %v249, 7
    %v251 = vsub.s32 0, %v250
    %v252 = vrot.slane %v247, %v251
    %v286 = vunpack.c.l.b16 %v183
    %v287 = vunpack.c.h.b16 %v183
    %v288 = vunpack.c.l.b16 %v184
    %v289 = vunpack.c.h.b16 %v184
    %v290 = vunpack.c.l.b16 %v185
    %v291 = vunpack.c.h.b16 %v185
    %v292 = vunpack.c.l.b16 %v186
    %v293 = vunpack.c.h.b16 %v186
    %v294 = vunpack.c.l.b16 %v187
    %v295 = vunpack.c.h.b16 %v187
    %v296 = vunpack.c.l.b16 %v188
    %v297 = vunpack.c.h.b16 %v188
    %v298 = vunpack.c.l.b16 %v189
    %v299 = vunpack.c.h.b16 %v189
    %v300 = vunpack.c.l.b16 %v190
    %v301 = vunpack.c.h.b16 %v190
    %v302 = vunpack.c.l.b16 %v191
    %v303 = vunpack.c.h.b16 %v191
    %v304 = vunpack.c.l.b16 %v192
    %v305 = vunpack.c.h.b16 %v192
    %v306 = vunpack.c.l.b16 %v193
    %v307 = vunpack.c.h.b16 %v193
    %v308 = vunpack.c.l.b16 %v194
    %v309 = vunpack.c.h.b16 %v194
    %v310 = vunpack.c.l.b16 %v195
    %v311 = vunpack.c.h.b16 %v195
    %v312 = vunpack.c.l.b16 %v196
    %v313 = vunpack.c.h.b16 %v196
    %v314 = vunpack.c.l.b16 %v197
    %v315 = vunpack.c.h.b16 %v197
    %v316 = vunpack.c.l.b16 %v198
    %v317 = vunpack.c.h.b16 %v198
    %v318 = vunpack.c.l.b16 %v199
    %v319 = vunpack.c.h.b16 %v199
    %v320 = vunpack.c.l.b16 %v200
    %v321 = vunpack.c.h.b16 %v200
    %v322 = vunpack.c.l.b16 %v201
    %v323 = vunpack.c.h.b16 %v201
    %v324 = vunpack.c.l.b16 %v202
    %v325 = vunpack.c.h.b16 %v202
    %v326 = vunpack.c.l.b16 %v203
    %v327 = vunpack.c.h.b16 %v203
    %v328 = vunpack.c.l.b16 %v204
    %v329 = vunpack.c.h.b16 %v204
    %v330 = vunpack.c.l.b16 %v205
    %v331 = vunpack.c.h.b16 %v205
    %v332 = vunpack.c.l.b16 %v206
    %v333 = vunpack.c.h.b16 %v206
    %v334 = vunpack.c.l.b16 %v207
    %v335 = vunpack.c.h.b16 %v207
    %v336 = vunpack.c.l.b16 %v208
    %v337 = vunpack.c.h.b16 %v208
    %v338 = vunpack.c.l.b16 %v209
    %v339 = vunpack.c.h.b16 %v209
    %v340 = vunpack.c.l.b16 %v210
    %v341 = vunpack.c.h.b16 %v210
    %v342 = vunpack.c.l.b16 %v211
    %v343 = vunpack.c.h.b16 %v211
    %v344 = vunpack.c.l.b16 %v212
    %v345 = vunpack.c.h.b16 %v212
    %v346 = vunpack.c.l.b16 %v213
    %v347 = vunpack.c.h.b16 %v213
    %v348 = vunpack.c.l.b16 %v214
    %v349 = vunpack.c.h.b16 %v214
    %v350 = vpack.c.b16 %v288, %v286
    %v351 = vpack.c.b16 %v289, %v287
    %v352 = vpack.c.b16 %v292, %v290
    %v353 = vpack.c.b16 %v293, %v291
    %v354 = vpack.c.b16 %v296, %v294
    %v355 = vpack.c.b16 %v297, %v295
    %v356 = vpack.c.b16 %v300, %v298
    %v357 = vpack.c.b16 %v301, %v299
    %v358 = vpack.c.b16 %v304, %v302
    %v359 = vpack.c.b16 %v305, %v303
    %v360 = vpack.c.b16 %v308, %v306
    %v361 = vpack.c.b16 %v309, %v307
    %v362 = vpack.c.b16 %v312, %v310
    %v363 = vpack.c.b16 %v313, %v311
    %v364 = vpack.c.b16 %v316, %v314
    %v365 = vpack.c.b16 %v317, %v315
    %v366 = vpack.c.b16 %v320, %v318
    %v367 = vpack.c.b16 %v321, %v319
    %v368 = vpack.c.b16 %v324, %v322
    %v369 = vpack.c.b16 %v325, %v323
    %v370 = vpack.c.b16 %v328, %v326
    %v371 = vpack.c.b16 %v329, %v327
    %v372 = vpack.c.b16 %v332, %v330
    %v373 = vpack.c.b16 %v333, %v331
    %v374 = vpack.c.b16 %v336, %v334
    %v375 = vpack.c.b16 %v337, %v335
    %v376 = vpack.c.b16 %v340, %v338
    %v377 = vpack.c.b16 %v341, %v339
    %v378 = vpack.c.b16 %v344, %v342
    %v379 = vpack.c.b16 %v345, %v343
    %v380 = vpack.c.b16 %v348, %v346
    %v381 = vpack.c.b16 %v349, %v347
    %v446 = vunpack.c.l.b16 %v215
    %v447 = vunpack.c.l.b16 %v216
    %v448 = vunpack.c.l.b16 %v217
    %v449 = vunpack.c.l.b16 %v218
    %v450 = vunpack.c.l.b16 %v219
    %v451 = vunpack.c.l.b16 %v220
    %v452 = vunpack.c.l.b16 %v221
    %v453 = vunpack.c.l.b16 %v222
    %v454 = vunpack.c.l.b16 %v223
    %v455 = vunpack.c.l.b16 %v224
    %v456 = vunpack.c.l.b16 %v225
    %v457 = vunpack.c.l.b16 %v226
    %v458 = vunpack.c.l.b16 %v227
    %v459 = vunpack.c.l.b16 %v228
    %v460 = vunpack.c.l.b16 %v229
    %v461 = vunpack.c.l.b16 %v230
    %v462 = vunpack.c.l.b16 %v231
    %v463 = vunpack.c.l.b16 %v232
    %v464 = vunpack.c.l.b16 %v233
    %v465 = vunpack.c.l.b16 %v234
    %v466 = vunpack.c.l.b16 %v235
    %v467 = vunpack.c.l.b16 %v236
    %v468 = vunpack.c.l.b16 %v237
    %v469 = vunpack.c.l.b16 %v238
    %v470 = vunpack.c.l.b16 %v239
    %v471 = vunpack.c.l.b16 %v240
    %v472 = vunpack.c.l.b16 %v241
    %v473 = vunpack.c.l.b16 %v242
    %v474 = vunpack.c.l.b16 %v243
    %v475 = vunpack.c.l.b16 %v244
    %v476 = vunpack.c.l.b16 %v245
    %v477 = vunpack.c.l.b16 %v246
    %v478 = vpack.c.b16 %v447, %v446
    %v479 = vpack.c.b16 %v449, %v448
    %v480 = vpack.c.b16 %v451, %v450
    %v481 = vpack.c.b16 %v453, %v452
    %v482 = vpack.c.b16 %v455, %v454
    %v483 = vpack.c.b16 %v457, %v456
    %v484 = vpack.c.b16 %v459, %v458
    %v485 = vpack.c.b16 %v461, %v460
    %v486 = vpack.c.b16 %v463, %v462
    %v487 = vpack.c.b16 %v465, %v464
    %v488 = vpack.c.b16 %v467, %v466
    %v489 = vpack.c.b16 %v469, %v468
    %v490 = vpack.c.b16 %v471, %v470
    %v491 = vpack.c.b16 %v473, %v472
    %v492 = vpack.c.b16 %v475, %v474
    %v493 = vpack.c.b16 %v477, %v476
    %510 = vmatprep.subr.bf16.mxu0 0
    %511 = vmatpush1.bf16.msra.mxu0 %v478
    %512 = vmatprep.subr.bf16.mxu0 0
    %513 = vmatpush1.bf16.msra.mxu0 %v479
    %514 = vmatprep.subr.bf16.mxu0 0
    %515 = vmatpush1.bf16.msra.mxu0 %v480
    %516 = vmatprep.subr.bf16.mxu0 0
    %517 = vmatpush1.bf16.msra.mxu0 %v481
    %518 = vmatprep.subr.bf16.mxu0 0
    %519 = vmatpush1.bf16.msra.mxu0 %v482
    %520 = vmatprep.subr.bf16.mxu0 0
    %521 = vmatpush1.bf16.msra.mxu0 %v483
    %522 = vmatprep.subr.bf16.mxu0 0
    %523 = vmatpush1.bf16.msra.mxu0 %v484
    %524 = vmatprep.subr.bf16.mxu0 0
    %525 = vmatpush1.bf16.msra.mxu0 %v485
    %526 = vmatprep.subr.bf16.mxu0 0
    %527 = vmatpush1.bf16.msra.mxu0 %v486
    %528 = vmatprep.subr.bf16.mxu0 0
    %529 = vmatpush1.bf16.msra.mxu0 %v487
    %530 = vmatprep.subr.bf16.mxu0 0
    %531 = vmatpush1.bf16.msra.mxu0 %v488
    %532 = vmatprep.subr.bf16.mxu0 0
    %533 = vmatpush1.bf16.msra.mxu0 %v489
    %534 = vmatprep.subr.bf16.mxu0 0
    %535 = vmatpush1.bf16.msra.mxu0 %v490
    %536 = vmatprep.subr.bf16.mxu0 0
    %537 = vmatpush1.bf16.msra.mxu0 %v491
    %538 = vmatprep.subr.bf16.mxu0 0
    %539 = vmatpush1.bf16.msra.mxu0 %v492
    %540 = vmatprep.subr.bf16.mxu0 0
    %541 = vmatpush1.bf16.msra.mxu0 %v493
    %542 = vmatprep.mubr.bf16.mxu0 %v351
    %543 = vmatmul.mubr.bf16.gmra.mrb[0].mxu0 %v350
    %v544 = vpop.f32.mrb[0].mxu0
    %v545 = vadd.f32 %v252, %v544
    %v546 = vpop.f32.mrb[0].mxu0
    %v547 = vpop.f32.mrb[0].mxu0
    %v548 = vadd.f32 %v252, %v547
    %v549 = vpop.f32.mrb[0].mxu0
    %550 = vmatprep.mubr.bf16.mxu0 %v353
    %551 = vmatmul.mubr.bf16.gmra.mrb[0].mxu0 %v352
    %v552 = vpop.f32.mrb[0].mxu0
    %v553 = vadd.f32 %v252, %v552
    %v554 = vpop.f32.mrb[0].mxu0
    %v555 = vpop.f32.mrb[0].mxu0
    %v556 = vadd.f32 %v252, %v555
    %v557 = vpop.f32.mrb[0].mxu0
    %558 = vmatprep.mubr.bf16.mxu0 %v355
    %559 = vmatmul.mubr.bf16.gmra.mrb[0].mxu0 %v354
    %v560 = vpop.f32.mrb[0].mxu0
    %v561 = vadd.f32 %v252, %v560
    %v562 = vpop.f32.mrb[0].mxu0
    %v563 = vpop.f32.mrb[0].mxu0
    %v564 = vadd.f32 %v252, %v563
    %v565 = vpop.f32.mrb[0].mxu0
    %566 = vmatprep.mubr.bf16.mxu0 %v357
    %567 = vmatmul.mubr.bf16.gmra.mrb[0].mxu0 %v356
    %v568 = vpop.f32.mrb[0].mxu0
    %v569 = vadd.f32 %v252, %v568
    %v570 = vpop.f32.mrb[0].mxu0
    %v571 = vpop.f32.mrb[0].mxu0
    %v572 = vadd.f32 %v252, %v571
    %v573 = vpop.f32.mrb[0].mxu0
    %574 = vmatprep.mubr.bf16.mxu0 %v359
    %575 = vmatmul.mubr.bf16.gmra.mrb[0].mxu0 %v358
    %v576 = vpop.f32.mrb[0].mxu0
    %v577 = vadd.f32 %v252, %v576
    %v578 = vpop.f32.mrb[0].mxu0
    %v579 = vpop.f32.mrb[0].mxu0
    %v580 = vadd.f32 %v252, %v579
    %v581 = vpop.f32.mrb[0].mxu0
    %582 = vmatprep.mubr.bf16.mxu0 %v361
    %583 = vmatmul.mubr.bf16.gmra.mrb[0].mxu0 %v360
    %v584 = vpop.f32.mrb[0].mxu0
    %v585 = vadd.f32 %v252, %v584
    %v586 = vpop.f32.mrb[0].mxu0
    %v587 = vpop.f32.mrb[0].mxu0
    %v588 = vadd.f32 %v252, %v587
    %v589 = vpop.f32.mrb[0].mxu0
    %590 = vmatprep.mubr.bf16.mxu0 %v363
    %591 = vmatmul.mubr.bf16.gmra.mrb[0].mxu0 %v362
    %v592 = vpop.f32.mrb[0].mxu0
    %v593 = vadd.f32 %v252, %v592
    %v594 = vpop.f32.mrb[0].mxu0
    %v595 = vpop.f32.mrb[0].mxu0
    %v596 = vadd.f32 %v252, %v595
    %v597 = vpop.f32.mrb[0].mxu0
    %598 = vmatprep.mubr.bf16.mxu0 %v365
    %599 = vmatmul.mubr.bf16.gmra.mrb[0].mxu0 %v364
    %v600 = vpop.f32.mrb[0].mxu0
    %v601 = vadd.f32 %v252, %v600
    %v602 = vpop.f32.mrb[0].mxu0
    %v603 = vpop.f32.mrb[0].mxu0
    %v604 = vadd.f32 %v252, %v603
    %v605 = vpop.f32.mrb[0].mxu0
    %606 = vmatprep.mubr.bf16.mxu0 %v367
    %607 = vmatmul.mubr.bf16.gmra.mrb[0].mxu0 %v366
    %v608 = vpop.f32.mrb[0].mxu0
    %v609 = vadd.f32 %v252, %v608
    %v610 = vpop.f32.mrb[0].mxu0
    %v611 = vpop.f32.mrb[0].mxu0
    %v612 = vadd.f32 %v252, %v611
    %v613 = vpop.f32.mrb[0].mxu0
    %614 = vmatprep.mubr.bf16.mxu0 %v369
    %615 = vmatmul.mubr.bf16.gmra.mrb[0].mxu0 %v368
    %v616 = vpop.f32.mrb[0].mxu0
    %v617 = vadd.f32 %v252, %v616
    %v618 = vpop.f32.mrb[0].mxu0
    %v619 = vpop.f32.mrb[0].mxu0
    %v620 = vadd.f32 %v252, %v619
    %v621 = vpop.f32.mrb[0].mxu0
    %622 = vmatprep.mubr.bf16.mxu0 %v371
    %623 = vmatmul.mubr.bf16.gmra.mrb[0].mxu0 %v370
    %v624 = vpop.f32.mrb[0].mxu0
    %v625 = vadd.f32 %v252, %v624
    %v626 = vpop.f32.mrb[0].mxu0
    %v627 = vpop.f32.mrb[0].mxu0
    %v628 = vadd.f32 %v252, %v627
    %v629 = vpop.f32.mrb[0].mxu0
    %630 = vmatprep.mubr.bf16.mxu0 %v373
    %631 = vmatmul.mubr.bf16.gmra.mrb[0].mxu0 %v372
    %v632 = vpop.f32.mrb[0].mxu0
    %v633 = vadd.f32 %v252, %v632
    %v634 = vpop.f32.mrb[0].mxu0
    %v635 = vpop.f32.mrb[0].mxu0
    %v636 = vadd.f32 %v252, %v635
    %v637 = vpop.f32.mrb[0].mxu0
    %638 = vmatprep.mubr.bf16.mxu0 %v375
    %639 = vmatmul.mubr.bf16.gmra.mrb[0].mxu0 %v374
    %v640 = vpop.f32.mrb[0].mxu0
    %v641 = vadd.f32 %v252, %v640
    %v642 = vpop.f32.mrb[0].mxu0
    %v643 = vpop.f32.mrb[0].mxu0
    %v644 = vadd.f32 %v252, %v643
    %v645 = vpop.f32.mrb[0].mxu0
    %646 = vmatprep.mubr.bf16.mxu0 %v377
    %647 = vmatmul.mubr.bf16.gmra.mrb[0].mxu0 %v376
    %v648 = vpop.f32.mrb[0].mxu0
    %v649 = vadd.f32 %v252, %v648
    %v650 = vpop.f32.mrb[0].mxu0
    %v651 = vpop.f32.mrb[0].mxu0
    %v652 = vadd.f32 %v252, %v651
    %v653 = vpop.f32.mrb[0].mxu0
    %654 = vmatprep.mubr.bf16.mxu0 %v379
    %655 = vmatmul.mubr.bf16.gmra.mrb[0].mxu0 %v378
    %v656 = vpop.f32.mrb[0].mxu0
    %v657 = vadd.f32 %v252, %v656
    %v658 = vpop.f32.mrb[0].mxu0
    %v659 = vpop.f32.mrb[0].mxu0
    %v660 = vadd.f32 %v252, %v659
    %v661 = vpop.f32.mrb[0].mxu0
    %662 = vmatprep.mubr.bf16.mxu0 %v381
    %663 = vmatmul.mubr.bf16.gmra.mrb[0].mxu0 %v380
    %v664 = vpop.f32.mrb[0].mxu0
    %v665 = vadd.f32 %v252, %v664
    %v666 = vpop.f32.mrb[0].mxu0
    %v667 = vpop.f32.mrb[0].mxu0
    %v668 = vadd.f32 %v252, %v667
    %v669 = vpop.f32.mrb[0].mxu0
    %670 = vdwg.mxu0
    %v671 = vmax.f32 %v545, 0.0
    %v672 = vmax.f32 %v548, 0.0
    %v673 = vmax.f32 %v553, 0.0
    %v674 = vmax.f32 %v556, 0.0
    %v675 = vmax.f32 %v561, 0.0
    %v676 = vmax.f32 %v564, 0.0
    %v677 = vmax.f32 %v569, 0.0
    %v678 = vmax.f32 %v572, 0.0
    %v679 = vmax.f32 %v577, 0.0
    %v680 = vmax.f32 %v580, 0.0
    %v681 = vmax.f32 %v585, 0.0
    %v682 = vmax.f32 %v588, 0.0
    %v683 = vmax.f32 %v593, 0.0
    %v684 = vmax.f32 %v596, 0.0
    %v685 = vmax.f32 %v601, 0.0
    %v686 = vmax.f32 %v604, 0.0
    %v687 = vmax.f32 %v609, 0.0
    %v688 = vmax.f32 %v612, 0.0
    %v689 = vmax.f32 %v617, 0.0
    %v690 = vmax.f32 %v620, 0.0
    %v691 = vmax.f32 %v625, 0.0
    %v692 = vmax.f32 %v628, 0.0
    %v693 = vmax.f32 %v633, 0.0
    %v694 = vmax.f32 %v636, 0.0
    %v695 = vmax.f32 %v641, 0.0
    %v696 = vmax.f32 %v644, 0.0
    %v697 = vmax.f32 %v649, 0.0
    %v698 = vmax.f32 %v652, 0.0
    %v699 = vmax.f32 %v657, 0.0
    %v700 = vmax.f32 %v660, 0.0
    %v701 = vmax.f32 %v665, 0.0
    %v702 = vmax.f32 %v668, 0.0
    %v703 = vpack.c.bf16 %v672, %v671
    %v704 = vpack.c.bf16 %v674, %v673
    %v705 = vpack.c.bf16 %v676, %v675
    %v706 = vpack.c.bf16 %v678, %v677
    %v707 = vpack.c.bf16 %v680, %v679
    %v708 = vpack.c.bf16 %v682, %v681
    %v709 = vpack.c.bf16 %v684, %v683
    %v710 = vpack.c.bf16 %v686, %v685
    %v711 = vpack.c.bf16 %v688, %v687
    %v712 = vpack.c.bf16 %v690, %v689
    %v713 = vpack.c.bf16 %v692, %v691
    %v714 = vpack.c.bf16 %v694, %v693
    %v715 = vpack.c.bf16 %v696, %v695
    %v716 = vpack.c.bf16 %v698, %v697
    %v717 = vpack.c.bf16 %v700, %v699
    %v718 = vpack.c.bf16 %v702, %v701
    %v719 = vld [vmem:[#allocation7] sm:$0xf]
    %v720 = vld [vmem:[#allocation7 + $0x4] sm:$0xf]
    %v721 = vld [vmem:[#allocation7 + $0x8] sm:$0xf]
    %v722 = vld [vmem:[#allocation7 + $0xc] sm:$0xf]
    %v723 = vld [vmem:[#allocation7 + $0x10] sm:$0xf]
    %v724 = vld [vmem:[#allocation7 + $0x14] sm:$0xf]
    %v725 = vld [vmem:[#allocation7 + $0x18] sm:$0xf]
    %v726 = vld [vmem:[#allocation7 + $0x1c] sm:$0xf]
    %v727 = vld [vmem:[#allocation7 + $0x20] sm:$0xf]
    %v728 = vld [vmem:[#allocation7 + $0x24] sm:$0xf]
    %v729 = vld [vmem:[#allocation7 + $0x28] sm:$0xf]
    %v730 = vld [vmem:[#allocation7 + $0x2c] sm:$0xf]
    %v731 = vld [vmem:[#allocation7 + $0x30] sm:$0xf]
    %v732 = vld [vmem:[#allocation7 + $0x34] sm:$0xf]
    %v733 = vld [vmem:[#allocation7 + $0x38] sm:$0xf]
    %v734 = vld [vmem:[#allocation7 + $0x3c] sm:$0xf]
    %v735 = vld [vmem:[%s4] sm:$0x1]
    %v737 = vlaneseq
    %v738 = vshrl.u32 %v737, 7
    %v739 = vsub.s32 0, %v738
    %v740 = vrot.slane %v735, %v739
    %v758 = vunpack.c.l.b16 %v719
    %v759 = vunpack.c.l.b16 %v720
    %v760 = vunpack.c.l.b16 %v721
    %v761 = vunpack.c.l.b16 %v722
    %v762 = vunpack.c.l.b16 %v723
    %v763 = vunpack.c.l.b16 %v724
    %v764 = vunpack.c.l.b16 %v725
    %v765 = vunpack.c.l.b16 %v726
    %v766 = vunpack.c.l.b16 %v727
    %v767 = vunpack.c.l.b16 %v728
    %v768 = vunpack.c.l.b16 %v729
    %v769 = vunpack.c.l.b16 %v730
    %v770 = vunpack.c.l.b16 %v731
    %v771 = vunpack.c.l.b16 %v732
    %v772 = vunpack.c.l.b16 %v733
    %v773 = vunpack.c.l.b16 %v734
    %v774 = vpack.c.b16 %v759, %v758
    %v775 = vpack.c.b16 %v761, %v760
    %v776 = vpack.c.b16 %v763, %v762
    %v777 = vpack.c.b16 %v765, %v764
    %v778 = vpack.c.b16 %v767, %v766
    %v779 = vpack.c.b16 %v769, %v768
    %v780 = vpack.c.b16 %v771, %v770
    %v781 = vpack.c.b16 %v773, %v772
    %790 = vmatprep.subr.bf16.mxu0 0
    %791 = vmatpush1.bf16.msra.mxu0 %v774
    %792 = vmatprep.subr.bf16.mxu0 0
    %793 = vmatpush1.bf16.msra.mxu0 %v775
    %794 = vmatprep.subr.bf16.mxu0 0
    %795 = vmatpush1.bf16.msra.mxu0 %v776
    %796 = vmatprep.subr.bf16.mxu0 0
    %797 = vmatpush1.bf16.msra.mxu0 %v777
    %798 = vmatprep.subr.bf16.mxu0 0
    %799 = vmatpush1.bf16.msra.mxu0 %v778
    %800 = vmatprep.subr.bf16.mxu0 0
    %801 = vmatpush1.bf16.msra.mxu0 %v779
    %802 = vmatprep.subr.bf16.mxu0 0
    %803 = vmatpush1.bf16.msra.mxu0 %v780
    %804 = vmatprep.subr.bf16.mxu0 0
    %805 = vmatpush1.bf16.msra.mxu0 %v781
    %806 = vmatprep.subr.bf16.mxu0 0
    %807 = vmatpush1.bf16.msra.mxu0 0
    %808 = vmatprep.subr.bf16.mxu0 0
    %809 = vmatpush1.bf16.msra.mxu0 0
    %810 = vmatprep.subr.bf16.mxu0 0
    %811 = vmatpush1.bf16.msra.mxu0 0
    %812 = vmatprep.subr.bf16.mxu0 0
    %813 = vmatpush1.bf16.msra.mxu0 0
    %814 = vmatprep.subr.bf16.mxu0 0
    %815 = vmatpush1.bf16.msra.mxu0 0
    %816 = vmatprep.subr.bf16.mxu0 0
    %817 = vmatpush1.bf16.msra.mxu0 0
    %818 = vmatprep.subr.bf16.mxu0 0
    %819 = vmatpush1.bf16.msra.mxu0 0
    %820 = vmatprep.subr.bf16.mxu0 0
    %821 = vmatpush1.bf16.msra.mxu0 0
    %822 = vmatprep.mubr.bf16.mxu0 0
    %823 = vmatmul.mubr.bf16.gmra.mrb[0].mxu0 %v703
    %v824 = vpop.f32.mrb[0].mxu0
    %v825 = vadd.f32 %v740, %v824
    %v826 = vpop.f32.mrb[0].mxu0
    %v827 = vpop.f32.mrb[0].mxu0
    %v828 = vadd.f32 %v740, %v827
    %v829 = vpop.f32.mrb[0].mxu0
    %830 = vmatprep.mubr.bf16.mxu0 0
    %831 = vmatmul.mubr.bf16.gmra.mrb[0].mxu0 %v704
    %v832 = vpop.f32.mrb[0].mxu0
    %v833 = vadd.f32 %v740, %v832
    %v834 = vpop.f32.mrb[0].mxu0
    %v835 = vpop.f32.mrb[0].mxu0
    %v836 = vadd.f32 %v740, %v835
    %v837 = vpop.f32.mrb[0].mxu0
    %838 = vmatprep.mubr.bf16.mxu0 0
    %839 = vmatmul.mubr.bf16.gmra.mrb[0].mxu0 %v705
    %v840 = vpop.f32.mrb[0].mxu0
    %v841 = vadd.f32 %v740, %v840
    %v842 = vpop.f32.mrb[0].mxu0
    %v843 = vpop.f32.mrb[0].mxu0
    %v844 = vadd.f32 %v740, %v843
    %v845 = vpop.f32.mrb[0].mxu0
    %846 = vmatprep.mubr.bf16.mxu0 0
    %847 = vmatmul.mubr.bf16.gmra.mrb[0].mxu0 %v706
    %v848 = vpop.f32.mrb[0].mxu0
    %v849 = vadd.f32 %v740, %v848
    %v850 = vpop.f32.mrb[0].mxu0
    %v851 = vpop.f32.mrb[0].mxu0
    %v852 = vadd.f32 %v740, %v851
    %v853 = vpop.f32.mrb[0].mxu0
    %854 = vmatprep.mubr.bf16.mxu0 0
    %855 = vmatmul.mubr.bf16.gmra.mrb[0].mxu0 %v707
    %v856 = vpop.f32.mrb[0].mxu0
    %v857 = vadd.f32 %v740, %v856
    %v858 = vpop.f32.mrb[0].mxu0
    %v859 = vpop.f32.mrb[0].mxu0
    %v860 = vadd.f32 %v740, %v859
    %v861 = vpop.f32.mrb[0].mxu0
    %862 = vmatprep.mubr.bf16.mxu0 0
    %863 = vmatmul.mubr.bf16.gmra.mrb[0].mxu0 %v708
    %v864 = vpop.f32.mrb[0].mxu0
    %v865 = vadd.f32 %v740, %v864
    %v866 = vpop.f32.mrb[0].mxu0
    %v867 = vpop.f32.mrb[0].mxu0
    %v868 = vadd.f32 %v740, %v867
    %v869 = vpop.f32.mrb[0].mxu0
    %870 = vmatprep.mubr.bf16.mxu0 0
    %871 = vmatmul.mubr.bf16.gmra.mrb[0].mxu0 %v709
    %v872 = vpop.f32.mrb[0].mxu0
    %v873 = vadd.f32 %v740, %v872
    %v874 = vpop.f32.mrb[0].mxu0
    %v875 = vpop.f32.mrb[0].mxu0
    %v876 = vadd.f32 %v740, %v875
    %v877 = vpop.f32.mrb[0].mxu0
    %878 = vmatprep.mubr.bf16.mxu0 0
    %879 = vmatmul.mubr.bf16.gmra.mrb[0].mxu0 %v710
    %v880 = vpop.f32.mrb[0].mxu0
    %v881 = vadd.f32 %v740, %v880
    %v882 = vpop.f32.mrb[0].mxu0
    %v883 = vpop.f32.mrb[0].mxu0
    %v884 = vadd.f32 %v740, %v883
    %v885 = vpop.f32.mrb[0].mxu0
    %886 = vmatprep.mubr.bf16.mxu0 0
    %887 = vmatmul.mubr.bf16.gmra.mrb[0].mxu0 %v711
    %v888 = vpop.f32.mrb[0].mxu0
    %v889 = vadd.f32 %v740, %v888
    %v890 = vpop.f32.mrb[0].mxu0
    %v891 = vpop.f32.mrb[0].mxu0
    %v892 = vadd.f32 %v740, %v891
    %v893 = vpop.f32.mrb[0].mxu0
    %894 = vmatprep.mubr.bf16.mxu0 0
    %895 = vmatmul.mubr.bf16.gmra.mrb[0].mxu0 %v712
    %v896 = vpop.f32.mrb[0].mxu0
    %v897 = vadd.f32 %v740, %v896
    %v898 = vpop.f32.mrb[0].mxu0
    %v899 = vpop.f32.mrb[0].mxu0
    %v900 = vadd.f32 %v740, %v899
    %v901 = vpop.f32.mrb[0].mxu0
    %902 = vmatprep.mubr.bf16.mxu0 0
    %903 = vmatmul.mubr.bf16.gmra.mrb[0].mxu0 %v713
    %v904 = vpop.f32.mrb[0].mxu0
    %v905 = vadd.f32 %v740, %v904
    %v906 = vpop.f32.mrb[0].mxu0
    %v907 = vpop.f32.mrb[0].mxu0
    %v908 = vadd.f32 %v740, %v907
    %v909 = vpop.f32.mrb[0].mxu0
    %910 = vmatprep.mubr.bf16.mxu0 0
    %911 = vmatmul.mubr.bf16.gmra.mrb[0].mxu0 %v714
    %v912 = vpop.f32.mrb[0].mxu0
    %v913 = vadd.f32 %v740, %v912
    %v914 = vpop.f32.mrb[0].mxu0
    %v915 = vpop.f32.mrb[0].mxu0
    %v916 = vadd.f32 %v740, %v915
    %v917 = vpop.f32.mrb[0].mxu0
    %918 = vmatprep.mubr.bf16.mxu0 0
    %919 = vmatmul.mubr.bf16.gmra.mrb[0].mxu0 %v715
    %v920 = vpop.f32.mrb[0].mxu0
    %v921 = vadd.f32 %v740, %v920
    %v922 = vpop.f32.mrb[0].mxu0
    %v923 = vpop.f32.mrb[0].mxu0
    %v924 = vadd.f32 %v740, %v923
    %v925 = vpop.f32.mrb[0].mxu0
    %926 = vmatprep.mubr.bf16.mxu0 0
    %927 = vmatmul.mubr.bf16.gmra.mrb[0].mxu0 %v716
    %v928 = vpop.f32.mrb[0].mxu0
    %v929 = vadd.f32 %v740, %v928
    %v930 = vpop.f32.mrb[0].mxu0
    %v931 = vpop.f32.mrb[0].mxu0
    %v932 = vadd.f32 %v740, %v931
    %v933 = vpop.f32.mrb[0].mxu0
    %934 = vmatprep.mubr.bf16.mxu0 0
    %935 = vmatmul.mubr.bf16.gmra.mrb[0].mxu0 %v717
    %v936 = vpop.f32.mrb[0].mxu0
    %v937 = vadd.f32 %v740, %v936
    %v938 = vpop.f32.mrb[0].mxu0
    %v939 = vpop.f32.mrb[0].mxu0
    %v940 = vadd.f32 %v740, %v939
    %v941 = vpop.f32.mrb[0].mxu0
    %942 = vmatprep.mubr.bf16.mxu0 0
    %943 = vmatmul.mubr.bf16.gmra.mrb[0].mxu0 %v718
    %v944 = vpop.f32.mrb[0].mxu0
    %v945 = vadd.f32 %v740, %v944
    %v946 = vpop.f32.mrb[0].mxu0
    %v947 = vpop.f32.mrb[0].mxu0
    %v948 = vadd.f32 %v740, %v947
    %v949 = vpop.f32.mrb[0].mxu0
    %950 = vdwg.mxu0
    %v951 = vmax.f32 %v825, 0.0
    %v952 = vmax.f32 %v828, 0.0
    %v953 = vmax.f32 %v833, 0.0
    %v954 = vmax.f32 %v836, 0.0
    %v955 = vmax.f32 %v841, 0.0
    %v956 = vmax.f32 %v844, 0.0
    %v957 = vmax.f32 %v849, 0.0
    %v958 = vmax.f32 %v852, 0.0
    %v959 = vmax.f32 %v857, 0.0
    %v960 = vmax.f32 %v860, 0.0
    %v961 = vmax.f32 %v865, 0.0
    %v962 = vmax.f32 %v868, 0.0
    %v963 = vmax.f32 %v873, 0.0
    %v964 = vmax.f32 %v876, 0.0
    %v965 = vmax.f32 %v881, 0.0
    %v966 = vmax.f32 %v884, 0.0
    %v967 = vmax.f32 %v889, 0.0
    %v968 = vmax.f32 %v892, 0.0
    %v969 = vmax.f32 %v897, 0.0
    %v970 = vmax.f32 %v900, 0.0
    %v971 = vmax.f32 %v905, 0.0
    %v972 = vmax.f32 %v908, 0.0
    %v973 = vmax.f32 %v913, 0.0
    %v974 = vmax.f32 %v916, 0.0
    %v975 = vmax.f32 %v921, 0.0
    %v976 = vmax.f32 %v924, 0.0
    %v977 = vmax.f32 %v929, 0.0
    %v978 = vmax.f32 %v932, 0.0
    %v979 = vmax.f32 %v937, 0.0
    %v980 = vmax.f32 %v940, 0.0
    %v981 = vmax.f32 %v945, 0.0
    %v982 = vmax.f32 %v948, 0.0
    %v983 = vpack.c.bf16 %v952, %v951
    %v984 = vpack.c.bf16 %v954, %v953
    %v985 = vpack.c.bf16 %v956, %v955
    %v986 = vpack.c.bf16 %v958, %v957
    %v987 = vpack.c.bf16 %v960, %v959
    %v988 = vpack.c.bf16 %v962, %v961
    %v989 = vpack.c.bf16 %v964, %v963
    %v990 = vpack.c.bf16 %v966, %v965
    %v991 = vpack.c.bf16 %v968, %v967
    %v992 = vpack.c.bf16 %v970, %v969
    %v993 = vpack.c.bf16 %v972, %v971
    %v994 = vpack.c.bf16 %v974, %v973
    %v995 = vpack.c.bf16 %v976, %v975
    %v996 = vpack.c.bf16 %v978, %v977
    %v997 = vpack.c.bf16 %v980, %v979
    %v998 = vpack.c.bf16 %v982, %v981
    %v999 = vld [vmem:[#allocation8] sm:$0xff]
    %v1000 = vld [vmem:[#allocation8 + $0x8] sm:$0xff]
    %v1001 = vld [vmem:[#allocation8 + $0x10] sm:$0xff]
    %v1002 = vld [vmem:[#allocation8 + $0x18] sm:$0xff]
    %v1003 = vld [vmem:[#allocation8 + $0x20] sm:$0xff]
    %v1004 = vld [vmem:[#allocation8 + $0x28] sm:$0xff]
    %v1005 = vld [vmem:[#allocation8 + $0x30] sm:$0xff]
    %v1006 = vld [vmem:[#allocation8 + $0x38] sm:$0xff]
    %v1007 = vld [vmem:[#allocation8 + $0x40] sm:$0xff]
    %v1008 = vld [vmem:[#allocation8 + $0x48] sm:$0xff]
    %v1009 = vld [vmem:[#allocation8 + $0x50] sm:$0xff]
    %v1010 = vld [vmem:[#allocation8 + $0x58] sm:$0xff]
    %v1011 = vld [vmem:[#allocation8 + $0x60] sm:$0xff]
    %v1012 = vld [vmem:[#allocation8 + $0x68] sm:$0xff]
    %v1013 = vld [vmem:[#allocation8 + $0x70] sm:$0xff]
    %v1014 = vld [vmem:[#allocation8 + $0x78] sm:$0xff]
    %v1015 = vld [vmem:[%s6] sm:$0x3]
    %v1017 = vlaneseq
    %v1018 = vshrl.u32 %v1017, 7
    %v1019 = vsub.s32 0, %v1018
    %v1020 = vrot.slane %v1015, %v1019
    %v1021 = vlaneseq
    %v1022 = vshrl.u32 %v1021, 7
    %v1023 = vsub.s32 1, %v1022
    %v1024 = vrot.slane %v1015, %v1023
    %v1043 = vunpack.c.l.b16 %v999
    %v1044 = vunpack.c.h.b16 %v999
    %v1045 = vunpack.c.l.b16 %v1000
    %v1046 = vunpack.c.h.b16 %v1000
    %v1047 = vunpack.c.l.b16 %v1001
    %v1048 = vunpack.c.h.b16 %v1001
    %v1049 = vunpack.c.l.b16 %v1002
    %v1050 = vunpack.c.h.b16 %v1002
    %v1051 = vunpack.c.l.b16 %v1003
    %v1052 = vunpack.c.h.b16 %v1003
    %v1053 = vunpack.c.l.b16 %v1004
    %v1054 = vunpack.c.h.b16 %v1004
    %v1055 = vunpack.c.l.b16 %v1005
    %v1056 = vunpack.c.h.b16 %v1005
    %v1057 = vunpack.c.l.b16 %v1006
    %v1058 = vunpack.c.h.b16 %v1006
    %v1059 = vunpack.c.l.b16 %v1007
    %v1060 = vunpack.c.h.b16 %v1007
    %v1061 = vunpack.c.l.b16 %v1008
    %v1062 = vunpack.c.h.b16 %v1008
    %v1063 = vunpack.c.l.b16 %v1009
    %v1064 = vunpack.c.h.b16 %v1009
    %v1065 = vunpack.c.l.b16 %v1010
    %v1066 = vunpack.c.h.b16 %v1010
    %v1067 = vunpack.c.l.b16 %v1011
    %v1068 = vunpack.c.h.b16 %v1011
    %v1069 = vunpack.c.l.b16 %v1012
    %v1070 = vunpack.c.h.b16 %v1012
    %v1071 = vunpack.c.l.b16 %v1013
    %v1072 = vunpack.c.h.b16 %v1013
    %v1073 = vunpack.c.l.b16 %v1014
    %v1074 = vunpack.c.h.b16 %v1014
    %v1075 = vpack.c.b16 %v1045, %v1043
    %v1076 = vpack.c.b16 %v1046, %v1044
    %v1077 = vpack.c.b16 %v1049, %v1047
    %v1078 = vpack.c.b16 %v1050, %v1048
    %v1079 = vpack.c.b16 %v1053, %v1051
    %v1080 = vpack.c.b16 %v1054, %v1052
    %v1081 = vpack.c.b16 %v1057, %v1055
    %v1082 = vpack.c.b16 %v1058, %v1056
    %v1083 = vpack.c.b16 %v1061, %v1059
    %v1084 = vpack.c.b16 %v1062, %v1060
    %v1085 = vpack.c.b16 %v1065, %v1063
    %v1086 = vpack.c.b16 %v1066, %v1064
    %v1087 = vpack.c.b16 %v1069, %v1067
    %v1088 = vpack.c.b16 %v1070, %v1068
    %v1089 = vpack.c.b16 %v1073, %v1071
    %v1090 = vpack.c.b16 %v1074, %v1072
    %1107 = vmatprep.subr.bf16.mxu0 %v1076
    %1108 = vmatpush1.bf16.msra.mxu0 %v1075
    %1109 = vmatprep.subr.bf16.mxu0 %v1078
    %1110 = vmatpush1.bf16.msra.mxu0 %v1077
    %1111 = vmatprep.subr.bf16.mxu0 %v1080
    %1112 = vmatpush1.bf16.msra.mxu0 %v1079
    %1113 = vmatprep.subr.bf16.mxu0 %v1082
    %1114 = vmatpush1.bf16.msra.mxu0 %v1081
    %1115 = vmatprep.subr.bf16.mxu0 %v1084
    %1116 = vmatpush1.bf16.msra.mxu0 %v1083
    %1117 = vmatprep.subr.bf16.mxu0 %v1086
    %1118 = vmatpush1.bf16.msra.mxu0 %v1085
    %1119 = vmatprep.subr.bf16.mxu0 %v1088
    %1120 = vmatpush1.bf16.msra.mxu0 %v1087
    %1121 = vmatprep.subr.bf16.mxu0 %v1090
    %1122 = vmatpush1.bf16.msra.mxu0 %v1089
    %1123 = vmatprep.subr.bf16.mxu0 0
    %1124 = vmatpush1.bf16.msra.mxu0 0
    %1125 = vmatprep.subr.bf16.mxu0 0
    %1126 = vmatpush1.bf16.msra.mxu0 0
    %1127 = vmatprep.subr.bf16.mxu0 0
    %1128 = vmatpush1.bf16.msra.mxu0 0
    %1129 = vmatprep.subr.bf16.mxu0 0
    %1130 = vmatpush1.bf16.msra.mxu0 0
    %1131 = vmatprep.subr.bf16.mxu0 0
    %1132 = vmatpush1.bf16.msra.mxu0 0
    %1133 = vmatprep.subr.bf16.mxu0 0
    %1134 = vmatpush1.bf16.msra.mxu0 0
    %1135 = vmatprep.subr.bf16.mxu0 0
    %1136 = vmatpush1.bf16.msra.mxu0 0
    %1137 = vmatprep.subr.bf16.mxu0 0
    %1138 = vmatpush1.bf16.msra.mxu0 0
    %1139 = vmatprep.mubr.bf16.mxu0 0
    %1140 = vmatmul.mubr.bf16.gmra.mrb[0].mxu0 %v983
    %v1141 = vpop.f32.mrb[0].mxu0
    %v1142 = vadd.f32 %v1020, %v1141
    %v1143 = vpop.f32.mrb[0].mxu0
    %v1144 = vadd.f32 %v1024, %v1143
    %v1145 = vpop.f32.mrb[0].mxu0
    %v1146 = vadd.f32 %v1020, %v1145
    %v1147 = vpop.f32.mrb[0].mxu0
    %v1148 = vadd.f32 %v1024, %v1147
    %1149 = vmatprep.mubr.bf16.mxu0 0
    %1150 = vmatmul.mubr.bf16.gmra.mrb[0].mxu0 %v984
    %v1151 = vpop.f32.mrb[0].mxu0
    %v1152 = vadd.f32 %v1020, %v1151
    %v1153 = vpop.f32.mrb[0].mxu0
    %v1154 = vadd.f32 %v1024, %v1153
    %v1155 = vpop.f32.mrb[0].mxu0
    %v1156 = vadd.f32 %v1020, %v1155
    %v1157 = vpop.f32.mrb[0].mxu0
    %v1158 = vadd.f32 %v1024, %v1157
    %1159 = vmatprep.mubr.bf16.mxu0 0
    %1160 = vmatmul.mubr.bf16.gmra.mrb[0].mxu0 %v985
    %v1161 = vpop.f32.mrb[0].mxu0
    %v1162 = vadd.f32 %v1020, %v1161
    %v1163 = vpop.f32.mrb[0].mxu0
    %v1164 = vadd.f32 %v1024, %v1163
    %v1165 = vpop.f32.mrb[0].mxu0
    %v1166 = vadd.f32 %v1020, %v1165
    %v1167 = vpop.f32.mrb[0].mxu0
    %v1168 = vadd.f32 %v1024, %v1167
    %1169 = vmatprep.mubr.bf16.mxu0 0
    %1170 = vmatmul.mubr.bf16.gmra.mrb[0].mxu0 %v986
    %v1171 = vpop.f32.mrb[0].mxu0
    %v1172 = vadd.f32 %v1020, %v1171
    %v1173 = vpop.f32.mrb[0].mxu0
    %v1174 = vadd.f32 %v1024, %v1173
    %v1175 = vpop.f32.mrb[0].mxu0
    %v1176 = vadd.f32 %v1020, %v1175
    %v1177 = vpop.f32.mrb[0].mxu0
    %v1178 = vadd.f32 %v1024, %v1177
    %1179 = vmatprep.mubr.bf16.mxu0 0
    %1180 = vmatmul.mubr.bf16.gmra.mrb[0].mxu0 %v987
    %v1181 = vpop.f32.mrb[0].mxu0
    %v1182 = vadd.f32 %v1020, %v1181
    %v1183 = vpop.f32.mrb[0].mxu0
    %v1184 = vadd.f32 %v1024, %v1183
    %v1185 = vpop.f32.mrb[0].mxu0
    %v1186 = vadd.f32 %v1020, %v1185
    %v1187 = vpop.f32.mrb[0].mxu0
    %v1188 = vadd.f32 %v1024, %v1187
    %1189 = vmatprep.mubr.bf16.mxu0 0
    %1190 = vmatmul.mubr.bf16.gmra.mrb[0].mxu0 %v988
    %v1191 = vpop.f32.mrb[0].mxu0
    %v1192 = vadd.f32 %v1020, %v1191
    %v1193 = vpop.f32.mrb[0].mxu0
    %v1194 = vadd.f32 %v1024, %v1193
    %v1195 = vpop.f32.mrb[0].mxu0
    %v1196 = vadd.f32 %v1020, %v1195
    %v1197 = vpop.f32.mrb[0].mxu0
    %v1198 = vadd.f32 %v1024, %v1197
    %1199 = vmatprep.mubr.bf16.mxu0 0
    %1200 = vmatmul.mubr.bf16.gmra.mrb[0].mxu0 %v989
    %v1201 = vpop.f32.mrb[0].mxu0
    %v1202 = vadd.f32 %v1020, %v1201
    %v1203 = vpop.f32.mrb[0].mxu0
    %v1204 = vadd.f32 %v1024, %v1203
    %v1205 = vpop.f32.mrb[0].mxu0
    %v1206 = vadd.f32 %v1020, %v1205
    %v1207 = vpop.f32.mrb[0].mxu0
    %v1208 = vadd.f32 %v1024, %v1207
    %1209 = vmatprep.mubr.bf16.mxu0 0
    %1210 = vmatmul.mubr.bf16.gmra.mrb[0].mxu0 %v990
    %v1211 = vpop.f32.mrb[0].mxu0
    %v1212 = vadd.f32 %v1020, %v1211
    %v1213 = vpop.f32.mrb[0].mxu0
    %v1214 = vadd.f32 %v1024, %v1213
    %v1215 = vpop.f32.mrb[0].mxu0
    %v1216 = vadd.f32 %v1020, %v1215
    %v1217 = vpop.f32.mrb[0].mxu0
    %v1218 = vadd.f32 %v1024, %v1217
    %1219 = vmatprep.mubr.bf16.mxu0 0
    %1220 = vmatmul.mubr.bf16.gmra.mrb[0].mxu0 %v991
    %v1221 = vpop.f32.mrb[0].mxu0
    %v1222 = vadd.f32 %v1020, %v1221
    %v1223 = vpop.f32.mrb[0].mxu0
    %v1224 = vadd.f32 %v1024, %v1223
    %v1225 = vpop.f32.mrb[0].mxu0
    %v1226 = vadd.f32 %v1020, %v1225
    %v1227 = vpop.f32.mrb[0].mxu0
    %v1228 = vadd.f32 %v1024, %v1227
    %1229 = vmatprep.mubr.bf16.mxu0 0
    %1230 = vmatmul.mubr.bf16.gmra.mrb[0].mxu0 %v992
    %v1231 = vpop.f32.mrb[0].mxu0
    %v1232 = vadd.f32 %v1020, %v1231
    %v1233 = vpop.f32.mrb[0].mxu0
    %v1234 = vadd.f32 %v1024, %v1233
    %v1235 = vpop.f32.mrb[0].mxu0
    %v1236 = vadd.f32 %v1020, %v1235
    %v1237 = vpop.f32.mrb[0].mxu0
    %v1238 = vadd.f32 %v1024, %v1237
    %1239 = vmatprep.mubr.bf16.mxu0 0
    %1240 = vmatmul.mubr.bf16.gmra.mrb[0].mxu0 %v993
    %v1241 = vpop.f32.mrb[0].mxu0
    %v1242 = vadd.f32 %v1020, %v1241
    %v1243 = vpop.f32.mrb[0].mxu0
    %v1244 = vadd.f32 %v1024, %v1243
    %v1245 = vpop.f32.mrb[0].mxu0
    %v1246 = vadd.f32 %v1020, %v1245
    %v1247 = vpop.f32.mrb[0].mxu0
    %v1248 = vadd.f32 %v1024, %v1247
    %1249 = vmatprep.mubr.bf16.mxu0 0
    %1250 = vmatmul.mubr.bf16.gmra.mrb[0].mxu0 %v994
    %v1251 = vpop.f32.mrb[0].mxu0
    %v1252 = vadd.f32 %v1020, %v1251
    %v1253 = vpop.f32.mrb[0].mxu0
    %v1254 = vadd.f32 %v1024, %v1253
    %v1255 = vpop.f32.mrb[0].mxu0
    %v1256 = vadd.f32 %v1020, %v1255
    %v1257 = vpop.f32.mrb[0].mxu0
    %v1258 = vadd.f32 %v1024, %v1257
    %1259 = vmatprep.mubr.bf16.mxu0 0
    %1260 = vmatmul.mubr.bf16.gmra.mrb[0].mxu0 %v995
    %v1261 = vpop.f32.mrb[0].mxu0
    %v1262 = vadd.f32 %v1020, %v1261
    %v1263 = vpop.f32.mrb[0].mxu0
    %v1264 = vadd.f32 %v1024, %v1263
    %v1265 = vpop.f32.mrb[0].mxu0
    %v1266 = vadd.f32 %v1020, %v1265
    %v1267 = vpop.f32.mrb[0].mxu0
    %v1268 = vadd.f32 %v1024, %v1267
    %1269 = vmatprep.mubr.bf16.mxu0 0
    %1270 = vmatmul.mubr.bf16.gmra.mrb[0].mxu0 %v996
    %v1271 = vpop.f32.mrb[0].mxu0
    %v1272 = vadd.f32 %v1020, %v1271
    %v1273 = vpop.f32.mrb[0].mxu0
    %v1274 = vadd.f32 %v1024, %v1273
    %v1275 = vpop.f32.mrb[0].mxu0
    %v1276 = vadd.f32 %v1020, %v1275
    %v1277 = vpop.f32.mrb[0].mxu0
    %v1278 = vadd.f32 %v1024, %v1277
    %1279 = vmatprep.mubr.bf16.mxu0 0
    %1280 = vmatmul.mubr.bf16.gmra.mrb[0].mxu0 %v997
    %v1281 = vpop.f32.mrb[0].mxu0
    %v1282 = vadd.f32 %v1020, %v1281
    %v1283 = vpop.f32.mrb[0].mxu0
    %v1284 = vadd.f32 %v1024, %v1283
    %v1285 = vpop.f32.mrb[0].mxu0
    %v1286 = vadd.f32 %v1020, %v1285
    %v1287 = vpop.f32.mrb[0].mxu0
    %v1288 = vadd.f32 %v1024, %v1287
    %1289 = vmatprep.mubr.bf16.mxu0 0
    %1290 = vmatmul.mubr.bf16.gmra.mrb[0].mxu0 %v998
    %v1291 = vpop.f32.mrb[0].mxu0
    %v1292 = vadd.f32 %v1020, %v1291
    %v1293 = vpop.f32.mrb[0].mxu0
    %v1294 = vadd.f32 %v1024, %v1293
    %v1295 = vpop.f32.mrb[0].mxu0
    %v1296 = vadd.f32 %v1020, %v1295
    %v1297 = vpop.f32.mrb[0].mxu0
    %v1298 = vadd.f32 %v1024, %v1297
    %1299 = vdwg.mxu0
    %v1300 = vmax.f32 %v1142, 0.0
    %v1301 = vmax.f32 %v1144, 0.0
    %v1302 = vmax.f32 %v1146, 0.0
    %v1303 = vmax.f32 %v1148, 0.0
    %v1304 = vmax.f32 %v1152, 0.0
    %v1305 = vmax.f32 %v1154, 0.0
    %v1306 = vmax.f32 %v1156, 0.0
    %v1307 = vmax.f32 %v1158, 0.0
    %v1308 = vmax.f32 %v1162, 0.0
    %v1309 = vmax.f32 %v1164, 0.0
    %v1310 = vmax.f32 %v1166, 0.0
    %v1311 = vmax.f32 %v1168, 0.0
    %v1312 = vmax.f32 %v1172, 0.0
    %v1313 = vmax.f32 %v1174, 0.0
    %v1314 = vmax.f32 %v1176, 0.0
    %v1315 = vmax.f32 %v1178, 0.0
    %v1316 = vmax.f32 %v1182, 0.0
    %v1317 = vmax.f32 %v1184, 0.0
    %v1318 = vmax.f32 %v1186, 0.0
    %v1319 = vmax.f32 %v1188, 0.0
    %v1320 = vmax.f32 %v1192, 0.0
    %v1321 = vmax.f32 %v1194, 0.0
    %v1322 = vmax.f32 %v1196, 0.0
    %v1323 = vmax.f32 %v1198, 0.0
    %v1324 = vmax.f32 %v1202, 0.0
    %v1325 = vmax.f32 %v1204, 0.0
    %v1326 = vmax.f32 %v1206, 0.0
    %v1327 = vmax.f32 %v1208, 0.0
    %v1328 = vmax.f32 %v1212, 0.0
    %v1329 = vmax.f32 %v1214, 0.0
    %v1330 = vmax.f32 %v1216, 0.0
    %v1331 = vmax.f32 %v1218, 0.0
    %v1332 = vmax.f32 %v1222, 0.0
    %v1333 = vmax.f32 %v1224, 0.0
    %v1334 = vmax.f32 %v1226, 0.0
    %v1335 = vmax.f32 %v1228, 0.0
    %v1336 = vmax.f32 %v1232, 0.0
    %v1337 = vmax.f32 %v1234, 0.0
    %v1338 = vmax.f32 %v1236, 0.0
    %v1339 = vmax.f32 %v1238, 0.0
    %v1340 = vmax.f32 %v1242, 0.0
    %v1341 = vmax.f32 %v1244, 0.0
    %v1342 = vmax.f32 %v1246, 0.0
    %v1343 = vmax.f32 %v1248, 0.0
    %v1344 = vmax.f32 %v1252, 0.0
    %v1345 = vmax.f32 %v1254, 0.0
    %v1346 = vmax.f32 %v1256, 0.0
    %v1347 = vmax.f32 %v1258, 0.0
    %v1348 = vmax.f32 %v1262, 0.0
    %v1349 = vmax.f32 %v1264, 0.0
    %v1350 = vmax.f32 %v1266, 0.0
    %v1351 = vmax.f32 %v1268, 0.0
    %v1352 = vmax.f32 %v1272, 0.0
    %v1353 = vmax.f32 %v1274, 0.0
    %v1354 = vmax.f32 %v1276, 0.0
    %v1355 = vmax.f32 %v1278, 0.0
    %v1356 = vmax.f32 %v1282, 0.0
    %v1357 = vmax.f32 %v1284, 0.0
    %v1358 = vmax.f32 %v1286, 0.0
    %v1359 = vmax.f32 %v1288, 0.0
    %v1360 = vmax.f32 %v1292, 0.0
    %v1361 = vmax.f32 %v1294, 0.0
    %v1362 = vmax.f32 %v1296, 0.0
    %v1363 = vmax.f32 %v1298, 0.0
    %v1364 = vpack.c.bf16 %v1302, %v1300
    %v1365 = vpack.c.bf16 %v1303, %v1301
    %v1366 = vpack.c.bf16 %v1306, %v1304
    %v1367 = vpack.c.bf16 %v1307, %v1305
    %v1368 = vpack.c.bf16 %v1310, %v1308
    %v1369 = vpack.c.bf16 %v1311, %v1309
    %v1370 = vpack.c.bf16 %v1314, %v1312
    %v1371 = vpack.c.bf16 %v1315, %v1313
    %v1372 = vpack.c.bf16 %v1318, %v1316
    %v1373 = vpack.c.bf16 %v1319, %v1317
    %v1374 = vpack.c.bf16 %v1322, %v1320
    %v1375 = vpack.c.bf16 %v1323, %v1321
    %v1376 = vpack.c.bf16 %v1326, %v1324
    %v1377 = vpack.c.bf16 %v1327, %v1325
    %v1378 = vpack.c.bf16 %v1330, %v1328
    %v1379 = vpack.c.bf16 %v1331, %v1329
    %v1380 = vpack.c.bf16 %v1334, %v1332
    %v1381 = vpack.c.bf16 %v1335, %v1333
    %v1382 = vpack.c.bf16 %v1338, %v1336
    %v1383 = vpack.c.bf16 %v1339, %v1337
    %v1384 = vpack.c.bf16 %v1342, %v1340
    %v1385 = vpack.c.bf16 %v1343, %v1341
    %v1386 = vpack.c.bf16 %v1346, %v1344
    %v1387 = vpack.c.bf16 %v1347, %v1345
    %v1388 = vpack.c.bf16 %v1350, %v1348
    %v1389 = vpack.c.bf16 %v1351, %v1349
    %v1390 = vpack.c.bf16 %v1354, %v1352
    %v1391 = vpack.c.bf16 %v1355, %v1353
    %v1392 = vpack.c.bf16 %v1358, %v1356
    %v1393 = vpack.c.bf16 %v1359, %v1357
    %v1394 = vpack.c.bf16 %v1362, %v1360
    %v1395 = vpack.c.bf16 %v1363, %v1361
    %v1396 = vld [vmem:[#allocation10] sm:$0xf]
    %v1397 = vld [vmem:[#allocation10 + $0x4] sm:$0xf]
    %v1398 = vld [vmem:[#allocation10 + $0x8] sm:$0xf]
    %v1399 = vld [vmem:[#allocation10 + $0xc] sm:$0xf]
    %v1400 = vld [vmem:[#allocation10 + $0x10] sm:$0xf]
    %v1401 = vld [vmem:[#allocation10 + $0x14] sm:$0xf]
    %v1402 = vld [vmem:[#allocation10 + $0x18] sm:$0xf]
    %v1403 = vld [vmem:[#allocation10 + $0x1c] sm:$0xf]
    %v1404 = vld [vmem:[#allocation10 + $0x20] sm:$0xf]
    %v1405 = vld [vmem:[#allocation10 + $0x24] sm:$0xf]
    %v1406 = vld [vmem:[#allocation10 + $0x28] sm:$0xf]
    %v1407 = vld [vmem:[#allocation10 + $0x2c] sm:$0xf]
    %v1408 = vld [vmem:[#allocation10 + $0x30] sm:$0xf]
    %v1409 = vld [vmem:[#allocation10 + $0x34] sm:$0xf]
    %v1410 = vld [vmem:[#allocation10 + $0x38] sm:$0xf]
    %v1411 = vld [vmem:[#allocation10 + $0x3c] sm:$0xf]
    %v1412 = vld [vmem:[#allocation10 + $0x40] sm:$0xf]
    %v1413 = vld [vmem:[#allocation10 + $0x44] sm:$0xf]
    %v1414 = vld [vmem:[#allocation10 + $0x48] sm:$0xf]
    %v1415 = vld [vmem:[#allocation10 + $0x4c] sm:$0xf]
    %v1416 = vld [vmem:[#allocation10 + $0x50] sm:$0xf]
    %v1417 = vld [vmem:[#allocation10 + $0x54] sm:$0xf]
    %v1418 = vld [vmem:[#allocation10 + $0x58] sm:$0xf]
    %v1419 = vld [vmem:[#allocation10 + $0x5c] sm:$0xf]
    %v1420 = vld [vmem:[#allocation10 + $0x60] sm:$0xf]
    %v1421 = vld [vmem:[#allocation10 + $0x64] sm:$0xf]
    %v1422 = vld [vmem:[#allocation10 + $0x68] sm:$0xf]
    %v1423 = vld [vmem:[#allocation10 + $0x6c] sm:$0xf]
    %v1424 = vld [vmem:[#allocation10 + $0x70] sm:$0xf]
    %v1425 = vld [vmem:[#allocation10 + $0x74] sm:$0xf]
    %v1426 = vld [vmem:[#allocation10 + $0x78] sm:$0xf]
    %v1427 = vld [vmem:[#allocation10 + $0x7c] sm:$0xf]
    %v1428 = vld [vmem:[%s8] sm:$0x1]
    %v1430 = vlaneseq
    %v1431 = vshrl.u32 %v1430, 7
    %v1432 = vsub.s32 0, %v1431
    %v1433 = vrot.slane %v1428, %v1432
    %v1467 = vunpack.c.l.b16 %v1396
    %v1468 = vunpack.c.l.b16 %v1397
    %v1469 = vunpack.c.l.b16 %v1398
    %v1470 = vunpack.c.l.b16 %v1399
    %v1471 = vunpack.c.l.b16 %v1400
    %v1472 = vunpack.c.l.b16 %v1401
    %v1473 = vunpack.c.l.b16 %v1402
    %v1474 = vunpack.c.l.b16 %v1403
    %v1475 = vunpack.c.l.b16 %v1404
    %v1476 = vunpack.c.l.b16 %v1405
    %v1477 = vunpack.c.l.b16 %v1406
    %v1478 = vunpack.c.l.b16 %v1407
    %v1479 = vunpack.c.l.b16 %v1408
    %v1480 = vunpack.c.l.b16 %v1409
    %v1481 = vunpack.c.l.b16 %v1410
    %v1482 = vunpack.c.l.b16 %v1411
    %v1483 = vunpack.c.l.b16 %v1412
    %v1484 = vunpack.c.l.b16 %v1413
    %v1485 = vunpack.c.l.b16 %v1414
    %v1486 = vunpack.c.l.b16 %v1415
    %v1487 = vunpack.c.l.b16 %v1416
    %v1488 = vunpack.c.l.b16 %v1417
    %v1489 = vunpack.c.l.b16 %v1418
    %v1490 = vunpack.c.l.b16 %v1419
    %v1491 = vunpack.c.l.b16 %v1420
    %v1492 = vunpack.c.l.b16 %v1421
    %v1493 = vunpack.c.l.b16 %v1422
    %v1494 = vunpack.c.l.b16 %v1423
    %v1495 = vunpack.c.l.b16 %v1424
    %v1496 = vunpack.c.l.b16 %v1425
    %v1497 = vunpack.c.l.b16 %v1426
    %v1498 = vunpack.c.l.b16 %v1427
    %v1499 = vpack.c.b16 %v1468, %v1467
    %v1500 = vpack.c.b16 %v1470, %v1469
    %v1501 = vpack.c.b16 %v1472, %v1471
    %v1502 = vpack.c.b16 %v1474, %v1473
    %v1503 = vpack.c.b16 %v1476, %v1475
    %v1504 = vpack.c.b16 %v1478, %v1477
    %v1505 = vpack.c.b16 %v1480, %v1479
    %v1506 = vpack.c.b16 %v1482, %v1481
    %v1507 = vpack.c.b16 %v1484, %v1483
    %v1508 = vpack.c.b16 %v1486, %v1485
    %v1509 = vpack.c.b16 %v1488, %v1487
    %v1510 = vpack.c.b16 %v1490, %v1489
    %v1511 = vpack.c.b16 %v1492, %v1491
    %v1512 = vpack.c.b16 %v1494, %v1493
    %v1513 = vpack.c.b16 %v1496, %v1495
    %v1514 = vpack.c.b16 %v1498, %v1497
    %1531 = vmatprep.subr.bf16.mxu0 0
    %1532 = vmatpush1.bf16.msra.mxu0 %v1499
    %1533 = vmatprep.subr.bf16.mxu0 0
    %1534 = vmatpush1.bf16.msra.mxu0 %v1500
    %1535 = vmatprep.subr.bf16.mxu0 0
    %1536 = vmatpush1.bf16.msra.mxu0 %v1501
    %1537 = vmatprep.subr.bf16.mxu0 0
    %1538 = vmatpush1.bf16.msra.mxu0 %v1502
    %1539 = vmatprep.subr.bf16.mxu0 0
    %1540 = vmatpush1.bf16.msra.mxu0 %v1503
    %1541 = vmatprep.subr.bf16.mxu0 0
    %1542 = vmatpush1.bf16.msra.mxu0 %v1504
    %1543 = vmatprep.subr.bf16.mxu0 0
    %1544 = vmatpush1.bf16.msra.mxu0 %v1505
    %1545 = vmatprep.subr.bf16.mxu0 0
    %1546 = vmatpush1.bf16.msra.mxu0 %v1506
    %1547 = vmatprep.subr.bf16.mxu0 0
    %1548 = vmatpush1.bf16.msra.mxu0 %v1507
    %1549 = vmatprep.subr.bf16.mxu0 0
    %1550 = vmatpush1.bf16.msra.mxu0 %v1508
    %1551 = vmatprep.subr.bf16.mxu0 0
    %1552 = vmatpush1.bf16.msra.mxu0 %v1509
    %1553 = vmatprep.subr.bf16.mxu0 0
    %1554 = vmatpush1.bf16.msra.mxu0 %v1510
    %1555 = vmatprep.subr.bf16.mxu0 0
    %1556 = vmatpush1.bf16.msra.mxu0 %v1511
    %1557 = vmatprep.subr.bf16.mxu0 0
    %1558 = vmatpush1.bf16.msra.mxu0 %v1512
    %1559 = vmatprep.subr.bf16.mxu0 0
    %1560 = vmatpush1.bf16.msra.mxu0 %v1513
    %1561 = vmatprep.subr.bf16.mxu0 0
    %1562 = vmatpush1.bf16.msra.mxu0 %v1514
    %1563 = vmatprep.mubr.bf16.mxu0 %v1365
    %1564 = vmatmul.mubr.bf16.gmra.mrb[0].mxu0 %v1364
    %v1565 = vpop.f32.mrb[0].mxu0
    %v1566 = vadd.f32 %v1433, %v1565
    %v1567 = vpop.f32.mrb[0].mxu0
    %v1568 = vpop.f32.mrb[0].mxu0
    %v1569 = vadd.f32 %v1433, %v1568
    %v1570 = vpop.f32.mrb[0].mxu0
    %1571 = vmatprep.mubr.bf16.mxu0 %v1367
    %1572 = vmatmul.mubr.bf16.gmra.mrb[0].mxu0 %v1366
    %v1573 = vpop.f32.mrb[0].mxu0
    %v1574 = vadd.f32 %v1433, %v1573
    %v1575 = vpop.f32.mrb[0].mxu0
    %v1576 = vpop.f32.mrb[0].mxu0
    %v1577 = vadd.f32 %v1433, %v1576
    %v1578 = vpop.f32.mrb[0].mxu0
    %1579 = vmatprep.mubr.bf16.mxu0 %v1369
    %1580 = vmatmul.mubr.bf16.gmra.mrb[0].mxu0 %v1368
    %v1581 = vpop.f32.mrb[0].mxu0
    %v1582 = vadd.f32 %v1433, %v1581
    %v1583 = vpop.f32.mrb[0].mxu0
    %v1584 = vpop.f32.mrb[0].mxu0
    %v1585 = vadd.f32 %v1433, %v1584
    %v1586 = vpop.f32.mrb[0].mxu0
    %1587 = vmatprep.mubr.bf16.mxu0 %v1371
    %1588 = vmatmul.mubr.bf16.gmra.mrb[0].mxu0 %v1370
    %v1589 = vpop.f32.mrb[0].mxu0
    %v1590 = vadd.f32 %v1433, %v1589
    %v1591 = vpop.f32.mrb[0].mxu0
    %v1592 = vpop.f32.mrb[0].mxu0
    %v1593 = vadd.f32 %v1433, %v1592
    %v1594 = vpop.f32.mrb[0].mxu0
    %1595 = vmatprep.mubr.bf16.mxu0 %v1373
    %1596 = vmatmul.mubr.bf16.gmra.mrb[0].mxu0 %v1372
    %v1597 = vpop.f32.mrb[0].mxu0
    %v1598 = vadd.f32 %v1433, %v1597
    %v1599 = vpop.f32.mrb[0].mxu0
    %v1600 = vpop.f32.mrb[0].mxu0
    %v1601 = vadd.f32 %v1433, %v1600
    %v1602 = vpop.f32.mrb[0].mxu0
    %1603 = vmatprep.mubr.bf16.mxu0 %v1375
    %1604 = vmatmul.mubr.bf16.gmra.mrb[0].mxu0 %v1374
    %v1605 = vpop.f32.mrb[0].mxu0
    %v1606 = vadd.f32 %v1433, %v1605
    %v1607 = vpop.f32.mrb[0].mxu0
    %v1608 = vpop.f32.mrb[0].mxu0
    %v1609 = vadd.f32 %v1433, %v1608
    %v1610 = vpop.f32.mrb[0].mxu0
    %1611 = vmatprep.mubr.bf16.mxu0 %v1377
    %1612 = vmatmul.mubr.bf16.gmra.mrb[0].mxu0 %v1376
    %v1613 = vpop.f32.mrb[0].mxu0
    %v1614 = vadd.f32 %v1433, %v1613
    %v1615 = vpop.f32.mrb[0].mxu0
    %v1616 = vpop.f32.mrb[0].mxu0
    %v1617 = vadd.f32 %v1433, %v1616
    %v1618 = vpop.f32.mrb[0].mxu0
    %1619 = vmatprep.mubr.bf16.mxu0 %v1379
    %1620 = vmatmul.mubr.bf16.gmra.mrb[0].mxu0 %v1378
    %v1621 = vpop.f32.mrb[0].mxu0
    %v1622 = vadd.f32 %v1433, %v1621
    %v1623 = vpop.f32.mrb[0].mxu0
    %v1624 = vpop.f32.mrb[0].mxu0
    %v1625 = vadd.f32 %v1433, %v1624
    %v1626 = vpop.f32.mrb[0].mxu0
    %1627 = vmatprep.mubr.bf16.mxu0 %v1381
    %1628 = vmatmul.mubr.bf16.gmra.mrb[0].mxu0 %v1380
    %v1629 = vpop.f32.mrb[0].mxu0
    %v1630 = vadd.f32 %v1433, %v1629
    %v1631 = vpop.f32.mrb[0].mxu0
    %v1632 = vpop.f32.mrb[0].mxu0
    %v1633 = vadd.f32 %v1433, %v1632
    %v1634 = vpop.f32.mrb[0].mxu0
    %1635 = vmatprep.mubr.bf16.mxu0 %v1383
    %1636 = vmatmul.mubr.bf16.gmra.mrb[0].mxu0 %v1382
    %v1637 = vpop.f32.mrb[0].mxu0
    %v1638 = vadd.f32 %v1433, %v1637
    %v1639 = vpop.f32.mrb[0].mxu0
    %v1640 = vpop.f32.mrb[0].mxu0
    %v1641 = vadd.f32 %v1433, %v1640
    %v1642 = vpop.f32.mrb[0].mxu0
    %1643 = vmatprep.mubr.bf16.mxu0 %v1385
    %1644 = vmatmul.mubr.bf16.gmra.mrb[0].mxu0 %v1384
    %v1645 = vpop.f32.mrb[0].mxu0
    %v1646 = vadd.f32 %v1433, %v1645
    %v1647 = vpop.f32.mrb[0].mxu0
    %v1648 = vpop.f32.mrb[0].mxu0
    %v1649 = vadd.f32 %v1433, %v1648
    %v1650 = vpop.f32.mrb[0].mxu0
    %1651 = vmatprep.mubr.bf16.mxu0 %v1387
    %1652 = vmatmul.mubr.bf16.gmra.mrb[0].mxu0 %v1386
    %v1653 = vpop.f32.mrb[0].mxu0
    %v1654 = vadd.f32 %v1433, %v1653
    %v1655 = vpop.f32.mrb[0].mxu0
    %v1656 = vpop.f32.mrb[0].mxu0
    %v1657 = vadd.f32 %v1433, %v1656
    %v1658 = vpop.f32.mrb[0].mxu0
    %1659 = vmatprep.mubr.bf16.mxu0 %v1389
    %1660 = vmatmul.mubr.bf16.gmra.mrb[0].mxu0 %v1388
    %v1661 = vpop.f32.mrb[0].mxu0
    %v1662 = vadd.f32 %v1433, %v1661
    %v1663 = vpop.f32.mrb[0].mxu0
    %v1664 = vpop.f32.mrb[0].mxu0
    %v1665 = vadd.f32 %v1433, %v1664
    %v1666 = vpop.f32.mrb[0].mxu0
    %1667 = vmatprep.mubr.bf16.mxu0 %v1391
    %1668 = vmatmul.mubr.bf16.gmra.mrb[0].mxu0 %v1390
    %v1669 = vpop.f32.mrb[0].mxu0
    %v1670 = vadd.f32 %v1433, %v1669
    %v1671 = vpop.f32.mrb[0].mxu0
    %v1672 = vpop.f32.mrb[0].mxu0
    %v1673 = vadd.f32 %v1433, %v1672
    %v1674 = vpop.f32.mrb[0].mxu0
    %1675 = vmatprep.mubr.bf16.mxu0 %v1393
    %1676 = vmatmul.mubr.bf16.gmra.mrb[0].mxu0 %v1392
    %v1677 = vpop.f32.mrb[0].mxu0
    %v1678 = vadd.f32 %v1433, %v1677
    %v1679 = vpop.f32.mrb[0].mxu0
    %v1680 = vpop.f32.mrb[0].mxu0
    %v1681 = vadd.f32 %v1433, %v1680
    %v1682 = vpop.f32.mrb[0].mxu0
    %1683 = vmatprep.mubr.bf16.mxu0 %v1395
    %1684 = vmatmul.mubr.bf16.gmra.mrb[0].mxu0 %v1394
    %v1685 = vpop.f32.mrb[0].mxu0
    %v1686 = vadd.f32 %v1433, %v1685
    %v1687 = vpop.f32.mrb[0].mxu0
    %v1688 = vpop.f32.mrb[0].mxu0
    %v1689 = vadd.f32 %v1433, %v1688
    %v1690 = vpop.f32.mrb[0].mxu0
    %1691 = vdwg.mxu0
    %vm1692 = vcmask 261120
    %v1693 = vsel %vm1692, %v1566, 0.0
    %v1694 = vsel %vm1692, %v1569, 0.0
    %v1695 = vsel %vm1692, %v1574, 0.0
    %v1696 = vsel %vm1692, %v1577, 0.0
    %v1697 = vsel %vm1692, %v1582, 0.0
    %v1698 = vsel %vm1692, %v1585, 0.0
    %v1699 = vsel %vm1692, %v1590, 0.0
    %v1700 = vsel %vm1692, %v1593, 0.0
    %v1701 = vsel %vm1692, %v1598, 0.0
    %v1702 = vsel %vm1692, %v1601, 0.0
    %v1703 = vsel %vm1692, %v1606, 0.0
    %v1704 = vsel %vm1692, %v1609, 0.0
    %v1705 = vsel %vm1692, %v1614, 0.0
    %v1706 = vsel %vm1692, %v1617, 0.0
    %v1707 = vsel %vm1692, %v1622, 0.0
    %v1708 = vsel %vm1692, %v1625, 0.0
    %v1709 = vsel %vm1692, %v1630, 0.0
    %v1710 = vsel %vm1692, %v1633, 0.0
    %v1711 = vsel %vm1692, %v1638, 0.0
    %v1712 = vsel %vm1692, %v1641, 0.0
    %v1713 = vsel %vm1692, %v1646, 0.0
    %v1714 = vsel %vm1692, %v1649, 0.0
    %v1715 = vsel %vm1692, %v1654, 0.0
    %v1716 = vsel %vm1692, %v1657, 0.0
    %v1717 = vsel %vm1692, %v1662, 0.0
    %v1718 = vsel %vm1692, %v1665, 0.0
    %v1719 = vsel %vm1692, %v1670, 0.0
    %v1720 = vsel %vm1692, %v1673, 0.0
    %v1721 = vsel %vm1692, %v1678, 0.0
    %v1722 = vsel %vm1692, %v1681, 0.0
    %v1723 = vsel %vm1692, %v1686, 0.0
    %v1724 = vsel %vm1692, %v1689, 0.0
    %v1725 = vpack.c.bf16 %v1694, %v1693
    %v1726 = vpack.c.bf16 %v1696, %v1695
    %v1727 = vpack.c.bf16 %v1698, %v1697
    %v1728 = vpack.c.bf16 %v1700, %v1699
    %v1729 = vpack.c.bf16 %v1702, %v1701
    %v1730 = vpack.c.bf16 %v1704, %v1703
    %v1731 = vpack.c.bf16 %v1706, %v1705
    %v1732 = vpack.c.bf16 %v1708, %v1707
    %v1733 = vpack.c.bf16 %v1710, %v1709
    %v1734 = vpack.c.bf16 %v1712, %v1711
    %v1735 = vpack.c.bf16 %v1714, %v1713
    %v1736 = vpack.c.bf16 %v1716, %v1715
    %v1737 = vpack.c.bf16 %v1718, %v1717
    %v1738 = vpack.c.bf16 %v1720, %v1719
    %v1739 = vpack.c.bf16 %v1722, %v1721
    %v1740 = vpack.c.bf16 %v1724, %v1723
    %v1741 = vld [vmem:[#allocation11] sm:$0xff]
    %v1742 = vld [vmem:[#allocation11 + $0x8] sm:$0xff]
    %v1743 = vld [vmem:[#allocation11 + $0x10] sm:$0xff]
    %v1744 = vld [vmem:[#allocation11 + $0x18] sm:$0xff]
    %v1745 = vld [vmem:[#allocation11 + $0x20] sm:$0xff]
    %v1746 = vld [vmem:[#allocation11 + $0x28] sm:$0xff]
    %v1747 = vld [vmem:[#allocation11 + $0x30] sm:$0xff]
    %v1748 = vld [vmem:[#allocation11 + $0x38] sm:$0xff]
    %v1749 = vld [vmem:[#allocation11 + $0x40] sm:$0xff]
    %v1750 = vld [vmem:[#allocation11 + $0x48] sm:$0xff]
    %v1751 = vld [vmem:[#allocation11 + $0x50] sm:$0xff]
    %v1752 = vld [vmem:[#allocation11 + $0x58] sm:$0xff]
    %v1753 = vld [vmem:[#allocation11 + $0x60] sm:$0xff]
    %v1754 = vld [vmem:[#allocation11 + $0x68] sm:$0xff]
    %v1755 = vld [vmem:[#allocation11 + $0x70] sm:$0xff]
    %v1756 = vld [vmem:[#allocation11 + $0x78] sm:$0xff]
    %v1757 = vld [vmem:[%s10] sm:$0x3]
    %v1759 = vlaneseq
    %v1760 = vshrl.u32 %v1759, 7
    %v1761 = vsub.s32 0, %v1760
    %v1762 = vrot.slane %v1757, %v1761
    %v1763 = vlaneseq
    %v1764 = vshrl.u32 %v1763, 7
    %v1765 = vsub.s32 1, %v1764
    %v1766 = vrot.slane %v1757, %v1765
    %v1785 = vunpack.c.l.b16 %v1741
    %v1786 = vunpack.c.h.b16 %v1741
    %v1787 = vunpack.c.l.b16 %v1742
    %v1788 = vunpack.c.h.b16 %v1742
    %v1789 = vunpack.c.l.b16 %v1743
    %v1790 = vunpack.c.h.b16 %v1743
    %v1791 = vunpack.c.l.b16 %v1744
    %v1792 = vunpack.c.h.b16 %v1744
    %v1793 = vunpack.c.l.b16 %v1745
    %v1794 = vunpack.c.h.b16 %v1745
    %v1795 = vunpack.c.l.b16 %v1746
    %v1796 = vunpack.c.h.b16 %v1746
    %v1797 = vunpack.c.l.b16 %v1747
    %v1798 = vunpack.c.h.b16 %v1747
    %v1799 = vunpack.c.l.b16 %v1748
    %v1800 = vunpack.c.h.b16 %v1748
    %v1801 = vunpack.c.l.b16 %v1749
    %v1802 = vunpack.c.h.b16 %v1749
    %v1803 = vunpack.c.l.b16 %v1750
    %v1804 = vunpack.c.h.b16 %v1750
    %v1805 = vunpack.c.l.b16 %v1751
    %v1806 = vunpack.c.h.b16 %v1751
    %v1807 = vunpack.c.l.b16 %v1752
    %v1808 = vunpack.c.h.b16 %v1752
    %v1809 = vunpack.c.l.b16 %v1753
    %v1810 = vunpack.c.h.b16 %v1753
    %v1811 = vunpack.c.l.b16 %v1754
    %v1812 = vunpack.c.h.b16 %v1754
    %v1813 = vunpack.c.l.b16 %v1755
    %v1814 = vunpack.c.h.b16 %v1755
    %v1815 = vunpack.c.l.b16 %v1756
    %v1816 = vunpack.c.h.b16 %v1756
    %v1817 = vpack.c.b16 %v1787, %v1785
    %v1818 = vpack.c.b16 %v1788, %v1786
    %v1819 = vpack.c.b16 %v1791, %v1789
    %v1820 = vpack.c.b16 %v1792, %v1790
    %v1821 = vpack.c.b16 %v1795, %v1793
    %v1822 = vpack.c.b16 %v1796, %v1794
    %v1823 = vpack.c.b16 %v1799, %v1797
    %v1824 = vpack.c.b16 %v1800, %v1798
    %v1825 = vpack.c.b16 %v1803, %v1801
    %v1826 = vpack.c.b16 %v1804, %v1802
    %v1827 = vpack.c.b16 %v1807, %v1805
    %v1828 = vpack.c.b16 %v1808, %v1806
    %v1829 = vpack.c.b16 %v1811, %v1809
    %v1830 = vpack.c.b16 %v1812, %v1810
    %v1831 = vpack.c.b16 %v1815, %v1813
    %v1832 = vpack.c.b16 %v1816, %v1814
    %1849 = vmatprep.subr.bf16.mxu0 %v1818
    %1850 = vmatpush1.bf16.msra.mxu0 %v1817
    %1851 = vmatprep.subr.bf16.mxu0 %v1820
    %1852 = vmatpush1.bf16.msra.mxu0 %v1819
    %1853 = vmatprep.subr.bf16.mxu0 %v1822
    %1854 = vmatpush1.bf16.msra.mxu0 %v1821
    %1855 = vmatprep.subr.bf16.mxu0 %v1824
    %1856 = vmatpush1.bf16.msra.mxu0 %v1823
    %1857 = vmatprep.subr.bf16.mxu0 %v1826
    %1858 = vmatpush1.bf16.msra.mxu0 %v1825
    %1859 = vmatprep.subr.bf16.mxu0 %v1828
    %1860 = vmatpush1.bf16.msra.mxu0 %v1827
    %1861 = vmatprep.subr.bf16.mxu0 %v1830
    %1862 = vmatpush1.bf16.msra.mxu0 %v1829
    %1863 = vmatprep.subr.bf16.mxu0 %v1832
    %1864 = vmatpush1.bf16.msra.mxu0 %v1831
    %1865 = vmatprep.subr.bf16.mxu0 0
    %1866 = vmatpush1.bf16.msra.mxu0 0
    %1867 = vmatprep.subr.bf16.mxu0 0
    %1868 = vmatpush1.bf16.msra.mxu0 0
    %1869 = vmatprep.subr.bf16.mxu0 0
    %1870 = vmatpush1.bf16.msra.mxu0 0
    %1871 = vmatprep.subr.bf16.mxu0 0
    %1872 = vmatpush1.bf16.msra.mxu0 0
    %1873 = vmatprep.subr.bf16.mxu0 0
    %1874 = vmatpush1.bf16.msra.mxu0 0
    %1875 = vmatprep.subr.bf16.mxu0 0
    %1876 = vmatpush1.bf16.msra.mxu0 0
    %1877 = vmatprep.subr.bf16.mxu0 0
    %1878 = vmatpush1.bf16.msra.mxu0 0
    %1879 = vmatprep.subr.bf16.mxu0 0
    %1880 = vmatpush1.bf16.msra.mxu0 0
    %1881 = vmatprep.mubr.bf16.mxu0 0
    %1882 = vmatmul.mubr.bf16.gmra.mrb[0].mxu0 %v1725
    %v1883 = vpop.f32.mrb[0].mxu0
    %v1884 = vadd.f32 %v1762, %v1883
    %v1885 = vpop.f32.mrb[0].mxu0
    %v1886 = vadd.f32 %v1766, %v1885
    %v1887 = vpop.f32.mrb[0].mxu0
    %v1888 = vadd.f32 %v1762, %v1887
    %v1889 = vpop.f32.mrb[0].mxu0
    %v1890 = vadd.f32 %v1766, %v1889
    %1891 = vmatprep.mubr.bf16.mxu0 0
    %1892 = vmatmul.mubr.bf16.gmra.mrb[0].mxu0 %v1726
    %v1893 = vpop.f32.mrb[0].mxu0
    %v1894 = vadd.f32 %v1762, %v1893
    %v1895 = vpop.f32.mrb[0].mxu0
    %v1896 = vadd.f32 %v1766, %v1895
    %v1897 = vpop.f32.mrb[0].mxu0
    %v1898 = vadd.f32 %v1762, %v1897
    %v1899 = vpop.f32.mrb[0].mxu0
    %v1900 = vadd.f32 %v1766, %v1899
    %1901 = vmatprep.mubr.bf16.mxu0 0
    %1902 = vmatmul.mubr.bf16.gmra.mrb[0].mxu0 %v1727
    %v1903 = vpop.f32.mrb[0].mxu0
    %v1904 = vadd.f32 %v1762, %v1903
    %v1905 = vpop.f32.mrb[0].mxu0
    %v1906 = vadd.f32 %v1766, %v1905
    %v1907 = vpop.f32.mrb[0].mxu0
    %v1908 = vadd.f32 %v1762, %v1907
    %v1909 = vpop.f32.mrb[0].mxu0
    %v1910 = vadd.f32 %v1766, %v1909
    %1911 = vmatprep.mubr.bf16.mxu0 0
    %1912 = vmatmul.mubr.bf16.gmra.mrb[0].mxu0 %v1728
    %v1913 = vpop.f32.mrb[0].mxu0
    %v1914 = vadd.f32 %v1762, %v1913
    %v1915 = vpop.f32.mrb[0].mxu0
    %v1916 = vadd.f32 %v1766, %v1915
    %v1917 = vpop.f32.mrb[0].mxu0
    %v1918 = vadd.f32 %v1762, %v1917
    %v1919 = vpop.f32.mrb[0].mxu0
    %v1920 = vadd.f32 %v1766, %v1919
    %1921 = vmatprep.mubr.bf16.mxu0 0
    %1922 = vmatmul.mubr.bf16.gmra.mrb[0].mxu0 %v1729
    %v1923 = vpop.f32.mrb[0].mxu0
    %v1924 = vadd.f32 %v1762, %v1923
    %v1925 = vpop.f32.mrb[0].mxu0
    %v1926 = vadd.f32 %v1766, %v1925
    %v1927 = vpop.f32.mrb[0].mxu0
    %v1928 = vadd.f32 %v1762, %v1927
    %v1929 = vpop.f32.mrb[0].mxu0
    %v1930 = vadd.f32 %v1766, %v1929
    %1931 = vmatprep.mubr.bf16.mxu0 0
    %1932 = vmatmul.mubr.bf16.gmra.mrb[0].mxu0 %v1730
    %v1933 = vpop.f32.mrb[0].mxu0
    %v1934 = vadd.f32 %v1762, %v1933
    %v1935 = vpop.f32.mrb[0].mxu0
    %v1936 = vadd.f32 %v1766, %v1935
    %v1937 = vpop.f32.mrb[0].mxu0
    %v1938 = vadd.f32 %v1762, %v1937
    %v1939 = vpop.f32.mrb[0].mxu0
    %v1940 = vadd.f32 %v1766, %v1939
    %1941 = vmatprep.mubr.bf16.mxu0 0
    %1942 = vmatmul.mubr.bf16.gmra.mrb[0].mxu0 %v1731
    %v1943 = vpop.f32.mrb[0].mxu0
    %v1944 = vadd.f32 %v1762, %v1943
    %v1945 = vpop.f32.mrb[0].mxu0
    %v1946 = vadd.f32 %v1766, %v1945
    %v1947 = vpop.f32.mrb[0].mxu0
    %v1948 = vadd.f32 %v1762, %v1947
    %v1949 = vpop.f32.mrb[0].mxu0
    %v1950 = vadd.f32 %v1766, %v1949
    %1951 = vmatprep.mubr.bf16.mxu0 0
    %1952 = vmatmul.mubr.bf16.gmra.mrb[0].mxu0 %v1732
    %v1953 = vpop.f32.mrb[0].mxu0
    %v1954 = vadd.f32 %v1762, %v1953
    %v1955 = vpop.f32.mrb[0].mxu0
    %v1956 = vadd.f32 %v1766, %v1955
    %v1957 = vpop.f32.mrb[0].mxu0
    %v1958 = vadd.f32 %v1762, %v1957
    %v1959 = vpop.f32.mrb[0].mxu0
    %v1960 = vadd.f32 %v1766, %v1959
    %1961 = vmatprep.mubr.bf16.mxu0 0
    %1962 = vmatmul.mubr.bf16.gmra.mrb[0].mxu0 %v1733
    %v1963 = vpop.f32.mrb[0].mxu0
    %v1964 = vadd.f32 %v1762, %v1963
    %v1965 = vpop.f32.mrb[0].mxu0
    %v1966 = vadd.f32 %v1766, %v1965
    %v1967 = vpop.f32.mrb[0].mxu0
    %v1968 = vadd.f32 %v1762, %v1967
    %v1969 = vpop.f32.mrb[0].mxu0
    %v1970 = vadd.f32 %v1766, %v1969
    %1971 = vmatprep.mubr.bf16.mxu0 0
    %1972 = vmatmul.mubr.bf16.gmra.mrb[0].mxu0 %v1734
    %v1973 = vpop.f32.mrb[0].mxu0
    %v1974 = vadd.f32 %v1762, %v1973
    %v1975 = vpop.f32.mrb[0].mxu0
    %v1976 = vadd.f32 %v1766, %v1975
    %v1977 = vpop.f32.mrb[0].mxu0
    %v1978 = vadd.f32 %v1762, %v1977
    %v1979 = vpop.f32.mrb[0].mxu0
    %v1980 = vadd.f32 %v1766, %v1979
    %1981 = vmatprep.mubr.bf16.mxu0 0
    %1982 = vmatmul.mubr.bf16.gmra.mrb[0].mxu0 %v1735
    %v1983 = vpop.f32.mrb[0].mxu0
    %v1984 = vadd.f32 %v1762, %v1983
    %v1985 = vpop.f32.mrb[0].mxu0
    %v1986 = vadd.f32 %v1766, %v1985
    %v1987 = vpop.f32.mrb[0].mxu0
    %v1988 = vadd.f32 %v1762, %v1987
    %v1989 = vpop.f32.mrb[0].mxu0
    %v1990 = vadd.f32 %v1766, %v1989
    %1991 = vmatprep.mubr.bf16.mxu0 0
    %1992 = vmatmul.mubr.bf16.gmra.mrb[0].mxu0 %v1736
    %v1993 = vpop.f32.mrb[0].mxu0
    %v1994 = vadd.f32 %v1762, %v1993
    %v1995 = vpop.f32.mrb[0].mxu0
    %v1996 = vadd.f32 %v1766, %v1995
    %v1997 = vpop.f32.mrb[0].mxu0
    %v1998 = vadd.f32 %v1762, %v1997
    %v1999 = vpop.f32.mrb[0].mxu0
    %v2000 = vadd.f32 %v1766, %v1999
    %2001 = vmatprep.mubr.bf16.mxu0 0
    %2002 = vmatmul.mubr.bf16.gmra.mrb[0].mxu0 %v1737
    %v2003 = vpop.f32.mrb[0].mxu0
    %v2004 = vadd.f32 %v1762, %v2003
    %v2005 = vpop.f32.mrb[0].mxu0
    %v2006 = vadd.f32 %v1766, %v2005
    %v2007 = vpop.f32.mrb[0].mxu0
    %v2008 = vadd.f32 %v1762, %v2007
    %v2009 = vpop.f32.mrb[0].mxu0
    %v2010 = vadd.f32 %v1766, %v2009
    %2011 = vmatprep.mubr.bf16.mxu0 0
    %2012 = vmatmul.mubr.bf16.gmra.mrb[0].mxu0 %v1738
    %v2013 = vpop.f32.mrb[0].mxu0
    %v2014 = vadd.f32 %v1762, %v2013
    %v2015 = vpop.f32.mrb[0].mxu0
    %v2016 = vadd.f32 %v1766, %v2015
    %v2017 = vpop.f32.mrb[0].mxu0
    %v2018 = vadd.f32 %v1762, %v2017
    %v2019 = vpop.f32.mrb[0].mxu0
    %v2020 = vadd.f32 %v1766, %v2019
    %2021 = vmatprep.mubr.bf16.mxu0 0
    %2022 = vmatmul.mubr.bf16.gmra.mrb[0].mxu0 %v1739
    %v2023 = vpop.f32.mrb[0].mxu0
    %v2024 = vadd.f32 %v1762, %v2023
    %v2025 = vpop.f32.mrb[0].mxu0
    %v2026 = vadd.f32 %v1766, %v2025
    %v2027 = vpop.f32.mrb[0].mxu0
    %v2028 = vadd.f32 %v1762, %v2027
    %v2029 = vpop.f32.mrb[0].mxu0
    %v2030 = vadd.f32 %v1766, %v2029
    %2031 = vmatprep.mubr.bf16.mxu0 0
    %2032 = vmatmul.mubr.bf16.gmra.mrb[0].mxu0 %v1740
    %v2033 = vpop.f32.mrb[0].mxu0
    %v2034 = vadd.f32 %v1762, %v2033
    %v2035 = vpop.f32.mrb[0].mxu0
    %v2036 = vadd.f32 %v1766, %v2035
    %v2037 = vpop.f32.mrb[0].mxu0
    %v2038 = vadd.f32 %v1762, %v2037
    %v2039 = vpop.f32.mrb[0].mxu0
    %v2040 = vadd.f32 %v1766, %v2039
    %2041 = vdwg.mxu0
    %v2042 = vmax.f32 %v1884, 0.0
    %v2043 = vmax.f32 %v1886, 0.0
    %v2044 = vmax.f32 %v1888, 0.0
    %v2045 = vmax.f32 %v1890, 0.0
    %v2046 = vmax.f32 %v1894, 0.0
    %v2047 = vmax.f32 %v1896, 0.0
    %v2048 = vmax.f32 %v1898, 0.0
    %v2049 = vmax.f32 %v1900, 0.0
    %v2050 = vmax.f32 %v1904, 0.0
    %v2051 = vmax.f32 %v1906, 0.0
    %v2052 = vmax.f32 %v1908, 0.0
    %v2053 = vmax.f32 %v1910, 0.0
    %v2054 = vmax.f32 %v1914, 0.0
    %v2055 = vmax.f32 %v1916, 0.0
    %v2056 = vmax.f32 %v1918, 0.0
    %v2057 = vmax.f32 %v1920, 0.0
    %v2058 = vmax.f32 %v1924, 0.0
    %v2059 = vmax.f32 %v1926, 0.0
    %v2060 = vmax.f32 %v1928, 0.0
    %v2061 = vmax.f32 %v1930, 0.0
    %v2062 = vmax.f32 %v1934, 0.0
    %v2063 = vmax.f32 %v1936, 0.0
    %v2064 = vmax.f32 %v1938, 0.0
    %v2065 = vmax.f32 %v1940, 0.0
    %v2066 = vmax.f32 %v1944, 0.0
    %v2067 = vmax.f32 %v1946, 0.0
    %v2068 = vmax.f32 %v1948, 0.0
    %v2069 = vmax.f32 %v1950, 0.0
    %v2070 = vmax.f32 %v1954, 0.0
    %v2071 = vmax.f32 %v1956, 0.0
    %v2072 = vmax.f32 %v1958, 0.0
    %v2073 = vmax.f32 %v1960, 0.0
    %v2074 = vmax.f32 %v1964, 0.0
    %v2075 = vmax.f32 %v1966, 0.0
    %v2076 = vmax.f32 %v1968, 0.0
    %v2077 = vmax.f32 %v1970, 0.0
    %v2078 = vmax.f32 %v1974, 0.0
    %v2079 = vmax.f32 %v1976, 0.0
    %v2080 = vmax.f32 %v1978, 0.0
    %v2081 = vmax.f32 %v1980, 0.0
    %v2082 = vmax.f32 %v1984, 0.0
    %v2083 = vmax.f32 %v1986, 0.0
    %v2084 = vmax.f32 %v1988, 0.0
    %v2085 = vmax.f32 %v1990, 0.0
    %v2086 = vmax.f32 %v1994, 0.0
    %v2087 = vmax.f32 %v1996, 0.0
    %v2088 = vmax.f32 %v1998, 0.0
    %v2089 = vmax.f32 %v2000, 0.0
    %v2090 = vmax.f32 %v2004, 0.0
    %v2091 = vmax.f32 %v2006, 0.0
    %v2092 = vmax.f32 %v2008, 0.0
    %v2093 = vmax.f32 %v2010, 0.0
    %v2094 = vmax.f32 %v2014, 0.0
    %v2095 = vmax.f32 %v2016, 0.0
    %v2096 = vmax.f32 %v2018, 0.0
    %v2097 = vmax.f32 %v2020, 0.0
    %v2098 = vmax.f32 %v2024, 0.0
    %v2099 = vmax.f32 %v2026, 0.0
    %v2100 = vmax.f32 %v2028, 0.0
    %v2101 = vmax.f32 %v2030, 0.0
    %v2102 = vmax.f32 %v2034, 0.0
    %v2103 = vmax.f32 %v2036, 0.0
    %v2104 = vmax.f32 %v2038, 0.0
    %v2105 = vmax.f32 %v2040, 0.0
    %v2106 = vpack.c.bf16 %v2044, %v2042
    %v2107 = vpack.c.bf16 %v2045, %v2043
    %v2108 = vpack.c.bf16 %v2048, %v2046
    %v2109 = vpack.c.bf16 %v2049, %v2047
    %v2110 = vpack.c.bf16 %v2052, %v2050
    %v2111 = vpack.c.bf16 %v2053, %v2051
    %v2112 = vpack.c.bf16 %v2056, %v2054
    %v2113 = vpack.c.bf16 %v2057, %v2055
    %v2114 = vpack.c.bf16 %v2060, %v2058
    %v2115 = vpack.c.bf16 %v2061, %v2059
    %v2116 = vpack.c.bf16 %v2064, %v2062
    %v2117 = vpack.c.bf16 %v2065, %v2063
    %v2118 = vpack.c.bf16 %v2068, %v2066
    %v2119 = vpack.c.bf16 %v2069, %v2067
    %v2120 = vpack.c.bf16 %v2072, %v2070
    %v2121 = vpack.c.bf16 %v2073, %v2071
    %v2122 = vpack.c.bf16 %v2076, %v2074
    %v2123 = vpack.c.bf16 %v2077, %v2075
    %v2124 = vpack.c.bf16 %v2080, %v2078
    %v2125 = vpack.c.bf16 %v2081, %v2079
    %v2126 = vpack.c.bf16 %v2084, %v2082
    %v2127 = vpack.c.bf16 %v2085, %v2083
    %v2128 = vpack.c.bf16 %v2088, %v2086
    %v2129 = vpack.c.bf16 %v2089, %v2087
    %v2130 = vpack.c.bf16 %v2092, %v2090
    %v2131 = vpack.c.bf16 %v2093, %v2091
    %v2132 = vpack.c.bf16 %v2096, %v2094
    %v2133 = vpack.c.bf16 %v2097, %v2095
    %v2134 = vpack.c.bf16 %v2100, %v2098
    %v2135 = vpack.c.bf16 %v2101, %v2099
    %v2136 = vpack.c.bf16 %v2104, %v2102
    %v2137 = vpack.c.bf16 %v2105, %v2103
    %v2138 = vld [vmem:[#allocation13] sm:$0xf]
    %v2139 = vld [vmem:[#allocation13 + $0x4] sm:$0xf]
    %v2140 = vld [vmem:[#allocation13 + $0x8] sm:$0xf]
    %v2141 = vld [vmem:[#allocation13 + $0xc] sm:$0xf]
    %v2142 = vld [vmem:[#allocation13 + $0x10] sm:$0xf]
    %v2143 = vld [vmem:[#allocation13 + $0x14] sm:$0xf]
    %v2144 = vld [vmem:[#allocation13 + $0x18] sm:$0xf]
    %v2145 = vld [vmem:[#allocation13 + $0x1c] sm:$0xf]
    %v2146 = vld [vmem:[#allocation13 + $0x20] sm:$0xf]
    %v2147 = vld [vmem:[#allocation13 + $0x24] sm:$0xf]
    %v2148 = vld [vmem:[#allocation13 + $0x28] sm:$0xf]
    %v2149 = vld [vmem:[#allocation13 + $0x2c] sm:$0xf]
    %v2150 = vld [vmem:[#allocation13 + $0x30] sm:$0xf]
    %v2151 = vld [vmem:[#allocation13 + $0x34] sm:$0xf]
    %v2152 = vld [vmem:[#allocation13 + $0x38] sm:$0xf]
    %v2153 = vld [vmem:[#allocation13 + $0x3c] sm:$0xf]
    %v2154 = vld [vmem:[#allocation13 + $0x40] sm:$0xf]
    %v2155 = vld [vmem:[#allocation13 + $0x44] sm:$0xf]
    %v2156 = vld [vmem:[#allocation13 + $0x48] sm:$0xf]
    %v2157 = vld [vmem:[#allocation13 + $0x4c] sm:$0xf]
    %v2158 = vld [vmem:[#allocation13 + $0x50] sm:$0xf]
    %v2159 = vld [vmem:[#allocation13 + $0x54] sm:$0xf]
    %v2160 = vld [vmem:[#allocation13 + $0x58] sm:$0xf]
    %v2161 = vld [vmem:[#allocation13 + $0x5c] sm:$0xf]
    %v2162 = vld [vmem:[#allocation13 + $0x60] sm:$0xf]
    %v2163 = vld [vmem:[#allocation13 + $0x64] sm:$0xf]
    %v2164 = vld [vmem:[#allocation13 + $0x68] sm:$0xf]
    %v2165 = vld [vmem:[#allocation13 + $0x6c] sm:$0xf]
    %v2166 = vld [vmem:[#allocation13 + $0x70] sm:$0xf]
    %v2167 = vld [vmem:[#allocation13 + $0x74] sm:$0xf]
    %v2168 = vld [vmem:[#allocation13 + $0x78] sm:$0xf]
    %v2169 = vld [vmem:[#allocation13 + $0x7c] sm:$0xf]
    %v2170 = vld [vmem:[%s12] sm:$0x1]
    %v2172 = vlaneseq
    %v2173 = vshrl.u32 %v2172, 7
    %v2174 = vsub.s32 0, %v2173
    %v2175 = vrot.slane %v2170, %v2174
    %v2209 = vunpack.c.l.b16 %v2138
    %v2210 = vunpack.c.l.b16 %v2139
    %v2211 = vunpack.c.l.b16 %v2140
    %v2212 = vunpack.c.l.b16 %v2141
    %v2213 = vunpack.c.l.b16 %v2142
    %v2214 = vunpack.c.l.b16 %v2143
    %v2215 = vunpack.c.l.b16 %v2144
    %v2216 = vunpack.c.l.b16 %v2145
    %v2217 = vunpack.c.l.b16 %v2146
    %v2218 = vunpack.c.l.b16 %v2147
    %v2219 = vunpack.c.l.b16 %v2148
    %v2220 = vunpack.c.l.b16 %v2149
    %v2221 = vunpack.c.l.b16 %v2150
    %v2222 = vunpack.c.l.b16 %v2151
    %v2223 = vunpack.c.l.b16 %v2152
    %v2224 = vunpack.c.l.b16 %v2153
    %v2225 = vunpack.c.l.b16 %v2154
    %v2226 = vunpack.c.l.b16 %v2155
    %v2227 = vunpack.c.l.b16 %v2156
    %v2228 = vunpack.c.l.b16 %v2157
    %v2229 = vunpack.c.l.b16 %v2158
    %v2230 = vunpack.c.l.b16 %v2159
    %v2231 = vunpack.c.l.b16 %v2160
    %v2232 = vunpack.c.l.b16 %v2161
    %v2233 = vunpack.c.l.b16 %v2162
    %v2234 = vunpack.c.l.b16 %v2163
    %v2235 = vunpack.c.l.b16 %v2164
    %v2236 = vunpack.c.l.b16 %v2165
    %v2237 = vunpack.c.l.b16 %v2166
    %v2238 = vunpack.c.l.b16 %v2167
    %v2239 = vunpack.c.l.b16 %v2168
    %v2240 = vunpack.c.l.b16 %v2169
    %v2241 = vpack.c.b16 %v2210, %v2209
    %v2242 = vpack.c.b16 %v2212, %v2211
    %v2243 = vpack.c.b16 %v2214, %v2213
    %v2244 = vpack.c.b16 %v2216, %v2215
    %v2245 = vpack.c.b16 %v2218, %v2217
    %v2246 = vpack.c.b16 %v2220, %v2219
    %v2247 = vpack.c.b16 %v2222, %v2221
    %v2248 = vpack.c.b16 %v2224, %v2223
    %v2249 = vpack.c.b16 %v2226, %v2225
    %v2250 = vpack.c.b16 %v2228, %v2227
    %v2251 = vpack.c.b16 %v2230, %v2229
    %v2252 = vpack.c.b16 %v2232, %v2231
    %v2253 = vpack.c.b16 %v2234, %v2233
    %v2254 = vpack.c.b16 %v2236, %v2235
    %v2255 = vpack.c.b16 %v2238, %v2237
    %v2256 = vpack.c.b16 %v2240, %v2239
    %2273 = vmatprep.subr.bf16.mxu0 0
    %2274 = vmatpush1.bf16.msra.mxu0 %v2241
    %2275 = vmatprep.subr.bf16.mxu0 0
    %2276 = vmatpush1.bf16.msra.mxu0 %v2242
    %2277 = vmatprep.subr.bf16.mxu0 0
    %2278 = vmatpush1.bf16.msra.mxu0 %v2243
    %2279 = vmatprep.subr.bf16.mxu0 0
    %2280 = vmatpush1.bf16.msra.mxu0 %v2244
    %2281 = vmatprep.subr.bf16.mxu0 0
    %2282 = vmatpush1.bf16.msra.mxu0 %v2245
    %2283 = vmatprep.subr.bf16.mxu0 0
    %2284 = vmatpush1.bf16.msra.mxu0 %v2246
    %2285 = vmatprep.subr.bf16.mxu0 0
    %2286 = vmatpush1.bf16.msra.mxu0 %v2247
    %2287 = vmatprep.subr.bf16.mxu0 0
    %2288 = vmatpush1.bf16.msra.mxu0 %v2248
    %2289 = vmatprep.subr.bf16.mxu0 0
    %2290 = vmatpush1.bf16.msra.mxu0 %v2249
    %2291 = vmatprep.subr.bf16.mxu0 0
    %2292 = vmatpush1.bf16.msra.mxu0 %v2250
    %2293 = vmatprep.subr.bf16.mxu0 0
    %2294 = vmatpush1.bf16.msra.mxu0 %v2251
    %2295 = vmatprep.subr.bf16.mxu0 0
    %2296 = vmatpush1.bf16.msra.mxu0 %v2252
    %2297 = vmatprep.subr.bf16.mxu0 0
    %2298 = vmatpush1.bf16.msra.mxu0 %v2253
    %2299 = vmatprep.subr.bf16.mxu0 0
    %2300 = vmatpush1.bf16.msra.mxu0 %v2254
    %2301 = vmatprep.subr.bf16.mxu0 0
    %2302 = vmatpush1.bf16.msra.mxu0 %v2255
    %2303 = vmatprep.subr.bf16.mxu0 0
    %2304 = vmatpush1.bf16.msra.mxu0 %v2256
    %2305 = vmatprep.mubr.bf16.mxu0 %v2107
    %2306 = vmatmul.mubr.bf16.gmra.mrb[0].mxu0 %v2106
    %v2307 = vpop.f32.mrb[0].mxu0
    %v2308 = vadd.f32 %v2175, %v2307
    %v2309 = vpop.f32.mrb[0].mxu0
    %v2310 = vpop.f32.mrb[0].mxu0
    %v2311 = vadd.f32 %v2175, %v2310
    %v2312 = vpop.f32.mrb[0].mxu0
    %2313 = vmatprep.mubr.bf16.mxu0 %v2109
    %2314 = vmatmul.mubr.bf16.gmra.mrb[0].mxu0 %v2108
    %v2315 = vpop.f32.mrb[0].mxu0
    %v2316 = vadd.f32 %v2175, %v2315
    %v2317 = vpop.f32.mrb[0].mxu0
    %v2318 = vpop.f32.mrb[0].mxu0
    %v2319 = vadd.f32 %v2175, %v2318
    %v2320 = vpop.f32.mrb[0].mxu0
    %2321 = vmatprep.mubr.bf16.mxu0 %v2111
    %2322 = vmatmul.mubr.bf16.gmra.mrb[0].mxu0 %v2110
    %v2323 = vpop.f32.mrb[0].mxu0
    %v2324 = vadd.f32 %v2175, %v2323
    %v2325 = vpop.f32.mrb[0].mxu0
    %v2326 = vpop.f32.mrb[0].mxu0
    %v2327 = vadd.f32 %v2175, %v2326
    %v2328 = vpop.f32.mrb[0].mxu0
    %2329 = vmatprep.mubr.bf16.mxu0 %v2113
    %2330 = vmatmul.mubr.bf16.gmra.mrb[0].mxu0 %v2112
    %v2331 = vpop.f32.mrb[0].mxu0
    %v2332 = vadd.f32 %v2175, %v2331
    %v2333 = vpop.f32.mrb[0].mxu0
    %v2334 = vpop.f32.mrb[0].mxu0
    %v2335 = vadd.f32 %v2175, %v2334
    %v2336 = vpop.f32.mrb[0].mxu0
    %2337 = vmatprep.mubr.bf16.mxu0 %v2115
    %2338 = vmatmul.mubr.bf16.gmra.mrb[0].mxu0 %v2114
    %v2339 = vpop.f32.mrb[0].mxu0
    %v2340 = vadd.f32 %v2175, %v2339
    %v2341 = vpop.f32.mrb[0].mxu0
    %v2342 = vpop.f32.mrb[0].mxu0
    %v2343 = vadd.f32 %v2175, %v2342
    %v2344 = vpop.f32.mrb[0].mxu0
    %2345 = vmatprep.mubr.bf16.mxu0 %v2117
    %2346 = vmatmul.mubr.bf16.gmra.mrb[0].mxu0 %v2116
    %v2347 = vpop.f32.mrb[0].mxu0
    %v2348 = vadd.f32 %v2175, %v2347
    %v2349 = vpop.f32.mrb[0].mxu0
    %v2350 = vpop.f32.mrb[0].mxu0
    %v2351 = vadd.f32 %v2175, %v2350
    %v2352 = vpop.f32.mrb[0].mxu0
    %2353 = vmatprep.mubr.bf16.mxu0 %v2119
    %2354 = vmatmul.mubr.bf16.gmra.mrb[0].mxu0 %v2118
    %v2355 = vpop.f32.mrb[0].mxu0
    %v2356 = vadd.f32 %v2175, %v2355
    %v2357 = vpop.f32.mrb[0].mxu0
    %v2358 = vpop.f32.mrb[0].mxu0
    %v2359 = vadd.f32 %v2175, %v2358
    %v2360 = vpop.f32.mrb[0].mxu0
    %2361 = vmatprep.mubr.bf16.mxu0 %v2121
    %2362 = vmatmul.mubr.bf16.gmra.mrb[0].mxu0 %v2120
    %v2363 = vpop.f32.mrb[0].mxu0
    %v2364 = vadd.f32 %v2175, %v2363
    %v2365 = vpop.f32.mrb[0].mxu0
    %v2366 = vpop.f32.mrb[0].mxu0
    %v2367 = vadd.f32 %v2175, %v2366
    %v2368 = vpop.f32.mrb[0].mxu0
    %2369 = vmatprep.mubr.bf16.mxu0 %v2123
    %2370 = vmatmul.mubr.bf16.gmra.mrb[0].mxu0 %v2122
    %v2371 = vpop.f32.mrb[0].mxu0
    %v2372 = vadd.f32 %v2175, %v2371
    %v2373 = vpop.f32.mrb[0].mxu0
    %v2374 = vpop.f32.mrb[0].mxu0
    %v2375 = vadd.f32 %v2175, %v2374
    %v2376 = vpop.f32.mrb[0].mxu0
    %2377 = vmatprep.mubr.bf16.mxu0 %v2125
    %2378 = vmatmul.mubr.bf16.gmra.mrb[0].mxu0 %v2124
    %v2379 = vpop.f32.mrb[0].mxu0
    %v2380 = vadd.f32 %v2175, %v2379
    %v2381 = vpop.f32.mrb[0].mxu0
    %v2382 = vpop.f32.mrb[0].mxu0
    %v2383 = vadd.f32 %v2175, %v2382
    %v2384 = vpop.f32.mrb[0].mxu0
    %2385 = vmatprep.mubr.bf16.mxu0 %v2127
    %2386 = vmatmul.mubr.bf16.gmra.mrb[0].mxu0 %v2126
    %v2387 = vpop.f32.mrb[0].mxu0
    %v2388 = vadd.f32 %v2175, %v2387
    %v2389 = vpop.f32.mrb[0].mxu0
    %v2390 = vpop.f32.mrb[0].mxu0
    %v2391 = vadd.f32 %v2175, %v2390
    %v2392 = vpop.f32.mrb[0].mxu0
    %2393 = vmatprep.mubr.bf16.mxu0 %v2129
    %2394 = vmatmul.mubr.bf16.gmra.mrb[0].mxu0 %v2128
    %v2395 = vpop.f32.mrb[0].mxu0
    %v2396 = vadd.f32 %v2175, %v2395
    %v2397 = vpop.f32.mrb[0].mxu0
    %v2398 = vpop.f32.mrb[0].mxu0
    %v2399 = vadd.f32 %v2175, %v2398
    %v2400 = vpop.f32.mrb[0].mxu0
    %2401 = vmatprep.mubr.bf16.mxu0 %v2131
    %2402 = vmatmul.mubr.bf16.gmra.mrb[0].mxu0 %v2130
    %v2403 = vpop.f32.mrb[0].mxu0
    %v2404 = vadd.f32 %v2175, %v2403
    %v2405 = vpop.f32.mrb[0].mxu0
    %v2406 = vpop.f32.mrb[0].mxu0
    %v2407 = vadd.f32 %v2175, %v2406
    %v2408 = vpop.f32.mrb[0].mxu0
    %2409 = vmatprep.mubr.bf16.mxu0 %v2133
    %2410 = vmatmul.mubr.bf16.gmra.mrb[0].mxu0 %v2132
    %v2411 = vpop.f32.mrb[0].mxu0
    %v2412 = vadd.f32 %v2175, %v2411
    %v2413 = vpop.f32.mrb[0].mxu0
    %v2414 = vpop.f32.mrb[0].mxu0
    %v2415 = vadd.f32 %v2175, %v2414
    %v2416 = vpop.f32.mrb[0].mxu0
    %2417 = vmatprep.mubr.bf16.mxu0 %v2135
    %2418 = vmatmul.mubr.bf16.gmra.mrb[0].mxu0 %v2134
    %v2419 = vpop.f32.mrb[0].mxu0
    %v2420 = vadd.f32 %v2175, %v2419
    %v2421 = vpop.f32.mrb[0].mxu0
    %v2422 = vpop.f32.mrb[0].mxu0
    %v2423 = vadd.f32 %v2175, %v2422
    %v2424 = vpop.f32.mrb[0].mxu0
    %2425 = vmatprep.mubr.bf16.mxu0 %v2137
    %2426 = vmatmul.mubr.bf16.gmra.mrb[0].mxu0 %v2136
    %v2427 = vpop.f32.mrb[0].mxu0
    %v2428 = vadd.f32 %v2175, %v2427
    %v2429 = vpop.f32.mrb[0].mxu0
    %v2430 = vpop.f32.mrb[0].mxu0
    %v2431 = vadd.f32 %v2175, %v2430
    %v2432 = vpop.f32.mrb[0].mxu0
    %2433 = vdwg.mxu0
    %v2434 = vmax.f32 %v2308, 0.0
    %v2435 = vmax.f32 %v2311, 0.0
    %v2436 = vmax.f32 %v2316, 0.0
    %v2437 = vmax.f32 %v2319, 0.0
    %v2438 = vmax.f32 %v2324, 0.0
    %v2439 = vmax.f32 %v2327, 0.0
    %v2440 = vmax.f32 %v2332, 0.0
    %v2441 = vmax.f32 %v2335, 0.0
    %v2442 = vmax.f32 %v2340, 0.0
    %v2443 = vmax.f32 %v2343, 0.0
    %v2444 = vmax.f32 %v2348, 0.0
    %v2445 = vmax.f32 %v2351, 0.0
    %v2446 = vmax.f32 %v2356, 0.0
    %v2447 = vmax.f32 %v2359, 0.0
    %v2448 = vmax.f32 %v2364, 0.0
    %v2449 = vmax.f32 %v2367, 0.0
    %v2450 = vmax.f32 %v2372, 0.0
    %v2451 = vmax.f32 %v2375, 0.0
    %v2452 = vmax.f32 %v2380, 0.0
    %v2453 = vmax.f32 %v2383, 0.0
    %v2454 = vmax.f32 %v2388, 0.0
    %v2455 = vmax.f32 %v2391, 0.0
    %v2456 = vmax.f32 %v2396, 0.0
    %v2457 = vmax.f32 %v2399, 0.0
    %v2458 = vmax.f32 %v2404, 0.0
    %v2459 = vmax.f32 %v2407, 0.0
    %v2460 = vmax.f32 %v2412, 0.0
    %v2461 = vmax.f32 %v2415, 0.0
    %v2462 = vmax.f32 %v2420, 0.0
    %v2463 = vmax.f32 %v2423, 0.0
    %v2464 = vmax.f32 %v2428, 0.0
    %v2465 = vmax.f32 %v2431, 0.0
    %v2466 = vpack.c.bf16 %v2435, %v2434
    %v2467 = vpack.c.bf16 %v2437, %v2436
    %v2468 = vpack.c.bf16 %v2439, %v2438
    %v2469 = vpack.c.bf16 %v2441, %v2440
    %v2470 = vpack.c.bf16 %v2443, %v2442
    %v2471 = vpack.c.bf16 %v2445, %v2444
    %v2472 = vpack.c.bf16 %v2447, %v2446
    %v2473 = vpack.c.bf16 %v2449, %v2448
    %v2474 = vpack.c.bf16 %v2451, %v2450
    %v2475 = vpack.c.bf16 %v2453, %v2452
    %v2476 = vpack.c.bf16 %v2455, %v2454
    %v2477 = vpack.c.bf16 %v2457, %v2456
    %v2478 = vpack.c.bf16 %v2459, %v2458
    %v2479 = vpack.c.bf16 %v2461, %v2460
    %v2480 = vpack.c.bf16 %v2463, %v2462
    %v2481 = vpack.c.bf16 %v2465, %v2464
    %v2482 = vld [vmem:[#allocation14] sm:$0xf]
    %v2483 = vld [vmem:[#allocation14 + $0x4] sm:$0xf]
    %v2484 = vld [vmem:[#allocation14 + $0x8] sm:$0xf]
    %v2485 = vld [vmem:[#allocation14 + $0xc] sm:$0xf]
    %v2486 = vld [vmem:[#allocation14 + $0x10] sm:$0xf]
    %v2487 = vld [vmem:[#allocation14 + $0x14] sm:$0xf]
    %v2488 = vld [vmem:[#allocation14 + $0x18] sm:$0xf]
    %v2489 = vld [vmem:[#allocation14 + $0x1c] sm:$0xf]
    %v2490 = vld [vmem:[#allocation14 + $0x20] sm:$0xf]
    %v2491 = vld [vmem:[#allocation14 + $0x24] sm:$0xf]
    %v2492 = vld [vmem:[#allocation14 + $0x28] sm:$0xf]
    %v2493 = vld [vmem:[#allocation14 + $0x2c] sm:$0xf]
    %v2494 = vld [vmem:[#allocation14 + $0x30] sm:$0xf]
    %v2495 = vld [vmem:[#allocation14 + $0x34] sm:$0xf]
    %v2496 = vld [vmem:[#allocation14 + $0x38] sm:$0xf]
    %v2497 = vld [vmem:[#allocation14 + $0x3c] sm:$0xf]
    %v2498 = vld [vmem:[%s14] sm:$0x1]
    %v2500 = vlaneseq
    %v2501 = vshrl.u32 %v2500, 7
    %v2502 = vsub.s32 0, %v2501
    %v2503 = vrot.slane %v2498, %v2502
    %v2521 = vunpack.c.l.b16 %v2482
    %v2522 = vunpack.c.l.b16 %v2483
    %v2523 = vunpack.c.l.b16 %v2484
    %v2524 = vunpack.c.l.b16 %v2485
    %v2525 = vunpack.c.l.b16 %v2486
    %v2526 = vunpack.c.l.b16 %v2487
    %v2527 = vunpack.c.l.b16 %v2488
    %v2528 = vunpack.c.l.b16 %v2489
    %v2529 = vunpack.c.l.b16 %v2490
    %v2530 = vunpack.c.l.b16 %v2491
    %v2531 = vunpack.c.l.b16 %v2492
    %v2532 = vunpack.c.l.b16 %v2493
    %v2533 = vunpack.c.l.b16 %v2494
    %v2534 = vunpack.c.l.b16 %v2495
    %v2535 = vunpack.c.l.b16 %v2496
    %v2536 = vunpack.c.l.b16 %v2497
    %v2537 = vpack.c.b16 %v2522, %v2521
    %v2538 = vpack.c.b16 %v2524, %v2523
    %v2539 = vpack.c.b16 %v2526, %v2525
    %v2540 = vpack.c.b16 %v2528, %v2527
    %v2541 = vpack.c.b16 %v2530, %v2529
    %v2542 = vpack.c.b16 %v2532, %v2531
    %v2543 = vpack.c.b16 %v2534, %v2533
    %v2544 = vpack.c.b16 %v2536, %v2535
    %2553 = vmatprep.subr.bf16.mxu0 0
    %2554 = vmatpush1.bf16.msra.mxu0 %v2537
    %2555 = vmatprep.subr.bf16.mxu0 0
    %2556 = vmatpush1.bf16.msra.mxu0 %v2538
    %2557 = vmatprep.subr.bf16.mxu0 0
    %2558 = vmatpush1.bf16.msra.mxu0 %v2539
    %2559 = vmatprep.subr.bf16.mxu0 0
    %2560 = vmatpush1.bf16.msra.mxu0 %v2540
    %2561 = vmatprep.subr.bf16.mxu0 0
    %2562 = vmatpush1.bf16.msra.mxu0 %v2541
    %2563 = vmatprep.subr.bf16.mxu0 0
    %2564 = vmatpush1.bf16.msra.mxu0 %v2542
    %2565 = vmatprep.subr.bf16.mxu0 0
    %2566 = vmatpush1.bf16.msra.mxu0 %v2543
    %2567 = vmatprep.subr.bf16.mxu0 0
    %2568 = vmatpush1.bf16.msra.mxu0 %v2544
    %2569 = vmatprep.subr.bf16.mxu0 0
    %2570 = vmatpush1.bf16.msra.mxu0 0
    %2571 = vmatprep.subr.bf16.mxu0 0
    %2572 = vmatpush1.bf16.msra.mxu0 0
    %2573 = vmatprep.subr.bf16.mxu0 0
    %2574 = vmatpush1.bf16.msra.mxu0 0
    %2575 = vmatprep.subr.bf16.mxu0 0
    %2576 = vmatpush1.bf16.msra.mxu0 0
    %2577 = vmatprep.subr.bf16.mxu0 0
    %2578 = vmatpush1.bf16.msra.mxu0 0
    %2579 = vmatprep.subr.bf16.mxu0 0
    %2580 = vmatpush1.bf16.msra.mxu0 0
    %2581 = vmatprep.subr.bf16.mxu0 0
    %2582 = vmatpush1.bf16.msra.mxu0 0
    %2583 = vmatprep.subr.bf16.mxu0 0
    %2584 = vmatpush1.bf16.msra.mxu0 0
    %2585 = vmatprep.mubr.bf16.mxu0 0
    %2586 = vmatmul.mubr.bf16.gmra.mrb[0].mxu0 %v2466
    %v2587 = vpop.f32.mrb[0].mxu0
    %v2588 = vadd.f32 %v2503, %v2587
    %v2589 = vpop.f32.mrb[0].mxu0
    %v2590 = vpop.f32.mrb[0].mxu0
    %v2591 = vadd.f32 %v2503, %v2590
    %v2592 = vpop.f32.mrb[0].mxu0
    %2593 = vmatprep.mubr.bf16.mxu0 0
    %2594 = vmatmul.mubr.bf16.gmra.mrb[0].mxu0 %v2467
    %v2595 = vpop.f32.mrb[0].mxu0
    %v2596 = vadd.f32 %v2503, %v2595
    %v2597 = vpop.f32.mrb[0].mxu0
    %v2598 = vpop.f32.mrb[0].mxu0
    %v2599 = vadd.f32 %v2503, %v2598
    %v2600 = vpop.f32.mrb[0].mxu0
    %2601 = vmatprep.mubr.bf16.mxu0 0
    %2602 = vmatmul.mubr.bf16.gmra.mrb[0].mxu0 %v2468
    %v2603 = vpop.f32.mrb[0].mxu0
    %v2604 = vadd.f32 %v2503, %v2603
    %v2605 = vpop.f32.mrb[0].mxu0
    %v2606 = vpop.f32.mrb[0].mxu0
    %v2607 = vadd.f32 %v2503, %v2606
    %v2608 = vpop.f32.mrb[0].mxu0
    %2609 = vmatprep.mubr.bf16.mxu0 0
    %2610 = vmatmul.mubr.bf16.gmra.mrb[0].mxu0 %v2469
    %v2611 = vpop.f32.mrb[0].mxu0
    %v2612 = vadd.f32 %v2503, %v2611
    %v2613 = vpop.f32.mrb[0].mxu0
    %v2614 = vpop.f32.mrb[0].mxu0
    %v2615 = vadd.f32 %v2503, %v2614
    %v2616 = vpop.f32.mrb[0].mxu0
    %2617 = vmatprep.mubr.bf16.mxu0 0
    %2618 = vmatmul.mubr.bf16.gmra.mrb[0].mxu0 %v2470
    %v2619 = vpop.f32.mrb[0].mxu0
    %v2620 = vadd.f32 %v2503, %v2619
    %v2621 = vpop.f32.mrb[0].mxu0
    %v2622 = vpop.f32.mrb[0].mxu0
    %v2623 = vadd.f32 %v2503, %v2622
    %v2624 = vpop.f32.mrb[0].mxu0
    %2625 = vmatprep.mubr.bf16.mxu0 0
    %2626 = vmatmul.mubr.bf16.gmra.mrb[0].mxu0 %v2471
    %v2627 = vpop.f32.mrb[0].mxu0
    %v2628 = vadd.f32 %v2503, %v2627
    %v2629 = vpop.f32.mrb[0].mxu0
    %v2630 = vpop.f32.mrb[0].mxu0
    %v2631 = vadd.f32 %v2503, %v2630
    %v2632 = vpop.f32.mrb[0].mxu0
    %2633 = vmatprep.mubr.bf16.mxu0 0
    %2634 = vmatmul.mubr.bf16.gmra.mrb[0].mxu0 %v2472
    %v2635 = vpop.f32.mrb[0].mxu0
    %v2636 = vadd.f32 %v2503, %v2635
    %v2637 = vpop.f32.mrb[0].mxu0
    %v2638 = vpop.f32.mrb[0].mxu0
    %v2639 = vadd.f32 %v2503, %v2638
    %v2640 = vpop.f32.mrb[0].mxu0
    %2641 = vmatprep.mubr.bf16.mxu0 0
    %2642 = vmatmul.mubr.bf16.gmra.mrb[0].mxu0 %v2473
    %v2643 = vpop.f32.mrb[0].mxu0
    %v2644 = vadd.f32 %v2503, %v2643
    %v2645 = vpop.f32.mrb[0].mxu0
    %v2646 = vpop.f32.mrb[0].mxu0
    %v2647 = vadd.f32 %v2503, %v2646
    %v2648 = vpop.f32.mrb[0].mxu0
    %2649 = vmatprep.mubr.bf16.mxu0 0
    %2650 = vmatmul.mubr.bf16.gmra.mrb[0].mxu0 %v2474
    %v2651 = vpop.f32.mrb[0].mxu0
    %v2652 = vadd.f32 %v2503, %v2651
    %v2653 = vpop.f32.mrb[0].mxu0
    %v2654 = vpop.f32.mrb[0].mxu0
    %v2655 = vadd.f32 %v2503, %v2654
    %v2656 = vpop.f32.mrb[0].mxu0
    %2657 = vmatprep.mubr.bf16.mxu0 0
    %2658 = vmatmul.mubr.bf16.gmra.mrb[0].mxu0 %v2475
    %v2659 = vpop.f32.mrb[0].mxu0
    %v2660 = vadd.f32 %v2503, %v2659
    %v2661 = vpop.f32.mrb[0].mxu0
    %v2662 = vpop.f32.mrb[0].mxu0
    %v2663 = vadd.f32 %v2503, %v2662
    %v2664 = vpop.f32.mrb[0].mxu0
    %2665 = vmatprep.mubr.bf16.mxu0 0
    %2666 = vmatmul.mubr.bf16.gmra.mrb[0].mxu0 %v2476
    %v2667 = vpop.f32.mrb[0].mxu0
    %v2668 = vadd.f32 %v2503, %v2667
    %v2669 = vpop.f32.mrb[0].mxu0
    %v2670 = vpop.f32.mrb[0].mxu0
    %v2671 = vadd.f32 %v2503, %v2670
    %v2672 = vpop.f32.mrb[0].mxu0
    %2673 = vmatprep.mubr.bf16.mxu0 0
    %2674 = vmatmul.mubr.bf16.gmra.mrb[0].mxu0 %v2477
    %v2675 = vpop.f32.mrb[0].mxu0
    %v2676 = vadd.f32 %v2503, %v2675
    %v2677 = vpop.f32.mrb[0].mxu0
    %v2678 = vpop.f32.mrb[0].mxu0
    %v2679 = vadd.f32 %v2503, %v2678
    %v2680 = vpop.f32.mrb[0].mxu0
    %2681 = vmatprep.mubr.bf16.mxu0 0
    %2682 = vmatmul.mubr.bf16.gmra.mrb[0].mxu0 %v2478
    %v2683 = vpop.f32.mrb[0].mxu0
    %v2684 = vadd.f32 %v2503, %v2683
    %v2685 = vpop.f32.mrb[0].mxu0
    %v2686 = vpop.f32.mrb[0].mxu0
    %v2687 = vadd.f32 %v2503, %v2686
    %v2688 = vpop.f32.mrb[0].mxu0
    %2689 = vmatprep.mubr.bf16.mxu0 0
    %2690 = vmatmul.mubr.bf16.gmra.mrb[0].mxu0 %v2479
    %v2691 = vpop.f32.mrb[0].mxu0
    %v2692 = vadd.f32 %v2503, %v2691
    %v2693 = vpop.f32.mrb[0].mxu0
    %v2694 = vpop.f32.mrb[0].mxu0
    %v2695 = vadd.f32 %v2503, %v2694
    %v2696 = vpop.f32.mrb[0].mxu0
    %2697 = vmatprep.mubr.bf16.mxu0 0
    %2698 = vmatmul.mubr.bf16.gmra.mrb[0].mxu0 %v2480
    %v2699 = vpop.f32.mrb[0].mxu0
    %v2700 = vadd.f32 %v2503, %v2699
    %v2701 = vpop.f32.mrb[0].mxu0
    %v2702 = vpop.f32.mrb[0].mxu0
    %v2703 = vadd.f32 %v2503, %v2702
    %v2704 = vpop.f32.mrb[0].mxu0
    %2705 = vmatprep.mubr.bf16.mxu0 0
    %2706 = vmatmul.mubr.bf16.gmra.mrb[0].mxu0 %v2481
    %v2707 = vpop.f32.mrb[0].mxu0
    %v2708 = vadd.f32 %v2503, %v2707
    %v2709 = vpop.f32.mrb[0].mxu0
    %v2710 = vpop.f32.mrb[0].mxu0
    %v2711 = vadd.f32 %v2503, %v2710
    %v2712 = vpop.f32.mrb[0].mxu0
    %2713 = vdwg.mxu0
    %v2714 = vmax.f32 %v2588, 0.0
    %v2715 = vmax.f32 %v2591, 0.0
    %v2716 = vmax.f32 %v2596, 0.0
    %v2717 = vmax.f32 %v2599, 0.0
    %v2718 = vmax.f32 %v2604, 0.0
    %v2719 = vmax.f32 %v2607, 0.0
    %v2720 = vmax.f32 %v2612, 0.0
    %v2721 = vmax.f32 %v2615, 0.0
    %v2722 = vmax.f32 %v2620, 0.0
    %v2723 = vmax.f32 %v2623, 0.0
    %v2724 = vmax.f32 %v2628, 0.0
    %v2725 = vmax.f32 %v2631, 0.0
    %v2726 = vmax.f32 %v2636, 0.0
    %v2727 = vmax.f32 %v2639, 0.0
    %v2728 = vmax.f32 %v2644, 0.0
    %v2729 = vmax.f32 %v2647, 0.0
    %v2730 = vmax.f32 %v2652, 0.0
    %v2731 = vmax.f32 %v2655, 0.0
    %v2732 = vmax.f32 %v2660, 0.0
    %v2733 = vmax.f32 %v2663, 0.0
    %v2734 = vmax.f32 %v2668, 0.0
    %v2735 = vmax.f32 %v2671, 0.0
    %v2736 = vmax.f32 %v2676, 0.0
    %v2737 = vmax.f32 %v2679, 0.0
    %v2738 = vmax.f32 %v2684, 0.0
    %v2739 = vmax.f32 %v2687, 0.0
    %v2740 = vmax.f32 %v2692, 0.0
    %v2741 = vmax.f32 %v2695, 0.0
    %v2742 = vmax.f32 %v2700, 0.0
    %v2743 = vmax.f32 %v2703, 0.0
    %v2744 = vmax.f32 %v2708, 0.0
    %v2745 = vmax.f32 %v2711, 0.0
    %v2746 = vpack.c.bf16 %v2715, %v2714
    %v2747 = vpack.c.bf16 %v2717, %v2716
    %v2748 = vpack.c.bf16 %v2719, %v2718
    %v2749 = vpack.c.bf16 %v2721, %v2720
    %v2750 = vpack.c.bf16 %v2723, %v2722
    %v2751 = vpack.c.bf16 %v2725, %v2724
    %v2752 = vpack.c.bf16 %v2727, %v2726
    %v2753 = vpack.c.bf16 %v2729, %v2728
    %v2754 = vpack.c.bf16 %v2731, %v2730
    %v2755 = vpack.c.bf16 %v2733, %v2732
    %v2756 = vpack.c.bf16 %v2735, %v2734
    %v2757 = vpack.c.bf16 %v2737, %v2736
    %v2758 = vpack.c.bf16 %v2739, %v2738
    %v2759 = vpack.c.bf16 %v2741, %v2740
    %v2760 = vpack.c.bf16 %v2743, %v2742
    %v2761 = vpack.c.bf16 %v2745, %v2744
    %v2762 = vld [vmem:[#allocation16] sm:$0xff]
    %v2763 = vld [vmem:[#allocation16 + $0x8] sm:$0xff]
    %v2764 = vld [vmem:[#allocation16 + $0x10] sm:$0xff]
    %v2765 = vld [vmem:[#allocation16 + $0x18] sm:$0xff]
    %v2766 = vld [vmem:[#allocation16 + $0x20] sm:$0xff]
    %v2767 = vld [vmem:[#allocation16 + $0x28] sm:$0xff]
    %v2768 = vld [vmem:[#allocation16 + $0x30] sm:$0xff]
    %v2769 = vld [vmem:[#allocation16 + $0x38] sm:$0xff]
    %v2770 = vld [vmem:[#allocation16 + $0x40] sm:$0xff]
    %v2771 = vld [vmem:[#allocation16 + $0x48] sm:$0xff]
    %v2772 = vld [vmem:[#allocation16 + $0x50] sm:$0xff]
    %v2773 = vld [vmem:[#allocation16 + $0x58] sm:$0xff]
    %v2774 = vld [vmem:[#allocation16 + $0x60] sm:$0xff]
    %v2775 = vld [vmem:[#allocation16 + $0x68] sm:$0xff]
    %v2776 = vld [vmem:[#allocation16 + $0x70] sm:$0xff]
    %v2777 = vld [vmem:[#allocation16 + $0x78] sm:$0xff]
    %v2778 = vld [vmem:[%s16] sm:$0x3]
    %v2780 = vlaneseq
    %v2781 = vshrl.u32 %v2780, 7
    %v2782 = vsub.s32 0, %v2781
    %v2783 = vrot.slane %v2778, %v2782
    %v2784 = vlaneseq
    %v2785 = vshrl.u32 %v2784, 7
    %v2786 = vsub.s32 1, %v2785
    %v2787 = vrot.slane %v2778, %v2786
    %v2806 = vunpack.c.l.b16 %v2762
    %v2807 = vunpack.c.h.b16 %v2762
    %v2808 = vunpack.c.l.b16 %v2763
    %v2809 = vunpack.c.h.b16 %v2763
    %v2810 = vunpack.c.l.b16 %v2764
    %v2811 = vunpack.c.h.b16 %v2764
    %v2812 = vunpack.c.l.b16 %v2765
    %v2813 = vunpack.c.h.b16 %v2765
    %v2814 = vunpack.c.l.b16 %v2766
    %v2815 = vunpack.c.h.b16 %v2766
    %v2816 = vunpack.c.l.b16 %v2767
    %v2817 = vunpack.c.h.b16 %v2767
    %v2818 = vunpack.c.l.b16 %v2768
    %v2819 = vunpack.c.h.b16 %v2768
    %v2820 = vunpack.c.l.b16 %v2769
    %v2821 = vunpack.c.h.b16 %v2769
    %v2822 = vunpack.c.l.b16 %v2770
    %v2823 = vunpack.c.h.b16 %v2770
    %v2824 = vunpack.c.l.b16 %v2771
    %v2825 = vunpack.c.h.b16 %v2771
    %v2826 = vunpack.c.l.b16 %v2772
    %v2827 = vunpack.c.h.b16 %v2772
    %v2828 = vunpack.c.l.b16 %v2773
    %v2829 = vunpack.c.h.b16 %v2773
    %v2830 = vunpack.c.l.b16 %v2774
    %v2831 = vunpack.c.h.b16 %v2774
    %v2832 = vunpack.c.l.b16 %v2775
    %v2833 = vunpack.c.h.b16 %v2775
    %v2834 = vunpack.c.l.b16 %v2776
    %v2835 = vunpack.c.h.b16 %v2776
    %v2836 = vunpack.c.l.b16 %v2777
    %v2837 = vunpack.c.h.b16 %v2777
    %v2838 = vpack.c.b16 %v2808, %v2806
    %v2839 = vpack.c.b16 %v2809, %v2807
    %v2840 = vpack.c.b16 %v2812, %v2810
    %v2841 = vpack.c.b16 %v2813, %v2811
    %v2842 = vpack.c.b16 %v2816, %v2814
    %v2843 = vpack.c.b16 %v2817, %v2815
    %v2844 = vpack.c.b16 %v2820, %v2818
    %v2845 = vpack.c.b16 %v2821, %v2819
    %v2846 = vpack.c.b16 %v2824, %v2822
    %v2847 = vpack.c.b16 %v2825, %v2823
    %v2848 = vpack.c.b16 %v2828, %v2826
    %v2849 = vpack.c.b16 %v2829, %v2827
    %v2850 = vpack.c.b16 %v2832, %v2830
    %v2851 = vpack.c.b16 %v2833, %v2831
    %v2852 = vpack.c.b16 %v2836, %v2834
    %v2853 = vpack.c.b16 %v2837, %v2835
    %2870 = vmatprep.subr.bf16.mxu0 %v2839
    %2871 = vmatpush1.bf16.msra.mxu0 %v2838
    %2872 = vmatprep.subr.bf16.mxu0 %v2841
    %2873 = vmatpush1.bf16.msra.mxu0 %v2840
    %2874 = vmatprep.subr.bf16.mxu0 %v2843
    %2875 = vmatpush1.bf16.msra.mxu0 %v2842
    %2876 = vmatprep.subr.bf16.mxu0 %v2845
    %2877 = vmatpush1.bf16.msra.mxu0 %v2844
    %2878 = vmatprep.subr.bf16.mxu0 %v2847
    %2879 = vmatpush1.bf16.msra.mxu0 %v2846
    %2880 = vmatprep.subr.bf16.mxu0 %v2849
    %2881 = vmatpush1.bf16.msra.mxu0 %v2848
    %2882 = vmatprep.subr.bf16.mxu0 %v2851
    %2883 = vmatpush1.bf16.msra.mxu0 %v2850
    %2884 = vmatprep.subr.bf16.mxu0 %v2853
    %2885 = vmatpush1.bf16.msra.mxu0 %v2852
    %2886 = vmatprep.subr.bf16.mxu0 0
    %2887 = vmatpush1.bf16.msra.mxu0 0
    %2888 = vmatprep.subr.bf16.mxu0 0
    %2889 = vmatpush1.bf16.msra.mxu0 0
    %2890 = vmatprep.subr.bf16.mxu0 0
    %2891 = vmatpush1.bf16.msra.mxu0 0
    %2892 = vmatprep.subr.bf16.mxu0 0
    %2893 = vmatpush1.bf16.msra.mxu0 0
    %2894 = vmatprep.subr.bf16.mxu0 0
    %2895 = vmatpush1.bf16.msra.mxu0 0
    %2896 = vmatprep.subr.bf16.mxu0 0
    %2897 = vmatpush1.bf16.msra.mxu0 0
    %2898 = vmatprep.subr.bf16.mxu0 0
    %2899 = vmatpush1.bf16.msra.mxu0 0
    %2900 = vmatprep.subr.bf16.mxu0 0
    %2901 = vmatpush1.bf16.msra.mxu0 0
    %2902 = vmatprep.mubr.bf16.mxu0 0
    %2903 = vmatmul.mubr.bf16.gmra.mrb[0].mxu0 %v2746
    %v2904 = vpop.f32.mrb[0].mxu0
    %v2905 = vadd.f32 %v2783, %v2904
    %v2906 = vpop.f32.mrb[0].mxu0
    %v2907 = vadd.f32 %v2787, %v2906
    %v2908 = vpop.f32.mrb[0].mxu0
    %v2909 = vadd.f32 %v2783, %v2908
    %v2910 = vpop.f32.mrb[0].mxu0
    %v2911 = vadd.f32 %v2787, %v2910
    %2912 = vmatprep.mubr.bf16.mxu0 0
    %2913 = vmatmul.mubr.bf16.gmra.mrb[0].mxu0 %v2747
    %v2914 = vpop.f32.mrb[0].mxu0
    %v2915 = vadd.f32 %v2783, %v2914
    %v2916 = vpop.f32.mrb[0].mxu0
    %v2917 = vadd.f32 %v2787, %v2916
    %v2918 = vpop.f32.mrb[0].mxu0
    %v2919 = vadd.f32 %v2783, %v2918
    %v2920 = vpop.f32.mrb[0].mxu0
    %v2921 = vadd.f32 %v2787, %v2920
    %2922 = vmatprep.mubr.bf16.mxu0 0
    %2923 = vmatmul.mubr.bf16.gmra.mrb[0].mxu0 %v2748
    %v2924 = vpop.f32.mrb[0].mxu0
    %v2925 = vadd.f32 %v2783, %v2924
    %v2926 = vpop.f32.mrb[0].mxu0
    %v2927 = vadd.f32 %v2787, %v2926
    %v2928 = vpop.f32.mrb[0].mxu0
    %v2929 = vadd.f32 %v2783, %v2928
    %v2930 = vpop.f32.mrb[0].mxu0
    %v2931 = vadd.f32 %v2787, %v2930
    %2932 = vmatprep.mubr.bf16.mxu0 0
    %2933 = vmatmul.mubr.bf16.gmra.mrb[0].mxu0 %v2749
    %v2934 = vpop.f32.mrb[0].mxu0
    %v2935 = vadd.f32 %v2783, %v2934
    %v2936 = vpop.f32.mrb[0].mxu0
    %v2937 = vadd.f32 %v2787, %v2936
    %v2938 = vpop.f32.mrb[0].mxu0
    %v2939 = vadd.f32 %v2783, %v2938
    %v2940 = vpop.f32.mrb[0].mxu0
    %v2941 = vadd.f32 %v2787, %v2940
    %2942 = vmatprep.mubr.bf16.mxu0 0
    %2943 = vmatmul.mubr.bf16.gmra.mrb[0].mxu0 %v2750
    %v2944 = vpop.f32.mrb[0].mxu0
    %v2945 = vadd.f32 %v2783, %v2944
    %v2946 = vpop.f32.mrb[0].mxu0
    %v2947 = vadd.f32 %v2787, %v2946
    %v2948 = vpop.f32.mrb[0].mxu0
    %v2949 = vadd.f32 %v2783, %v2948
    %v2950 = vpop.f32.mrb[0].mxu0
    %v2951 = vadd.f32 %v2787, %v2950
    %2952 = vmatprep.mubr.bf16.mxu0 0
    %2953 = vmatmul.mubr.bf16.gmra.mrb[0].mxu0 %v2751
    %v2954 = vpop.f32.mrb[0].mxu0
    %v2955 = vadd.f32 %v2783, %v2954
    %v2956 = vpop.f32.mrb[0].mxu0
    %v2957 = vadd.f32 %v2787, %v2956
    %v2958 = vpop.f32.mrb[0].mxu0
    %v2959 = vadd.f32 %v2783, %v2958
    %v2960 = vpop.f32.mrb[0].mxu0
    %v2961 = vadd.f32 %v2787, %v2960
    %2962 = vmatprep.mubr.bf16.mxu0 0
    %2963 = vmatmul.mubr.bf16.gmra.mrb[0].mxu0 %v2752
    %v2964 = vpop.f32.mrb[0].mxu0
    %v2965 = vadd.f32 %v2783, %v2964
    %v2966 = vpop.f32.mrb[0].mxu0
    %v2967 = vadd.f32 %v2787, %v2966
    %v2968 = vpop.f32.mrb[0].mxu0
    %v2969 = vadd.f32 %v2783, %v2968
    %v2970 = vpop.f32.mrb[0].mxu0
    %v2971 = vadd.f32 %v2787, %v2970
    %2972 = vmatprep.mubr.bf16.mxu0 0
    %2973 = vmatmul.mubr.bf16.gmra.mrb[0].mxu0 %v2753
    %v2974 = vpop.f32.mrb[0].mxu0
    %v2975 = vadd.f32 %v2783, %v2974
    %v2976 = vpop.f32.mrb[0].mxu0
    %v2977 = vadd.f32 %v2787, %v2976
    %v2978 = vpop.f32.mrb[0].mxu0
    %v2979 = vadd.f32 %v2783, %v2978
    %v2980 = vpop.f32.mrb[0].mxu0
    %v2981 = vadd.f32 %v2787, %v2980
    %2982 = vmatprep.mubr.bf16.mxu0 0
    %2983 = vmatmul.mubr.bf16.gmra.mrb[0].mxu0 %v2754
    %v2984 = vpop.f32.mrb[0].mxu0
    %v2985 = vadd.f32 %v2783, %v2984
    %v2986 = vpop.f32.mrb[0].mxu0
    %v2987 = vadd.f32 %v2787, %v2986
    %v2988 = vpop.f32.mrb[0].mxu0
    %v2989 = vadd.f32 %v2783, %v2988
    %v2990 = vpop.f32.mrb[0].mxu0
    %v2991 = vadd.f32 %v2787, %v2990
    %2992 = vmatprep.mubr.bf16.mxu0 0
    %2993 = vmatmul.mubr.bf16.gmra.mrb[0].mxu0 %v2755
    %v2994 = vpop.f32.mrb[0].mxu0
    %v2995 = vadd.f32 %v2783, %v2994
    %v2996 = vpop.f32.mrb[0].mxu0
    %v2997 = vadd.f32 %v2787, %v2996
    %v2998 = vpop.f32.mrb[0].mxu0
    %v2999 = vadd.f32 %v2783, %v2998
    %v3000 = vpop.f32.mrb[0].mxu0
    %v3001 = vadd.f32 %v2787, %v3000
    %3002 = vmatprep.mubr.bf16.mxu0 0
    %3003 = vmatmul.mubr.bf16.gmra.mrb[0].mxu0 %v2756
    %v3004 = vpop.f32.mrb[0].mxu0
    %v3005 = vadd.f32 %v2783, %v3004
    %v3006 = vpop.f32.mrb[0].mxu0
    %v3007 = vadd.f32 %v2787, %v3006
    %v3008 = vpop.f32.mrb[0].mxu0
    %v3009 = vadd.f32 %v2783, %v3008
    %v3010 = vpop.f32.mrb[0].mxu0
    %v3011 = vadd.f32 %v2787, %v3010
    %3012 = vmatprep.mubr.bf16.mxu0 0
    %3013 = vmatmul.mubr.bf16.gmra.mrb[0].mxu0 %v2757
    %v3014 = vpop.f32.mrb[0].mxu0
    %v3015 = vadd.f32 %v2783, %v3014
    %v3016 = vpop.f32.mrb[0].mxu0
    %v3017 = vadd.f32 %v2787, %v3016
    %v3018 = vpop.f32.mrb[0].mxu0
    %v3019 = vadd.f32 %v2783, %v3018
    %v3020 = vpop.f32.mrb[0].mxu0
    %v3021 = vadd.f32 %v2787, %v3020
    %3022 = vmatprep.mubr.bf16.mxu0 0
    %3023 = vmatmul.mubr.bf16.gmra.mrb[0].mxu0 %v2758
    %v3024 = vpop.f32.mrb[0].mxu0
    %v3025 = vadd.f32 %v2783, %v3024
    %v3026 = vpop.f32.mrb[0].mxu0
    %v3027 = vadd.f32 %v2787, %v3026
    %v3028 = vpop.f32.mrb[0].mxu0
    %v3029 = vadd.f32 %v2783, %v3028
    %v3030 = vpop.f32.mrb[0].mxu0
    %v3031 = vadd.f32 %v2787, %v3030
    %3032 = vmatprep.mubr.bf16.mxu0 0
    %3033 = vmatmul.mubr.bf16.gmra.mrb[0].mxu0 %v2759
    %v3034 = vpop.f32.mrb[0].mxu0
    %v3035 = vadd.f32 %v2783, %v3034
    %v3036 = vpop.f32.mrb[0].mxu0
    %v3037 = vadd.f32 %v2787, %v3036
    %v3038 = vpop.f32.mrb[0].mxu0
    %v3039 = vadd.f32 %v2783, %v3038
    %v3040 = vpop.f32.mrb[0].mxu0
    %v3041 = vadd.f32 %v2787, %v3040
    %3042 = vmatprep.mubr.bf16.mxu0 0
    %3043 = vmatmul.mubr.bf16.gmra.mrb[0].mxu0 %v2760
    %v3044 = vpop.f32.mrb[0].mxu0
    %v3045 = vadd.f32 %v2783, %v3044
    %v3046 = vpop.f32.mrb[0].mxu0
    %v3047 = vadd.f32 %v2787, %v3046
    %v3048 = vpop.f32.mrb[0].mxu0
    %v3049 = vadd.f32 %v2783, %v3048
    %v3050 = vpop.f32.mrb[0].mxu0
    %v3051 = vadd.f32 %v2787, %v3050
    %3052 = vmatprep.mubr.bf16.mxu0 0
    %3053 = vmatmul.mubr.bf16.gmra.mrb[0].mxu0 %v2761
    %v3054 = vpop.f32.mrb[0].mxu0
    %v3055 = vadd.f32 %v2783, %v3054
    %v3056 = vpop.f32.mrb[0].mxu0
    %v3057 = vadd.f32 %v2787, %v3056
    %v3058 = vpop.f32.mrb[0].mxu0
    %v3059 = vadd.f32 %v2783, %v3058
    %v3060 = vpop.f32.mrb[0].mxu0
    %v3061 = vadd.f32 %v2787, %v3060
    %3062 = vdwg.mxu0
    %v3063 = vxor.u32 %v2905, 2147483648
    %v3064 = vxor.u32 %v2907, 2147483648
    %v3065 = vxor.u32 %v2909, 2147483648
    %v3066 = vxor.u32 %v2911, 2147483648
    %v3067 = vxor.u32 %v2915, 2147483648
    %v3068 = vxor.u32 %v2917, 2147483648
    %v3069 = vxor.u32 %v2919, 2147483648
    %v3070 = vxor.u32 %v2921, 2147483648
    %v3071 = vxor.u32 %v2925, 2147483648
    %v3072 = vxor.u32 %v2927, 2147483648
    %v3073 = vxor.u32 %v2929, 2147483648
    %v3074 = vxor.u32 %v2931, 2147483648
    %v3075 = vxor.u32 %v2935, 2147483648
    %v3076 = vxor.u32 %v2937, 2147483648
    %v3077 = vxor.u32 %v2939, 2147483648
    %v3078 = vxor.u32 %v2941, 2147483648
    %v3079 = vxor.u32 %v2945, 2147483648
    %v3080 = vxor.u32 %v2947, 2147483648
    %v3081 = vxor.u32 %v2949, 2147483648
    %v3082 = vxor.u32 %v2951, 2147483648
    %v3083 = vxor.u32 %v2955, 2147483648
    %v3084 = vxor.u32 %v2957, 2147483648
    %v3085 = vxor.u32 %v2959, 2147483648
    %v3086 = vxor.u32 %v2961, 2147483648
    %v3087 = vxor.u32 %v2965, 2147483648
    %v3088 = vxor.u32 %v2967, 2147483648
    %v3089 = vxor.u32 %v2969, 2147483648
    %v3090 = vxor.u32 %v2971, 2147483648
    %v3091 = vxor.u32 %v2975, 2147483648
    %v3092 = vxor.u32 %v2977, 2147483648
    %v3093 = vxor.u32 %v2979, 2147483648
    %v3094 = vxor.u32 %v2981, 2147483648
    %v3095 = vxor.u32 %v2985, 2147483648
    %v3096 = vxor.u32 %v2987, 2147483648
    %v3097 = vxor.u32 %v2989, 2147483648
    %v3098 = vxor.u32 %v2991, 2147483648
    %v3099 = vxor.u32 %v2995, 2147483648
    %v3100 = vxor.u32 %v2997, 2147483648
    %v3101 = vxor.u32 %v2999, 2147483648
    %v3102 = vxor.u32 %v3001, 2147483648
    %v3103 = vxor.u32 %v3005, 2147483648
    %v3104 = vxor.u32 %v3007, 2147483648
    %v3105 = vxor.u32 %v3009, 2147483648
    %v3106 = vxor.u32 %v3011, 2147483648
    %v3107 = vxor.u32 %v3015, 2147483648
    %v3108 = vxor.u32 %v3017, 2147483648
    %v3109 = vxor.u32 %v3019, 2147483648
    %v3110 = vxor.u32 %v3021, 2147483648
    %v3111 = vxor.u32 %v3025, 2147483648
    %v3112 = vxor.u32 %v3027, 2147483648
    %v3113 = vxor.u32 %v3029, 2147483648
    %v3114 = vxor.u32 %v3031, 2147483648
    %v3115 = vxor.u32 %v3035, 2147483648
    %v3116 = vxor.u32 %v3037, 2147483648
    %v3117 = vxor.u32 %v3039, 2147483648
    %v3118 = vxor.u32 %v3041, 2147483648
    %v3119 = vxor.u32 %v3045, 2147483648
    %v3120 = vxor.u32 %v3047, 2147483648
    %v3121 = vxor.u32 %v3049, 2147483648
    %v3122 = vxor.u32 %v3051, 2147483648
    %v3123 = vxor.u32 %v3055, 2147483648
    %v3124 = vxor.u32 %v3057, 2147483648
    %v3125 = vxor.u32 %v3059, 2147483648
    %v3126 = vxor.u32 %v3061, 2147483648
    %v3127 = vmul.f32 %v3063, 1.442695
    %v3128 = vpow.pop %v3127
    %v3129 = vmul.f32 %v3064, 1.442695
    %v3130 = vpow.pop %v3129
    %v3131 = vmul.f32 %v3065, 1.442695
    %v3132 = vpow.pop %v3131
    %v3133 = vmul.f32 %v3066, 1.442695
    %v3134 = vpow.pop %v3133
    %v3135 = vmul.f32 %v3067, 1.442695
    %v3136 = vpow.pop %v3135
    %v3137 = vmul.f32 %v3068, 1.442695
    %v3138 = vpow.pop %v3137
    %v3139 = vmul.f32 %v3069, 1.442695
    %v3140 = vpow.pop %v3139
    %v3141 = vmul.f32 %v3070, 1.442695
    %v3142 = vpow.pop %v3141
    %v3143 = vmul.f32 %v3071, 1.442695
    %v3144 = vpow.pop %v3143
    %v3145 = vmul.f32 %v3072, 1.442695
    %v3146 = vpow.pop %v3145
    %v3147 = vmul.f32 %v3073, 1.442695
    %v3148 = vpow.pop %v3147
    %v3149 = vmul.f32 %v3074, 1.442695
    %v3150 = vpow.pop %v3149
    %v3151 = vmul.f32 %v3075, 1.442695
    %v3152 = vpow.pop %v3151
    %v3153 = vmul.f32 %v3076, 1.442695
    %v3154 = vpow.pop %v3153
    %v3155 = vmul.f32 %v3077, 1.442695
    %v3156 = vpow.pop %v3155
    %v3157 = vmul.f32 %v3078, 1.442695
    %v3158 = vpow.pop %v3157
    %v3159 = vmul.f32 %v3079, 1.442695
    %v3160 = vpow.pop %v3159
    %v3161 = vmul.f32 %v3080, 1.442695
    %v3162 = vpow.pop %v3161
    %v3163 = vmul.f32 %v3081, 1.442695
    %v3164 = vpow.pop %v3163
    %v3165 = vmul.f32 %v3082, 1.442695
    %v3166 = vpow.pop %v3165
    %v3167 = vmul.f32 %v3083, 1.442695
    %v3168 = vpow.pop %v3167
    %v3169 = vmul.f32 %v3084, 1.442695
    %v3170 = vpow.pop %v3169
    %v3171 = vmul.f32 %v3085, 1.442695
    %v3172 = vpow.pop %v3171
    %v3173 = vmul.f32 %v3086, 1.442695
    %v3174 = vpow.pop %v3173
    %v3175 = vmul.f32 %v3087, 1.442695
    %v3176 = vpow.pop %v3175
    %v3177 = vmul.f32 %v3088, 1.442695
    %v3178 = vpow.pop %v3177
    %v3179 = vmul.f32 %v3089, 1.442695
    %v3180 = vpow.pop %v3179
    %v3181 = vmul.f32 %v3090, 1.442695
    %v3182 = vpow.pop %v3181
    %v3183 = vmul.f32 %v3091, 1.442695
    %v3184 = vpow.pop %v3183
    %v3185 = vmul.f32 %v3092, 1.442695
    %v3186 = vpow.pop %v3185
    %v3187 = vmul.f32 %v3093, 1.442695
    %v3188 = vpow.pop %v3187
    %v3189 = vmul.f32 %v3094, 1.442695
    %v3190 = vpow.pop %v3189
    %v3191 = vmul.f32 %v3095, 1.442695
    %v3192 = vpow.pop %v3191
    %v3193 = vmul.f32 %v3096, 1.442695
    %v3194 = vpow.pop %v3193
    %v3195 = vmul.f32 %v3097, 1.442695
    %v3196 = vpow.pop %v3195
    %v3197 = vmul.f32 %v3098, 1.442695
    %v3198 = vpow.pop %v3197
    %v3199 = vmul.f32 %v3099, 1.442695
    %v3200 = vpow.pop %v3199
    %v3201 = vmul.f32 %v3100, 1.442695
    %v3202 = vpow.pop %v3201
    %v3203 = vmul.f32 %v3101, 1.442695
    %v3204 = vpow.pop %v3203
    %v3205 = vmul.f32 %v3102, 1.442695
    %v3206 = vpow.pop %v3205
    %v3207 = vmul.f32 %v3103, 1.442695
    %v3208 = vpow.pop %v3207
    %v3209 = vmul.f32 %v3104, 1.442695
    %v3210 = vpow.pop %v3209
    %v3211 = vmul.f32 %v3105, 1.442695
    %v3212 = vpow.pop %v3211
    %v3213 = vmul.f32 %v3106, 1.442695
    %v3214 = vpow.pop %v3213
    %v3215 = vmul.f32 %v3107, 1.442695
    %v3216 = vpow.pop %v3215
    %v3217 = vmul.f32 %v3108, 1.442695
    %v3218 = vpow.pop %v3217
    %v3219 = vmul.f32 %v3109, 1.442695
    %v3220 = vpow.pop %v3219
    %v3221 = vmul.f32 %v3110, 1.442695
    %v3222 = vpow.pop %v3221
    %v3223 = vmul.f32 %v3111, 1.442695
    %v3224 = vpow.pop %v3223
    %v3225 = vmul.f32 %v3112, 1.442695
    %v3226 = vpow.pop %v3225
    %v3227 = vmul.f32 %v3113, 1.442695
    %v3228 = vpow.pop %v3227
    %v3229 = vmul.f32 %v3114, 1.442695
    %v3230 = vpow.pop %v3229
    %v3231 = vmul.f32 %v3115, 1.442695
    %v3232 = vpow.pop %v3231
    %v3233 = vmul.f32 %v3116, 1.442695
    %v3234 = vpow.pop %v3233
    %v3235 = vmul.f32 %v3117, 1.442695
    %v3236 = vpow.pop %v3235
    %v3237 = vmul.f32 %v3118, 1.442695
    %v3238 = vpow.pop %v3237
    %v3239 = vmul.f32 %v3119, 1.442695
    %v3240 = vpow.pop %v3239
    %v3241 = vmul.f32 %v3120, 1.442695
    %v3242 = vpow.pop %v3241
    %v3243 = vmul.f32 %v3121, 1.442695
    %v3244 = vpow.pop %v3243
    %v3245 = vmul.f32 %v3122, 1.442695
    %v3246 = vpow.pop %v3245
    %v3247 = vmul.f32 %v3123, 1.442695
    %v3248 = vpow.pop %v3247
    %v3249 = vmul.f32 %v3124, 1.442695
    %v3250 = vpow.pop %v3249
    %v3251 = vmul.f32 %v3125, 1.442695
    %v3252 = vpow.pop %v3251
    %v3253 = vmul.f32 %v3126, 1.442695
    %v3254 = vpow.pop %v3253
    %v3255 = vadd.f32 %v3128, 1.0
    %v3256 = vadd.f32 %v3130, 1.0
    %v3257 = vadd.f32 %v3132, 1.0
    %v3258 = vadd.f32 %v3134, 1.0
    %v3259 = vadd.f32 %v3136, 1.0
    %v3260 = vadd.f32 %v3138, 1.0
    %v3261 = vadd.f32 %v3140, 1.0
    %v3262 = vadd.f32 %v3142, 1.0
    %v3263 = vadd.f32 %v3144, 1.0
    %v3264 = vadd.f32 %v3146, 1.0
    %v3265 = vadd.f32 %v3148, 1.0
    %v3266 = vadd.f32 %v3150, 1.0
    %v3267 = vadd.f32 %v3152, 1.0
    %v3268 = vadd.f32 %v3154, 1.0
    %v3269 = vadd.f32 %v3156, 1.0
    %v3270 = vadd.f32 %v3158, 1.0
    %v3271 = vadd.f32 %v3160, 1.0
    %v3272 = vadd.f32 %v3162, 1.0
    %v3273 = vadd.f32 %v3164, 1.0
    %v3274 = vadd.f32 %v3166, 1.0
    %v3275 = vadd.f32 %v3168, 1.0
    %v3276 = vadd.f32 %v3170, 1.0
    %v3277 = vadd.f32 %v3172, 1.0
    %v3278 = vadd.f32 %v3174, 1.0
    %v3279 = vadd.f32 %v3176, 1.0
    %v3280 = vadd.f32 %v3178, 1.0
    %v3281 = vadd.f32 %v3180, 1.0
    %v3282 = vadd.f32 %v3182, 1.0
    %v3283 = vadd.f32 %v3184, 1.0
    %v3284 = vadd.f32 %v3186, 1.0
    %v3285 = vadd.f32 %v3188, 1.0
    %v3286 = vadd.f32 %v3190, 1.0
    %v3287 = vadd.f32 %v3192, 1.0
    %v3288 = vadd.f32 %v3194, 1.0
    %v3289 = vadd.f32 %v3196, 1.0
    %v3290 = vadd.f32 %v3198, 1.0
    %v3291 = vadd.f32 %v3200, 1.0
    %v3292 = vadd.f32 %v3202, 1.0
    %v3293 = vadd.f32 %v3204, 1.0
    %v3294 = vadd.f32 %v3206, 1.0
    %v3295 = vadd.f32 %v3208, 1.0
    %v3296 = vadd.f32 %v3210, 1.0
    %v3297 = vadd.f32 %v3212, 1.0
    %v3298 = vadd.f32 %v3214, 1.0
    %v3299 = vadd.f32 %v3216, 1.0
    %v3300 = vadd.f32 %v3218, 1.0
    %v3301 = vadd.f32 %v3220, 1.0
    %v3302 = vadd.f32 %v3222, 1.0
    %v3303 = vadd.f32 %v3224, 1.0
    %v3304 = vadd.f32 %v3226, 1.0
    %v3305 = vadd.f32 %v3228, 1.0
    %v3306 = vadd.f32 %v3230, 1.0
    %v3307 = vadd.f32 %v3232, 1.0
    %v3308 = vadd.f32 %v3234, 1.0
    %v3309 = vadd.f32 %v3236, 1.0
    %v3310 = vadd.f32 %v3238, 1.0
    %v3311 = vadd.f32 %v3240, 1.0
    %v3312 = vadd.f32 %v3242, 1.0
    %v3313 = vadd.f32 %v3244, 1.0
    %v3314 = vadd.f32 %v3246, 1.0
    %v3315 = vadd.f32 %v3248, 1.0
    %v3316 = vadd.f32 %v3250, 1.0
    %v3317 = vadd.f32 %v3252, 1.0
    %v3318 = vadd.f32 %v3254, 1.0
    %v3319 = vrcp.pop %v3255
    %v3320 = vmul.f32 1.0, %v3319
    %v3321 = vrcp.pop %v3256
    %v3322 = vmul.f32 1.0, %v3321
    %v3323 = vrcp.pop %v3257
    %v3324 = vmul.f32 1.0, %v3323
    %v3325 = vrcp.pop %v3258
    %v3326 = vmul.f32 1.0, %v3325
    %v3327 = vrcp.pop %v3259
    %v3328 = vmul.f32 1.0, %v3327
    %v3329 = vrcp.pop %v3260
    %v3330 = vmul.f32 1.0, %v3329
    %v3331 = vrcp.pop %v3261
    %v3332 = vmul.f32 1.0, %v3331
    %v3333 = vrcp.pop %v3262
    %v3334 = vmul.f32 1.0, %v3333
    %v3335 = vrcp.pop %v3263
    %v3336 = vmul.f32 1.0, %v3335
    %v3337 = vrcp.pop %v3264
    %v3338 = vmul.f32 1.0, %v3337
    %v3339 = vrcp.pop %v3265
    %v3340 = vmul.f32 1.0, %v3339
    %v3341 = vrcp.pop %v3266
    %v3342 = vmul.f32 1.0, %v3341
    %v3343 = vrcp.pop %v3267
    %v3344 = vmul.f32 1.0, %v3343
    %v3345 = vrcp.pop %v3268
    %v3346 = vmul.f32 1.0, %v3345
    %v3347 = vrcp.pop %v3269
    %v3348 = vmul.f32 1.0, %v3347
    %v3349 = vrcp.pop %v3270
    %v3350 = vmul.f32 1.0, %v3349
    %v3351 = vrcp.pop %v3271
    %v3352 = vmul.f32 1.0, %v3351
    %v3353 = vrcp.pop %v3272
    %v3354 = vmul.f32 1.0, %v3353
    %v3355 = vrcp.pop %v3273
    %v3356 = vmul.f32 1.0, %v3355
    %v3357 = vrcp.pop %v3274
    %v3358 = vmul.f32 1.0, %v3357
    %v3359 = vrcp.pop %v3275
    %v3360 = vmul.f32 1.0, %v3359
    %v3361 = vrcp.pop %v3276
    %v3362 = vmul.f32 1.0, %v3361
    %v3363 = vrcp.pop %v3277
    %v3364 = vmul.f32 1.0, %v3363
    %v3365 = vrcp.pop %v3278
    %v3366 = vmul.f32 1.0, %v3365
    %v3367 = vrcp.pop %v3279
    %v3368 = vmul.f32 1.0, %v3367
    %v3369 = vrcp.pop %v3280
    %v3370 = vmul.f32 1.0, %v3369
    %v3371 = vrcp.pop %v3281
    %v3372 = vmul.f32 1.0, %v3371
    %v3373 = vrcp.pop %v3282
    %v3374 = vmul.f32 1.0, %v3373
    %v3375 = vrcp.pop %v3283
    %v3376 = vmul.f32 1.0, %v3375
    %v3377 = vrcp.pop %v3284
    %v3378 = vmul.f32 1.0, %v3377
    %v3379 = vrcp.pop %v3285
    %v3380 = vmul.f32 1.0, %v3379
    %v3381 = vrcp.pop %v3286
    %v3382 = vmul.f32 1.0, %v3381
    %v3383 = vrcp.pop %v3287
    %v3384 = vmul.f32 1.0, %v3383
    %v3385 = vrcp.pop %v3288
    %v3386 = vmul.f32 1.0, %v3385
    %v3387 = vrcp.pop %v3289
    %v3388 = vmul.f32 1.0, %v3387
    %v3389 = vrcp.pop %v3290
    %v3390 = vmul.f32 1.0, %v3389
    %v3391 = vrcp.pop %v3291
    %v3392 = vmul.f32 1.0, %v3391
    %v3393 = vrcp.pop %v3292
    %v3394 = vmul.f32 1.0, %v3393
    %v3395 = vrcp.pop %v3293
    %v3396 = vmul.f32 1.0, %v3395
    %v3397 = vrcp.pop %v3294
    %v3398 = vmul.f32 1.0, %v3397
    %v3399 = vrcp.pop %v3295
    %v3400 = vmul.f32 1.0, %v3399
    %v3401 = vrcp.pop %v3296
    %v3402 = vmul.f32 1.0, %v3401
    %v3403 = vrcp.pop %v3297
    %v3404 = vmul.f32 1.0, %v3403
    %v3405 = vrcp.pop %v3298
    %v3406 = vmul.f32 1.0, %v3405
    %v3407 = vrcp.pop %v3299
    %v3408 = vmul.f32 1.0, %v3407
    %v3409 = vrcp.pop %v3300
    %v3410 = vmul.f32 1.0, %v3409
    %v3411 = vrcp.pop %v3301
    %v3412 = vmul.f32 1.0, %v3411
    %v3413 = vrcp.pop %v3302
    %v3414 = vmul.f32 1.0, %v3413
    %v3415 = vrcp.pop %v3303
    %v3416 = vmul.f32 1.0, %v3415
    %v3417 = vrcp.pop %v3304
    %v3418 = vmul.f32 1.0, %v3417
    %v3419 = vrcp.pop %v3305
    %v3420 = vmul.f32 1.0, %v3419
    %v3421 = vrcp.pop %v3306
    %v3422 = vmul.f32 1.0, %v3421
    %v3423 = vrcp.pop %v3307
    %v3424 = vmul.f32 1.0, %v3423
    %v3425 = vrcp.pop %v3308
    %v3426 = vmul.f32 1.0, %v3425
    %v3427 = vrcp.pop %v3309
    %v3428 = vmul.f32 1.0, %v3427
    %v3429 = vrcp.pop %v3310
    %v3430 = vmul.f32 1.0, %v3429
    %v3431 = vrcp.pop %v3311
    %v3432 = vmul.f32 1.0, %v3431
    %v3433 = vrcp.pop %v3312
    %v3434 = vmul.f32 1.0, %v3433
    %v3435 = vrcp.pop %v3313
    %v3436 = vmul.f32 1.0, %v3435
    %v3437 = vrcp.pop %v3314
    %v3438 = vmul.f32 1.0, %v3437
    %v3439 = vrcp.pop %v3315
    %v3440 = vmul.f32 1.0, %v3439
    %v3441 = vrcp.pop %v3316
    %v3442 = vmul.f32 1.0, %v3441
    %v3443 = vrcp.pop %v3317
    %v3444 = vmul.f32 1.0, %v3443
    %v3445 = vrcp.pop %v3318
    %v3446 = vmul.f32 1.0, %v3445
    %v3447 = vpack.c.bf16 %v3324, %v3320
    %v3448 = vpack.c.bf16 %v3326, %v3322
    %v3449 = vpack.c.bf16 %v3332, %v3328
    %v3450 = vpack.c.bf16 %v3334, %v3330
    %v3451 = vpack.c.bf16 %v3340, %v3336
    %v3452 = vpack.c.bf16 %v3342, %v3338
    %v3453 = vpack.c.bf16 %v3348, %v3344
    %v3454 = vpack.c.bf16 %v3350, %v3346
    %v3455 = vpack.c.bf16 %v3356, %v3352
    %v3456 = vpack.c.bf16 %v3358, %v3354
    %v3457 = vpack.c.bf16 %v3364, %v3360
    %v3458 = vpack.c.bf16 %v3366, %v3362
    %v3459 = vpack.c.bf16 %v3372, %v3368
    %v3460 = vpack.c.bf16 %v3374, %v3370
    %v3461 = vpack.c.bf16 %v3380, %v3376
    %v3462 = vpack.c.bf16 %v3382, %v3378
    %v3463 = vpack.c.bf16 %v3388, %v3384
    %v3464 = vpack.c.bf16 %v3390, %v3386
    %v3465 = vpack.c.bf16 %v3396, %v3392
    %v3466 = vpack.c.bf16 %v3398, %v3394
    %v3467 = vpack.c.bf16 %v3404, %v3400
    %v3468 = vpack.c.bf16 %v3406, %v3402
    %v3469 = vpack.c.bf16 %v3412, %v3408
    %v3470 = vpack.c.bf16 %v3414, %v3410
    %v3471 = vpack.c.bf16 %v3420, %v3416
    %v3472 = vpack.c.bf16 %v3422, %v3418
    %v3473 = vpack.c.bf16 %v3428, %v3424
    %v3474 = vpack.c.bf16 %v3430, %v3426
    %v3475 = vpack.c.bf16 %v3436, %v3432
    %v3476 = vpack.c.bf16 %v3438, %v3434
    %v3477 = vpack.c.bf16 %v3444, %v3440
    %v3478 = vpack.c.bf16 %v3446, %v3442
    %v3511 = vunpack.c.l.b16 %v3447
    %v3512 = vunpack.c.l.b16 %v3448
    %v3513 = vunpack.c.h.b16 %v3447
    %v3514 = vunpack.c.h.b16 %v3448
    %v3515 = vunpack.c.l.b16 %v3449
    %v3516 = vunpack.c.l.b16 %v3450
    %v3517 = vunpack.c.h.b16 %v3449
    %v3518 = vunpack.c.h.b16 %v3450
    %v3519 = vunpack.c.l.b16 %v3451
    %v3520 = vunpack.c.l.b16 %v3452
    %v3521 = vunpack.c.h.b16 %v3451
    %v3522 = vunpack.c.h.b16 %v3452
    %v3523 = vunpack.c.l.b16 %v3453
    %v3524 = vunpack.c.l.b16 %v3454
    %v3525 = vunpack.c.h.b16 %v3453
    %v3526 = vunpack.c.h.b16 %v3454
    %v3527 = vunpack.c.l.b16 %v3455
    %v3528 = vunpack.c.l.b16 %v3456
    %v3529 = vunpack.c.h.b16 %v3455
    %v3530 = vunpack.c.h.b16 %v3456
    %v3531 = vunpack.c.l.b16 %v3457
    %v3532 = vunpack.c.l.b16 %v3458
    %v3533 = vunpack.c.h.b16 %v3457
    %v3534 = vunpack.c.h.b16 %v3458
    %v3535 = vunpack.c.l.b16 %v3459
    %v3536 = vunpack.c.l.b16 %v3460
    %v3537 = vunpack.c.h.b16 %v3459
    %v3538 = vunpack.c.h.b16 %v3460
    %v3539 = vunpack.c.l.b16 %v3461
    %v3540 = vunpack.c.l.b16 %v3462
    %v3541 = vunpack.c.h.b16 %v3461
    %v3542 = vunpack.c.h.b16 %v3462
    %v3543 = vunpack.c.l.b16 %v3463
    %v3544 = vunpack.c.l.b16 %v3464
    %v3545 = vunpack.c.h.b16 %v3463
    %v3546 = vunpack.c.h.b16 %v3464
    %v3547 = vunpack.c.l.b16 %v3465
    %v3548 = vunpack.c.l.b16 %v3466
    %v3549 = vunpack.c.h.b16 %v3465
    %v3550 = vunpack.c.h.b16 %v3466
    %v3551 = vunpack.c.l.b16 %v3467
    %v3552 = vunpack.c.l.b16 %v3468
    %v3553 = vunpack.c.h.b16 %v3467
    %v3554 = vunpack.c.h.b16 %v3468
    %v3555 = vunpack.c.l.b16 %v3469
    %v3556 = vunpack.c.l.b16 %v3470
    %v3557 = vunpack.c.h.b16 %v3469
    %v3558 = vunpack.c.h.b16 %v3470
    %v3559 = vunpack.c.l.b16 %v3471
    %v3560 = vunpack.c.l.b16 %v3472
    %v3561 = vunpack.c.h.b16 %v3471
    %v3562 = vunpack.c.h.b16 %v3472
    %v3563 = vunpack.c.l.b16 %v3473
    %v3564 = vunpack.c.l.b16 %v3474
    %v3565 = vunpack.c.h.b16 %v3473
    %v3566 = vunpack.c.h.b16 %v3474
    %v3567 = vunpack.c.l.b16 %v3475
    %v3568 = vunpack.c.l.b16 %v3476
    %v3569 = vunpack.c.h.b16 %v3475
    %v3570 = vunpack.c.h.b16 %v3476
    %v3571 = vunpack.c.l.b16 %v3477
    %v3572 = vunpack.c.l.b16 %v3478
    %v3573 = vunpack.c.h.b16 %v3477
    %v3574 = vunpack.c.h.b16 %v3478
    %v3575 = vpack.c.b16 %v3512, %v3511
    %v3576 = vpack.c.b16 %v3514, %v3513
    %v3577 = vpack.c.b16 %v3516, %v3515
    %v3578 = vpack.c.b16 %v3518, %v3517
    %v3579 = vpack.c.b16 %v3520, %v3519
    %v3580 = vpack.c.b16 %v3522, %v3521
    %v3581 = vpack.c.b16 %v3524, %v3523
    %v3582 = vpack.c.b16 %v3526, %v3525
    %v3583 = vpack.c.b16 %v3528, %v3527
    %v3584 = vpack.c.b16 %v3530, %v3529
    %v3585 = vpack.c.b16 %v3532, %v3531
    %v3586 = vpack.c.b16 %v3534, %v3533
    %v3587 = vpack.c.b16 %v3536, %v3535
    %v3588 = vpack.c.b16 %v3538, %v3537
    %v3589 = vpack.c.b16 %v3540, %v3539
    %v3590 = vpack.c.b16 %v3542, %v3541
    %v3591 = vpack.c.b16 %v3544, %v3543
    %v3592 = vpack.c.b16 %v3546, %v3545
    %v3593 = vpack.c.b16 %v3548, %v3547
    %v3594 = vpack.c.b16 %v3550, %v3549
    %v3595 = vpack.c.b16 %v3552, %v3551
    %v3596 = vpack.c.b16 %v3554, %v3553
    %v3597 = vpack.c.b16 %v3556, %v3555
    %v3598 = vpack.c.b16 %v3558, %v3557
    %v3599 = vpack.c.b16 %v3560, %v3559
    %v3600 = vpack.c.b16 %v3562, %v3561
    %v3601 = vpack.c.b16 %v3564, %v3563
    %v3602 = vpack.c.b16 %v3566, %v3565
    %v3603 = vpack.c.b16 %v3568, %v3567
    %v3604 = vpack.c.b16 %v3570, %v3569
    %v3605 = vpack.c.b16 %v3572, %v3571
    %v3606 = vpack.c.b16 %v3574, %v3573
    %3639 = vst [vmem:[#allocation17] sm:$0xff] %v3575
    %3640 = vst [vmem:[#allocation17 + $0x8] sm:$0xff] %v3576
    %3641 = vst [vmem:[#allocation17 + $0x10] sm:$0xff] %v3577
    %3642 = vst [vmem:[#allocation17 + $0x18] sm:$0xff] %v3578
    %3643 = vst [vmem:[#allocation17 + $0x20] sm:$0xff] %v3579
    %3644 = vst [vmem:[#allocation17 + $0x28] sm:$0xff] %v3580
    %3645 = vst [vmem:[#allocation17 + $0x30] sm:$0xff] %v3581
    %3646 = vst [vmem:[#allocation17 + $0x38] sm:$0xff] %v3582
    %3647 = vst [vmem:[#allocation17 + $0x40] sm:$0xff] %v3583
    %3648 = vst [vmem:[#allocation17 + $0x48] sm:$0xff] %v3584
    %3649 = vst [vmem:[#allocation17 + $0x50] sm:$0xff] %v3585
    %3650 = vst [vmem:[#allocation17 + $0x58] sm:$0xff] %v3586
    %3651 = vst [vmem:[#allocation17 + $0x60] sm:$0xff] %v3587
    %3652 = vst [vmem:[#allocation17 + $0x68] sm:$0xff] %v3588
    %3653 = vst [vmem:[#allocation17 + $0x70] sm:$0xff] %v3589
    %3654 = vst [vmem:[#allocation17 + $0x78] sm:$0xff] %v3590
    %3655 = vst [vmem:[#allocation17 + $0x80] sm:$0xff] %v3591
    %3656 = vst [vmem:[#allocation17 + $0x88] sm:$0xff] %v3592
    %3657 = vst [vmem:[#allocation17 + $0x90] sm:$0xff] %v3593
    %3658 = vst [vmem:[#allocation17 + $0x98] sm:$0xff] %v3594
    %3659 = vst [vmem:[#allocation17 + $0xa0] sm:$0xff] %v3595
    %3660 = vst [vmem:[#allocation17 + $0xa8] sm:$0xff] %v3596
    %3661 = vst [vmem:[#allocation17 + $0xb0] sm:$0xff] %v3597
    %3662 = vst [vmem:[#allocation17 + $0xb8] sm:$0xff] %v3598
    %3663 = vst [vmem:[#allocation17 + $0xc0] sm:$0xff] %v3599
    %3664 = vst [vmem:[#allocation17 + $0xc8] sm:$0xff] %v3600
    %3665 = vst [vmem:[#allocation17 + $0xd0] sm:$0xff] %v3601
    %3666 = vst [vmem:[#allocation17 + $0xd8] sm:$0xff] %v3602
    %3667 = vst [vmem:[#allocation17 + $0xe0] sm:$0xff] %v3603
    %3668 = vst [vmem:[#allocation17 + $0xe8] sm:$0xff] %v3604
    %3669 = vst [vmem:[#allocation17 + $0xf0] sm:$0xff] %v3605
    %3670 = vst [vmem:[#allocation17 + $0xf8] sm:$0xff] %v3606
    %3671 = vst [vmem:[#allocation18] sm:$0xff] %v1566
    %3672 = vst [vmem:[#allocation18 + $0x8] sm:$0xff] %v1693
    %3673 = vst [vmem:[#allocation18 + $0x10] sm:$0xff] %v1569
    %3674 = vst [vmem:[#allocation18 + $0x18] sm:$0xff] %v1694
    %3675 = vst [vmem:[#allocation18 + $0x20] sm:$0xff] %v1574
    %3676 = vst [vmem:[#allocation18 + $0x28] sm:$0xff] %v1695
    %3677 = vst [vmem:[#allocation18 + $0x30] sm:$0xff] %v1577
    %3678 = vst [vmem:[#allocation18 + $0x38] sm:$0xff] %v1696
    %3679 = vst [vmem:[#allocation18 + $0x40] sm:$0xff] %v1582
    %3680 = vst [vmem:[#allocation18 + $0x48] sm:$0xff] %v1697
    %3681 = vst [vmem:[#allocation18 + $0x50] sm:$0xff] %v1585
    %3682 = vst [vmem:[#allocation18 + $0x58] sm:$0xff] %v1698
    %3683 = vst [vmem:[#allocation18 + $0x60] sm:$0xff] %v1590
    %3684 = vst [vmem:[#allocation18 + $0x68] sm:$0xff] %v1699
    %3685 = vst [vmem:[#allocation18 + $0x70] sm:$0xff] %v1593
    %3686 = vst [vmem:[#allocation18 + $0x78] sm:$0xff] %v1700
    %3687 = vst [vmem:[#allocation18 + $0x80] sm:$0xff] %v1598
    %3688 = vst [vmem:[#allocation18 + $0x88] sm:$0xff] %v1701
    %3689 = vst [vmem:[#allocation18 + $0x90] sm:$0xff] %v1601
    %3690 = vst [vmem:[#allocation18 + $0x98] sm:$0xff] %v1702
    %3691 = vst [vmem:[#allocation18 + $0xa0] sm:$0xff] %v1606
    %3692 = vst [vmem:[#allocation18 + $0xa8] sm:$0xff] %v1703
    %3693 = vst [vmem:[#allocation18 + $0xb0] sm:$0xff] %v1609
    %3694 = vst [vmem:[#allocation18 + $0xb8] sm:$0xff] %v1704
    %3695 = vst [vmem:[#allocation18 + $0xc0] sm:$0xff] %v1614
    %3696 = vst [vmem:[#allocation18 + $0xc8] sm:$0xff] %v1705
    %3697 = vst [vmem:[#allocation18 + $0xd0] sm:$0xff] %v1617
    %3698 = vst [vmem:[#allocation18 + $0xd8] sm:$0xff] %v1706
    %3699 = vst [vmem:[#allocation18 + $0xe0] sm:$0xff] %v1622
    %3700 = vst [vmem:[#allocation18 + $0xe8] sm:$0xff] %v1707
    %3701 = vst [vmem:[#allocation18 + $0xf0] sm:$0xff] %v1625
    %3702 = vst [vmem:[#allocation18 + $0xf8] sm:$0xff] %v1708
    %3703 = vst [vmem:[#allocation18 + $0x100] sm:$0xff] %v1630
    %3704 = vst [vmem:[#allocation18 + $0x108] sm:$0xff] %v1709
    %3705 = vst [vmem:[#allocation18 + $0x110] sm:$0xff] %v1633
    %3706 = vst [vmem:[#allocation18 + $0x118] sm:$0xff] %v1710
    %3707 = vst [vmem:[#allocation18 + $0x120] sm:$0xff] %v1638
    %3708 = vst [vmem:[#allocation18 + $0x128] sm:$0xff] %v1711
    %3709 = vst [vmem:[#allocation18 + $0x130] sm:$0xff] %v1641
    %3710 = vst [vmem:[#allocation18 + $0x138] sm:$0xff] %v1712
    %3711 = vst [vmem:[#allocation18 + $0x140] sm:$0xff] %v1646
    %3712 = vst [vmem:[#allocation18 + $0x148] sm:$0xff] %v1713
    %3713 = vst [vmem:[#allocation18 + $0x150] sm:$0xff] %v1649
    %3714 = vst [vmem:[#allocation18 + $0x158] sm:$0xff] %v1714
    %3715 = vst [vmem:[#allocation18 + $0x160] sm:$0xff] %v1654
    %3716 = vst [vmem:[#allocation18 + $0x168] sm:$0xff] %v1715
    %3717 = vst [vmem:[#allocation18 + $0x170] sm:$0xff] %v1657
    %3718 = vst [vmem:[#allocation18 + $0x178] sm:$0xff] %v1716
    %3719 = vst [vmem:[#allocation18 + $0x180] sm:$0xff] %v1662
    %3720 = vst [vmem:[#allocation18 + $0x188] sm:$0xff] %v1717
    %3721 = vst [vmem:[#allocation18 + $0x190] sm:$0xff] %v1665
    %3722 = vst [vmem:[#allocation18 + $0x198] sm:$0xff] %v1718
    %3723 = vst [vmem:[#allocation18 + $0x1a0] sm:$0xff] %v1670
    %3724 = vst [vmem:[#allocation18 + $0x1a8] sm:$0xff] %v1719
    %3725 = vst [vmem:[#allocation18 + $0x1b0] sm:$0xff] %v1673
    %3726 = vst [vmem:[#allocation18 + $0x1b8] sm:$0xff] %v1720
    %3727 = vst [vmem:[#allocation18 + $0x1c0] sm:$0xff] %v1678
    %3728 = vst [vmem:[#allocation18 + $0x1c8] sm:$0xff] %v1721
    %3729 = vst [vmem:[#allocation18 + $0x1d0] sm:$0xff] %v1681
    %3730 = vst [vmem:[#allocation18 + $0x1d8] sm:$0xff] %v1722
    %3731 = vst [vmem:[#allocation18 + $0x1e0] sm:$0xff] %v1686
    %3732 = vst [vmem:[#allocation18 + $0x1e8] sm:$0xff] %v1723
    %3733 = vst [vmem:[#allocation18 + $0x1f0] sm:$0xff] %v1689
    %3734 = vst [vmem:[#allocation18 + $0x1f8] sm:$0xff] %v1724
    // Predicated region
    $region106: #{tpu_custom_call.1} parent=1 // pred_check
      _
    $region107: #{tpu_custom_call.1} parent=1 // pred_check_branch
      %3736 = sbr.rel (0) target = $region109
    $region108: #{tpu_custom_call.1} parent=1 // pred_region
      %s3738 = ssub.s32 4096, 4096
      %3739 = vsyncadd [#allocation4], %s3738
      %s3740 = sshll.u32 [#allocation17], 4
      %s3741 = int_to_ptr.vmem [resolvable:$true] %s3740
      %3746 = dma.vmem_to_hbm [thread:$0]  %s3741, 4096, %s17, [#allocation4], 128, 128, 8
    $region109: #{tpu_custom_call.1} parent=1 // pred_fallthru
      _
    // Predicated region
    $region110: #{tpu_custom_call.1} parent=1 // pred_check
      _
    $region111: #{tpu_custom_call.1} parent=1 // pred_check_branch
      %3748 = sbr.rel (0) target = $region113
    $region112: #{tpu_custom_call.1} parent=1 // pred_region
      %s3750 = ssub.s32 8192, 8192
      %3751 = vsyncadd [#allocation19], %s3750
      %s3752 = sshll.u32 [#allocation18], 4
      %s3753 = int_to_ptr.vmem [resolvable:$true] %s3752
      %3758 = dma.vmem_to_hbm [thread:$0]  %s3753, 8192, %s18, [#allocation19], 256, 256, 16
    $region113: #{tpu_custom_call.1} parent=1 // pred_fallthru
      _
    // Predicated region
    $region114: #{tpu_custom_call.1} parent=1 // pred_check
      _
    $region115: #{tpu_custom_call.1} parent=1 // pred_check_branch
      %3760 = sbr.rel (0) target = $region117
    $region116: #{tpu_custom_call.1} parent=1 // pred_region
      %3761 = dma.done [#allocation4], 4096
    $region117: #{tpu_custom_call.1} parent=1 // pred_fallthru
      _
    // Predicated region
    $region118: #{tpu_custom_call.1} parent=1 // pred_check
      _
    $region119: #{tpu_custom_call.1} parent=1 // pred_check_branch
      %3763 = sbr.rel (0) target = $region121
    $region120: #{tpu_custom_call.1} parent=1 // pred_region
      %3764 = dma.done [#allocation19], 8192
    $region121: #{tpu_custom_call.1} parent=1 // pred_fallthru
      _
    %3765 = vsyncpa [#allocation3], 1
    %3766 = vsyncpa [#allocation6], 1
    %3767 = vsyncpa [#allocation9], 1
    %3768 = vsyncpa [#allocation12], 1
    %3769 = vsyncpa [#allocation15], 1
    %3770 = vsyncpa [#allocation4], 1
    %3771 = vsyncpa [#allocation19], 1

</llo_original>
